<compile_context>
chip_gen: v5e
topology: v5e:2x2
jax: 0.10.0
libtpu: 0.0.40
codegen_flags: <defaults>
</compile_context>

<pallas_src>
import functools

import jax
import jax.numpy as jnp
from jax.experimental import pallas as pl
from jax.experimental.pallas import tpu as pltpu

EPS = 1e-5


def _local_grouper_kernel(points_ref,    # (Np, D)  per-batch point features (zero-padded rows)
                          xyz_ref,       # (Np, 3)  per-batch coordinates (zero-padded rows)
                          xyzt_ref,      # (3, Np)  coordinates, lane-dense layout
                          alpha_p_ref,   # (1, D)   affine_alpha, feature channels
                          alpha_x_ref,   # (1, 3)   affine_alpha, xyz channels
                          beta_p_ref,    # (1, D)
                          beta_x_ref,    # (1, 3)
                          newxyz_ref,    # (S, 3)     out: sampled centroids
                          grp_p_ref,     # (S, K, D)  out: normalized grouped point feats
                          grp_x_ref,     # (S, K, 3)  out: normalized grouped xyz
                          newpts_ref,    # (S, D)     out: centroid point feats (un-repeated)
                          fps_oh_ref,    # scratch (S, Np) f32: FPS one-hot rows
                          *, n_valid):
    Np, D = points_ref.shape
    S = newxyz_ref.shape[0]
    K = grp_p_ref.shape[1]

    xyzt = xyzt_ref[...]                                                 # (3, Np)
    lane_n = jax.lax.broadcasted_iota(jnp.int32, (1, Np), 1)            # point id on lanes
    lane_sn = jax.lax.broadcasted_iota(jnp.int32, (S, Np), 1)
    valid = lane_n < n_valid                                             # (1, Np) pad mask

    # |p_n|^2, lane-dense.
    pn = (xyzt[0:1] * xyzt[0:1] + xyzt[1:2] * xyzt[1:2]
          + xyzt[2:3] * xyzt[2:3])                                       # (1, Np)

    # ------------------- farthest point sampling (start = point 0) -------------------
    # Only the 3 coordinates of the current centroid are touched per iteration; the
    # full centroid gather happens once after the loop via a one-hot MXU matmul.
    def fps_body(s, carry):
        farthest, min_d = carry                                          # (1,1) i32, (1,Np) f32
        onehot = lane_n == farthest                                      # (1, Np)
        fps_oh_ref[pl.ds(s, 1), :] = onehot.astype(jnp.float32)          # lane-dense row store
        coord = jnp.sum(jnp.where(onehot, xyzt, 0.0), axis=1,
                        keepdims=True)                                   # (3, 1) exact gather
        cn = jnp.sum(coord * coord, axis=0, keepdims=True)               # (1, 1)
        cross = (coord[0:1] * xyzt[0:1] + coord[1:2] * xyzt[1:2]
                 + coord[2:3] * xyzt[2:3])                               # (1, Np)
        d = pn + cn - 2.0 * cross
        min_d = jnp.minimum(min_d, d)
        m = jnp.max(min_d, axis=1, keepdims=True)                        # (1, 1)
        farthest = jnp.min(jnp.where(min_d == m, lane_n, Np), axis=1,
                           keepdims=True).astype(jnp.int32)              # first argmax
        return farthest, min_d

    # Padded lanes start at -inf so they are never the farthest point.
    min_d0 = jnp.where(valid, jnp.inf, -jnp.inf).astype(jnp.float32)
    jax.lax.fori_loop(0, S, fps_body, (jnp.zeros((1, 1), jnp.int32), min_d0))

    hi = jax.lax.Precision.HIGHEST          # exact one-hot gathers (no bf16 demotion)
    fps_oh = fps_oh_ref[...]                                             # (S, Np)
    q = jnp.dot(fps_oh, xyz_ref[...], preferred_element_type=jnp.float32,
                precision=hi)                                            # (S, 3) centroid xyz
    p_sel = jnp.dot(fps_oh, points_ref[...], preferred_element_type=jnp.float32,
                    precision=hi)                                        # (S, D) centroid feats

    # ------------------- kNN: K smallest squared distances (ascending) ---------------
    qn = (q[:, 0:1] * q[:, 0:1] + q[:, 1:2] * q[:, 1:2]
          + q[:, 2:3] * q[:, 2:3])                                       # (S, 1)
    cross = (q[:, 0:1] * xyzt[0:1] + q[:, 1:2] * xyzt[1:2]
             + q[:, 2:3] * xyzt[2:3])                                    # (S, Np)
    pad_bias = jnp.where(valid, 0.0, jnp.inf).astype(jnp.float32)        # pads never nearest
    sqd = qn + pn - 2.0 * cross + pad_bias                               # (S, Np)

    oh_rows = []
    for _ in range(K):                               # K is a small static hyper-param
        row_min = jnp.min(sqd, axis=1, keepdims=True)                    # (S, 1)
        arg = jnp.min(jnp.where(sqd == row_min, lane_sn, Np), axis=1,
                      keepdims=True)                                     # (S, 1) first argmin
        pick = lane_sn == arg                                            # (S, Np)
        oh_rows.append(pick.astype(jnp.float32))
        sqd = jnp.where(pick, jnp.inf, sqd)                              # mask out the pick

    # One batched gather matmul pair with M = S*K (s-major, k-minor rows).
    oh_all = jnp.stack(oh_rows, axis=1).reshape(S * K, Np)               # (S*K, Np)
    grp_p = jnp.dot(oh_all, points_ref[...], preferred_element_type=jnp.float32,
                    precision=hi).reshape(S, K, D)                       # (S, K, D)
    grp_x = jnp.dot(oh_all, xyz_ref[...], preferred_element_type=jnp.float32,
                    precision=hi).reshape(S, K, 3)                       # (S, K, 3)

    # ------------------- normalize='center' with folded affine ----------------------
    cent_p = grp_p - jnp.mean(grp_p, axis=1, keepdims=True)
    cent_x = grp_x - jnp.mean(grp_x, axis=1, keepdims=True)
    n_tot = S * K * (D + 3)
    mu = (jnp.sum(cent_p) + jnp.sum(cent_x)) / n_tot                     # torch.std subtracts this
    var = (jnp.sum(cent_p * cent_p) + jnp.sum(cent_x * cent_x)
           - n_tot * mu * mu) / (n_tot - 1)                              # unbiased, one-pass
    inv = 1.0 / (jnp.sqrt(var) + EPS)

    grp_p_ref[...] = cent_p * (alpha_p_ref[...] * inv)[None] + beta_p_ref[...][None]
    grp_x_ref[...] = cent_x * (alpha_x_ref[...] * inv)[None] + beta_x_ref[...][None]
    newxyz_ref[...] = q
    newpts_ref[...] = p_sel


def local_grouper(xyz, points, alpha, beta, groups, kneighbors):
    """xyz: (B, N, 3), points: (B, N, D) -> (new_xyz (B,S,3), new_points (B,S,K,2D+3))."""
    B, N, _ = xyz.shape
    D = points.shape[-1]
    S, K = groups, kneighbors

    xyz = xyz.astype(jnp.float32)
    points = points.astype(jnp.float32)

    # Pad the point axis to a lane-aligned multiple of 128; padded points get
    # -inf/+inf distance sentinels inside the kernel so they are never selected.
    Np = ((N + 127) // 128) * 128
    if Np != N:
        xyz_p = jnp.pad(xyz, ((0, 0), (0, Np - N), (0, 0)))
        points_p = jnp.pad(points, ((0, 0), (0, Np - N), (0, 0)))
    else:
        xyz_p, points_p = xyz, points
    xyz_t = jnp.transpose(xyz_p, (0, 2, 1))     # tiny (B, 3, Np) helper for lane-dense math

    alpha = alpha.reshape(-1).astype(jnp.float32)
    beta = beta.reshape(-1).astype(jnp.float32)
    alpha_p, alpha_x = alpha[:D].reshape(1, D), alpha[D:D + 3].reshape(1, 3)
    beta_p, beta_x = beta[:D].reshape(1, D), beta[D:D + 3].reshape(1, 3)

    kernel = functools.partial(_local_grouper_kernel, n_valid=N)

    new_xyz, grp_p, grp_x, new_pts = pl.pallas_call(
        kernel,
        grid=(B,),
        out_shape=(
            jax.ShapeDtypeStruct((B, S, 3), jnp.float32),
            jax.ShapeDtypeStruct((B, S, K, D), jnp.float32),
            jax.ShapeDtypeStruct((B, S, K, 3), jnp.float32),
            jax.ShapeDtypeStruct((B, S, D), jnp.float32),
        ),
        in_specs=[
            pl.BlockSpec((pl.Squeezed(), Np, D), lambda b: (b, 0, 0)),
            pl.BlockSpec((pl.Squeezed(), Np, 3), lambda b: (b, 0, 0)),
            pl.BlockSpec((pl.Squeezed(), 3, Np), lambda b: (b, 0, 0)),
            pl.BlockSpec((1, D), lambda b: (0, 0)),
            pl.BlockSpec((1, 3), lambda b: (0, 0)),
            pl.BlockSpec((1, D), lambda b: (0, 0)),
            pl.BlockSpec((1, 3), lambda b: (0, 0)),
        ],
        out_specs=(
            pl.BlockSpec((pl.Squeezed(), S, 3), lambda b: (b, 0, 0)),
            pl.BlockSpec((pl.Squeezed(), S, K, D), lambda b: (b, 0, 0, 0)),
            pl.BlockSpec((pl.Squeezed(), S, K, 3), lambda b: (b, 0, 0, 0)),
            pl.BlockSpec((pl.Squeezed(), S, D), lambda b: (b, 0, 0)),
        ),
        scratch_shapes=[pltpu.VMEM((S, Np), jnp.float32)],
        compiler_params=pltpu.CompilerParams(
            dimension_semantics=("parallel",),       # batch steps independent -> megacore on v7x
            vmem_limit_bytes=32 * 1024 * 1024,       # well under v5e/v6e/v7x limits at these blocks
        ),
    )(points_p, xyz_p, xyz_t, alpha_p, alpha_x, beta_p, beta_x)

    # K-repeat of the centroid features + channel concat stay outside the kernel
    # so the kernel never writes redundant data or an unaligned-lane concat.
    rep = jnp.broadcast_to(new_pts[:, :, None, :], (B, S, K, D))
    new_points = jnp.concatenate([grp_p, grp_x, rep], axis=-1)
    return new_xyz, new_points


def _reference(xyz, points, alpha, beta, groups, kneighbors):
    """Pure-JAX reference of the same forward (mirrors the module semantics)."""
    B, N, _ = xyz.shape
    D = points.shape[-1]
    Dp = D + 3
    S, K = groups, kneighbors
    feats = jnp.concatenate([points, xyz], axis=-1)   # (B, N, Dp)

    def per_batch(xyz_b, feats_b):
        pn = (xyz_b[:, 0] * xyz_b[:, 0] + xyz_b[:, 1] * xyz_b[:, 1]
              + xyz_b[:, 2] * xyz_b[:, 2])            # (N,)

        # --- FPS (deterministic start at point 0, first-occurrence argmax) ---
        def body(s, carry):
            farthest, min_d, idxs = carry
            idxs = idxs.at[s].set(farthest)
            coord = xyz_b[farthest]                   # (3,)
            cn = coord[0] * coord[0] + coord[1] * coord[1] + coord[2] * coord[2]
            cross = (coord[0] * xyz_b[:, 0] + coord[1] * xyz_b[:, 1]
                     + coord[2] * xyz_b[:, 2])
            d = pn + cn - 2.0 * cross
            min_d = jnp.minimum(min_d, d)
            farthest = jnp.argmax(min_d).astype(jnp.int32)
            return farthest, min_d, idxs

        _, _, fps_idx = jax.lax.fori_loop(
            0, S, body,
            (jnp.int32(0), jnp.full((N,), jnp.inf, jnp.float32),
             jnp.zeros((S,), jnp.int32)))

        new_xyz = xyz_b[fps_idx]                      # (S, 3)
        new_pts = feats_b[fps_idx][:, :D]             # (S, D)

        # --- kNN (K smallest squared distances, ascending) ---
        qn = (new_xyz[:, 0:1] * new_xyz[:, 0:1] + new_xyz[:, 1:2] * new_xyz[:, 1:2]
              + new_xyz[:, 2:3] * new_xyz[:, 2:3])    # (S, 1)
        cross = (new_xyz[:, 0:1] * xyz_b[None, :, 0] + new_xyz[:, 1:2] * xyz_b[None, :, 1]
                 + new_xyz[:, 2:3] * xyz_b[None, :, 2])                   # (S, N)
        sqd = qn + pn[None, :] - 2.0 * cross
        idx_cols = []
        for _ in range(K):
            arg = jnp.argmin(sqd, axis=-1)            # (S,)
            idx_cols.append(arg)
            sqd = sqd.at[jnp.arange(S), arg].set(jnp.inf)
        knn_idx = jnp.stack(idx_cols, axis=-1)        # (S, K)

        grouped = feats_b[knn_idx]                    # (S, K, Dp)
        mean = jnp.mean(grouped, axis=1, keepdims=True)
        centered = grouped - mean
        flat = centered.reshape(-1)
        mu = jnp.mean(flat)
        std = jnp.sqrt(jnp.sum((flat - mu) ** 2) / (flat.size - 1))  # unbiased, like torch.std
        gp = centered / (std + EPS)
        gp = alpha.reshape(1, 1, Dp) * gp + beta.reshape(1, 1, Dp)
        rep = jnp.broadcast_to(new_pts[:, None, :], (S, K, D))
        out = jnp.concatenate([gp, rep], axis=-1)
        return new_xyz, out

    return jax.vmap(per_batch)(xyz, feats)


if __name__ == "__main__":
    B, N, D = 2, 64, 32          # batch, points, feature channels
    S, K = 16, 8                 # groups (centroids), kneighbors
    Dp = D + 3

    key = jax.random.PRNGKey(0)
    k1, k2, k3, k4 = jax.random.split(key, 4)
    xyz = jax.random.normal(k1, (B, N, 3), jnp.float32)
    points = jax.random.normal(k2, (B, N, D), jnp.float32)
    alpha = 1.0 + 0.1 * jax.random.normal(k3, (Dp,), jnp.float32)
    beta = 0.1 * jax.random.normal(k4, (Dp,), jnp.float32)

    new_xyz, new_points = local_grouper(xyz, points, alpha, beta, S, K)
    new_xyz, new_points = jax.block_until_ready((new_xyz, new_points))

    ref_xyz, ref_points = _reference(xyz, points, alpha, beta, S, K)

    assert new_xyz.shape == (B, S, 3)
    assert new_points.shape == (B, S, K, 2 * D + 3)
    err_xyz = float(jnp.max(jnp.abs(new_xyz - ref_xyz)))
    err_pts = float(jnp.max(jnp.abs(new_points - ref_points)))
    assert err_xyz < 1e-4 and err_pts < 1e-4, (err_xyz, err_pts)

    print("KERNEL_OK")
</pallas_src>

<mosaic_0001>
module attributes {stable_mosaic.version = 11 : i64} {
  func.func @_local_grouper_kernel(%arg0: i32, %arg1: memref<1x128x32xf32, #tpu.memory_space<vmem>>, %arg2: memref<1x128x3xf32, #tpu.memory_space<vmem>>, %arg3: memref<1x3x128xf32, #tpu.memory_space<vmem>>, %arg4: memref<1x32xf32, #tpu.memory_space<vmem>>, %arg5: memref<1x3xf32, #tpu.memory_space<vmem>>, %arg6: memref<1x32xf32, #tpu.memory_space<vmem>>, %arg7: memref<1x3xf32, #tpu.memory_space<vmem>>, %arg8: memref<1x16x3xf32, #tpu.memory_space<vmem>>, %arg9: memref<1x16x8x32xf32, #tpu.memory_space<vmem>>, %arg10: memref<1x16x8x3xf32, #tpu.memory_space<vmem>>, %arg11: memref<1x16x32xf32, #tpu.memory_space<vmem>>, %arg12: memref<16x128xf32, #tpu.memory_space<vmem>>) attributes {dimension_semantics = [#tpu.dimension_semantics<parallel>], iteration_bounds = array<i64: 2>, scalar_prefetch = 0 : i64, scratch_operands = 1 : i64, tpu.core_type = #tpu.core_type<tc>, window_params = [{transform_indices = @transform_0, window_bounds = array<i64: 1, 128, 32>}, {transform_indices = @transform_1, window_bounds = array<i64: 1, 128, 3>}, {transform_indices = @transform_2, window_bounds = array<i64: 1, 3, 128>}, {pipeline_mode = #tpu.pipeline_mode<synchronous>, transform_indices = @transform_3, window_bounds = array<i64: 1, 32>}, {pipeline_mode = #tpu.pipeline_mode<synchronous>, transform_indices = @transform_4, window_bounds = array<i64: 1, 3>}, {pipeline_mode = #tpu.pipeline_mode<synchronous>, transform_indices = @transform_5, window_bounds = array<i64: 1, 32>}, {pipeline_mode = #tpu.pipeline_mode<synchronous>, transform_indices = @transform_6, window_bounds = array<i64: 1, 3>}, {transform_indices = @transform_7, window_bounds = array<i64: 1, 16, 3>}, {transform_indices = @transform_8, window_bounds = array<i64: 1, 16, 8, 32>}, {transform_indices = @transform_9, window_bounds = array<i64: 1, 16, 8, 3>}, {transform_indices = @transform_10, window_bounds = array<i64: 1, 16, 32>}]} {
    %c0 = arith.constant 0 : index
    %c0_0 = arith.constant 0 : index
    %c0_1 = arith.constant 0 : index
    %0 = vector.load %arg3[%c0, %c0_0, %c0_1] : memref<1x3x128xf32, #tpu.memory_space<vmem>>, vector<1x3x128xf32>
    %1 = vector.shape_cast %0 : vector<1x3x128xf32> to vector<3x128xf32>
    %2 = tpu.iota {dimensions = array<i32: 1>} : vector<1x128xi32>
    %3 = tpu.iota {dimensions = array<i32: 1>} : vector<16x128xi32>
    %c64_i32 = arith.constant 64 : i32
    %4 = vector.broadcast %c64_i32 : i32 to vector<1x128xi32>
    %5 = arith.cmpi slt, %2, %4 : vector<1x128xi32>
    %6 = vector.extract_strided_slice %1 {offsets = [0, 0], sizes = [1, 128], strides = [1, 1]} : vector<3x128xf32> to vector<1x128xf32>
    %7 = vector.extract_strided_slice %1 {offsets = [0, 0], sizes = [1, 128], strides = [1, 1]} : vector<3x128xf32> to vector<1x128xf32>
    %8 = arith.mulf %6, %7 : vector<1x128xf32>
    %9 = vector.extract_strided_slice %1 {offsets = [1, 0], sizes = [1, 128], strides = [1, 1]} : vector<3x128xf32> to vector<1x128xf32>
    %10 = vector.extract_strided_slice %1 {offsets = [1, 0], sizes = [1, 128], strides = [1, 1]} : vector<3x128xf32> to vector<1x128xf32>
    %11 = arith.mulf %9, %10 : vector<1x128xf32>
    %12 = arith.addf %8, %11 : vector<1x128xf32>
    %13 = vector.extract_strided_slice %1 {offsets = [2, 0], sizes = [1, 128], strides = [1, 1]} : vector<3x128xf32> to vector<1x128xf32>
    %14 = vector.extract_strided_slice %1 {offsets = [2, 0], sizes = [1, 128], strides = [1, 1]} : vector<3x128xf32> to vector<1x128xf32>
    %15 = arith.mulf %13, %14 : vector<1x128xf32>
    %16 = arith.addf %12, %15 : vector<1x128xf32>
    %cst = arith.constant 0x7F800000 : f32
    %cst_2 = arith.constant 0xFF800000 : f32
    %17 = vector.broadcast %cst : f32 to vector<1x128xf32>
    %18 = vector.broadcast %cst_2 : f32 to vector<1x128xf32>
    %19 = arith.select %5, %17, %18 : vector<1x128xi1>, vector<1x128xf32>
    %c0_i32 = arith.constant 0 : i32
    %20 = vector.broadcast %c0_i32 : i32 to vector<1x1xi32>
    %c0_i32_3 = arith.constant 0 : i32
    %c16_i32 = arith.constant 16 : i32
    %21 = arith.addi %c0_i32_3, %c16_i32 : i32
    %c1_i32 = arith.constant 1 : i32
    %22:2 = scf.for %arg13 = %c0_i32_3 to %21 step %c1_i32 iter_args(%arg14 = %20, %arg15 = %19) -> (vector<1x1xi32>, vector<1x128xf32>)  : i32 {
      %269 = vector.broadcast %arg14 : vector<1x1xi32> to vector<1x128xi32>
      %270 = arith.cmpi eq, %2, %269 : vector<1x128xi32>
      %271 = arith.extui %270 : vector<1x128xi1> to vector<1x128xi32>
      %272 = arith.sitofp %271 : vector<1x128xi32> to vector<1x128xf32>
      %273 = arith.index_cast %arg13 : i32 to index
      %c0_91 = arith.constant 0 : index
      %274 = vector.load %arg12[%273, %c0_91] : memref<16x128xf32, #tpu.memory_space<vmem>>, vector<1x128xf32>
      tpu.vector_store %arg12[%273, %c0_91], %272 {strides = array<i32>} : memref<16x128xf32, #tpu.memory_space<vmem>>, vector<1x128xf32>,
      %cst_92 = arith.constant 0.000000e+00 : f32
      %275 = vector.shape_cast %270 : vector<1x128xi1> to vector<1x128xi1>
      %276 = vector.broadcast %275 : vector<1x128xi1> to vector<3x128xi1>
      %277 = vector.broadcast %cst_92 : f32 to vector<3x128xf32>
      %278 = arith.select %276, %1, %277 : vector<3x128xi1>, vector<3x128xf32>
      %cst_93 = arith.constant dense<0.000000e+00> : vector<3xf32>
      %279 = vector.multi_reduction <add>, %278, %cst_93 [1] : vector<3x128xf32> to vector<3xf32>
      %280 = vector.shape_cast %279 : vector<3xf32> to vector<3x1xf32>
      %281 = arith.mulf %280, %280 : vector<3x1xf32>
      %cst_94 = arith.constant dense<0.000000e+00> : vector<1xf32>
      %282 = vector.multi_reduction <add>, %281, %cst_94 [0] : vector<3x1xf32> to vector<1xf32>
      %283 = vector.shape_cast %282 : vector<1xf32> to vector<1x1xf32>
      %284 = vector.extract_strided_slice %280 {offsets = [0, 0], sizes = [1, 1], strides = [1, 1]} : vector<3x1xf32> to vector<1x1xf32>
      %285 = vector.extract_strided_slice %1 {offsets = [0, 0], sizes = [1, 128], strides = [1, 1]} : vector<3x128xf32> to vector<1x128xf32>
      %286 = vector.broadcast %284 : vector<1x1xf32> to vector<1x128xf32>
      %287 = arith.mulf %286, %285 : vector<1x128xf32>
      %288 = vector.extract_strided_slice %280 {offsets = [1, 0], sizes = [1, 1], strides = [1, 1]} : vector<3x1xf32> to vector<1x1xf32>
      %289 = vector.extract_strided_slice %1 {offsets = [1, 0], sizes = [1, 128], strides = [1, 1]} : vector<3x128xf32> to vector<1x128xf32>
      %290 = vector.broadcast %288 : vector<1x1xf32> to vector<1x128xf32>
      %291 = arith.mulf %290, %289 : vector<1x128xf32>
      %292 = arith.addf %287, %291 : vector<1x128xf32>
      %293 = vector.extract_strided_slice %280 {offsets = [2, 0], sizes = [1, 1], strides = [1, 1]} : vector<3x1xf32> to vector<1x1xf32>
      %294 = vector.extract_strided_slice %1 {offsets = [2, 0], sizes = [1, 128], strides = [1, 1]} : vector<3x128xf32> to vector<1x128xf32>
      %295 = vector.broadcast %293 : vector<1x1xf32> to vector<1x128xf32>
      %296 = arith.mulf %295, %294 : vector<1x128xf32>
      %297 = arith.addf %292, %296 : vector<1x128xf32>
      %298 = vector.broadcast %283 : vector<1x1xf32> to vector<1x128xf32>
      %299 = arith.addf %16, %298 : vector<1x128xf32>
      %cst_95 = arith.constant 2.000000e+00 : f32
      %300 = vector.broadcast %cst_95 : f32 to vector<1x128xf32>
      %301 = arith.mulf %300, %297 : vector<1x128xf32>
      %302 = arith.subf %299, %301 : vector<1x128xf32>
      %303 = arith.minimumf %arg15, %302 : vector<1x128xf32>
      %cst_96 = arith.constant dense<0xFF800000> : vector<1xf32>
      %304 = vector.multi_reduction <maximumf>, %303, %cst_96 [1] : vector<1x128xf32> to vector<1xf32>
      %305 = vector.shape_cast %304 : vector<1xf32> to vector<1x1xf32>
      %306 = vector.broadcast %305 : vector<1x1xf32> to vector<1x128xf32>
      %307 = arith.cmpf oeq, %303, %306 : vector<1x128xf32>
      %c128_i32_97 = arith.constant 128 : i32
      %308 = vector.broadcast %c128_i32_97 : i32 to vector<1x128xi32>
      %309 = arith.select %307, %2, %308 : vector<1x128xi1>, vector<1x128xi32>
      %cst_98 = arith.constant dense<2147483647> : vector<1xi32>
      %310 = vector.multi_reduction <minsi>, %309, %cst_98 [1] : vector<1x128xi32> to vector<1xi32>
      %311 = vector.shape_cast %310 : vector<1xi32> to vector<1x1xi32>
      scf.yield %311, %303 : vector<1x1xi32>, vector<1x128xf32>
    }
    %c16_i32_4 = arith.constant 16 : i32
    %c0_5 = arith.constant 0 : index
    %c0_6 = arith.constant 0 : index
    %23 = vector.load %arg12[%c0_5, %c0_6] : memref<16x128xf32, #tpu.memory_space<vmem>>, vector<16x128xf32>
    %c0_7 = arith.constant 0 : index
    %c0_8 = arith.constant 0 : index
    %c0_9 = arith.constant 0 : index
    %24 = vector.load %arg2[%c0_7, %c0_8, %c0_9] : memref<1x128x3xf32, #tpu.memory_space<vmem>>, vector<1x128x3xf32>
    %25 = vector.shape_cast %24 : vector<1x128x3xf32> to vector<128x3xf32>
    %cst_10 = arith.constant dense<0.000000e+00> : vector<16x3xf32>
    %26 = tpu.matmul %23, %25, %cst_10 {dimension_numbers = #tpu.dot_dimension_numbers<[1], [0], [0], [1], [0, 0, 1, 1], [], []>, precision = #tpu.contract_precision<fp32>} : vector<16x128xf32>, vector<128x3xf32>, vector<16x3xf32> -> vector<16x3xf32>
    %c0_11 = arith.constant 0 : index
    %c0_12 = arith.constant 0 : index
    %c0_13 = arith.constant 0 : index
    %27 = vector.load %arg1[%c0_11, %c0_12, %c0_13] : memref<1x128x32xf32, #tpu.memory_space<vmem>>, vector<1x128x32xf32>
    %28 = vector.shape_cast %27 : vector<1x128x32xf32> to vector<128x32xf32>
    %cst_14 = arith.constant dense<0.000000e+00> : vector<16x32xf32>
    %29 = tpu.matmul %23, %28, %cst_14 {dimension_numbers = #tpu.dot_dimension_numbers<[1], [0], [0], [1], [0, 0, 1, 1], [], []>, precision = #tpu.contract_precision<fp32>} : vector<16x128xf32>, vector<128x32xf32>, vector<16x32xf32> -> vector<16x32xf32>
    %30 = vector.extract_strided_slice %26 {offsets = [0, 0], sizes = [16, 1], strides = [1, 1]} : vector<16x3xf32> to vector<16x1xf32>
    %31 = vector.extract_strided_slice %26 {offsets = [0, 0], sizes = [16, 1], strides = [1, 1]} : vector<16x3xf32> to vector<16x1xf32>
    %32 = arith.mulf %30, %31 : vector<16x1xf32>
    %33 = vector.extract_strided_slice %26 {offsets = [0, 1], sizes = [16, 1], strides = [1, 1]} : vector<16x3xf32> to vector<16x1xf32>
    %34 = vector.extract_strided_slice %26 {offsets = [0, 1], sizes = [16, 1], strides = [1, 1]} : vector<16x3xf32> to vector<16x1xf32>
    %35 = arith.mulf %33, %34 : vector<16x1xf32>
    %36 = arith.addf %32, %35 : vector<16x1xf32>
    %37 = vector.extract_strided_slice %26 {offsets = [0, 2], sizes = [16, 1], strides = [1, 1]} : vector<16x3xf32> to vector<16x1xf32>
    %38 = vector.extract_strided_slice %26 {offsets = [0, 2], sizes = [16, 1], strides = [1, 1]} : vector<16x3xf32> to vector<16x1xf32>
    %39 = arith.mulf %37, %38 : vector<16x1xf32>
    %40 = arith.addf %36, %39 : vector<16x1xf32>
    %41 = vector.extract_strided_slice %26 {offsets = [0, 0], sizes = [16, 1], strides = [1, 1]} : vector<16x3xf32> to vector<16x1xf32>
    %42 = vector.extract_strided_slice %1 {offsets = [0, 0], sizes = [1, 128], strides = [1, 1]} : vector<3x128xf32> to vector<1x128xf32>
    %43 = vector.broadcast %41 : vector<16x1xf32> to vector<16x128xf32>
    %44 = vector.broadcast %42 : vector<1x128xf32> to vector<16x128xf32>
    %45 = arith.mulf %43, %44 : vector<16x128xf32>
    %46 = vector.extract_strided_slice %26 {offsets = [0, 1], sizes = [16, 1], strides = [1, 1]} : vector<16x3xf32> to vector<16x1xf32>
    %47 = vector.extract_strided_slice %1 {offsets = [1, 0], sizes = [1, 128], strides = [1, 1]} : vector<3x128xf32> to vector<1x128xf32>
    %48 = vector.broadcast %46 : vector<16x1xf32> to vector<16x128xf32>
    %49 = vector.broadcast %47 : vector<1x128xf32> to vector<16x128xf32>
    %50 = arith.mulf %48, %49 : vector<16x128xf32>
    %51 = arith.addf %45, %50 : vector<16x128xf32>
    %52 = vector.extract_strided_slice %26 {offsets = [0, 2], sizes = [16, 1], strides = [1, 1]} : vector<16x3xf32> to vector<16x1xf32>
    %53 = vector.extract_strided_slice %1 {offsets = [2, 0], sizes = [1, 128], strides = [1, 1]} : vector<3x128xf32> to vector<1x128xf32>
    %54 = vector.broadcast %52 : vector<16x1xf32> to vector<16x128xf32>
    %55 = vector.broadcast %53 : vector<1x128xf32> to vector<16x128xf32>
    %56 = arith.mulf %54, %55 : vector<16x128xf32>
    %57 = arith.addf %51, %56 : vector<16x128xf32>
    %cst_15 = arith.constant 0.000000e+00 : f32
    %cst_16 = arith.constant 0x7F800000 : f32
    %58 = vector.broadcast %cst_15 : f32 to vector<1x128xf32>
    %59 = vector.broadcast %cst_16 : f32 to vector<1x128xf32>
    %60 = arith.select %5, %58, %59 : vector<1x128xi1>, vector<1x128xf32>
    %61 = vector.broadcast %40 : vector<16x1xf32> to vector<16x128xf32>
    %62 = vector.broadcast %16 : vector<1x128xf32> to vector<16x128xf32>
    %63 = arith.addf %61, %62 : vector<16x128xf32>
    %cst_17 = arith.constant 2.000000e+00 : f32
    %64 = vector.broadcast %cst_17 : f32 to vector<16x128xf32>
    %65 = arith.mulf %64, %57 : vector<16x128xf32>
    %66 = arith.subf %63, %65 : vector<16x128xf32>
    %67 = vector.broadcast %60 : vector<1x128xf32> to vector<16x128xf32>
    %68 = arith.addf %66, %67 : vector<16x128xf32>
    %cst_18 = arith.constant dense<0x7F800000> : vector<16xf32>
    %69 = vector.multi_reduction <minimumf>, %68, %cst_18 [1] : vector<16x128xf32> to vector<16xf32>
    %70 = vector.shape_cast %69 : vector<16xf32> to vector<16x1xf32>
    %71 = vector.broadcast %70 : vector<16x1xf32> to vector<16x128xf32>
    %72 = arith.cmpf oeq, %68, %71 : vector<16x128xf32>
    %c128_i32 = arith.constant 128 : i32
    %73 = vector.broadcast %c128_i32 : i32 to vector<16x128xi32>
    %74 = arith.select %72, %3, %73 : vector<16x128xi1>, vector<16x128xi32>
    %cst_19 = arith.constant dense<2147483647> : vector<16xi32>
    %75 = vector.multi_reduction <minsi>, %74, %cst_19 [1] : vector<16x128xi32> to vector<16xi32>
    %76 = vector.shape_cast %75 : vector<16xi32> to vector<16x1xi32>
    %77 = vector.broadcast %76 : vector<16x1xi32> to vector<16x128xi32>
    %78 = arith.cmpi eq, %3, %77 : vector<16x128xi32>
    %79 = arith.extui %78 : vector<16x128xi1> to vector<16x128xi32>
    %80 = arith.sitofp %79 : vector<16x128xi32> to vector<16x128xf32>
    %cst_20 = arith.constant 0x7F800000 : f32
    %81 = vector.broadcast %cst_20 : f32 to vector<16x128xf32>
    %82 = arith.select %78, %81, %68 : vector<16x128xi1>, vector<16x128xf32>
    %cst_21 = arith.constant dense<0x7F800000> : vector<16xf32>
    %83 = vector.multi_reduction <minimumf>, %82, %cst_21 [1] : vector<16x128xf32> to vector<16xf32>
    %84 = vector.shape_cast %83 : vector<16xf32> to vector<16x1xf32>
    %85 = vector.broadcast %84 : vector<16x1xf32> to vector<16x128xf32>
    %86 = arith.cmpf oeq, %82, %85 : vector<16x128xf32>
    %c128_i32_22 = arith.constant 128 : i32
    %87 = vector.broadcast %c128_i32_22 : i32 to vector<16x128xi32>
    %88 = arith.select %86, %3, %87 : vector<16x128xi1>, vector<16x128xi32>
    %cst_23 = arith.constant dense<2147483647> : vector<16xi32>
    %89 = vector.multi_reduction <minsi>, %88, %cst_23 [1] : vector<16x128xi32> to vector<16xi32>
    %90 = vector.shape_cast %89 : vector<16xi32> to vector<16x1xi32>
    %91 = vector.broadcast %90 : vector<16x1xi32> to vector<16x128xi32>
    %92 = arith.cmpi eq, %3, %91 : vector<16x128xi32>
    %93 = arith.extui %92 : vector<16x128xi1> to vector<16x128xi32>
    %94 = arith.sitofp %93 : vector<16x128xi32> to vector<16x128xf32>
    %cst_24 = arith.constant 0x7F800000 : f32
    %95 = vector.broadcast %cst_24 : f32 to vector<16x128xf32>
    %96 = arith.select %92, %95, %82 : vector<16x128xi1>, vector<16x128xf32>
    %cst_25 = arith.constant dense<0x7F800000> : vector<16xf32>
    %97 = vector.multi_reduction <minimumf>, %96, %cst_25 [1] : vector<16x128xf32> to vector<16xf32>
    %98 = vector.shape_cast %97 : vector<16xf32> to vector<16x1xf32>
    %99 = vector.broadcast %98 : vector<16x1xf32> to vector<16x128xf32>
    %100 = arith.cmpf oeq, %96, %99 : vector<16x128xf32>
    %c128_i32_26 = arith.constant 128 : i32
    %101 = vector.broadcast %c128_i32_26 : i32 to vector<16x128xi32>
    %102 = arith.select %100, %3, %101 : vector<16x128xi1>, vector<16x128xi32>
    %cst_27 = arith.constant dense<2147483647> : vector<16xi32>
    %103 = vector.multi_reduction <minsi>, %102, %cst_27 [1] : vector<16x128xi32> to vector<16xi32>
    %104 = vector.shape_cast %103 : vector<16xi32> to vector<16x1xi32>
    %105 = vector.broadcast %104 : vector<16x1xi32> to vector<16x128xi32>
    %106 = arith.cmpi eq, %3, %105 : vector<16x128xi32>
    %107 = arith.extui %106 : vector<16x128xi1> to vector<16x128xi32>
    %108 = arith.sitofp %107 : vector<16x128xi32> to vector<16x128xf32>
    %cst_28 = arith.constant 0x7F800000 : f32
    %109 = vector.broadcast %cst_28 : f32 to vector<16x128xf32>
    %110 = arith.select %106, %109, %96 : vector<16x128xi1>, vector<16x128xf32>
    %cst_29 = arith.constant dense<0x7F800000> : vector<16xf32>
    %111 = vector.multi_reduction <minimumf>, %110, %cst_29 [1] : vector<16x128xf32> to vector<16xf32>
    %112 = vector.shape_cast %111 : vector<16xf32> to vector<16x1xf32>
    %113 = vector.broadcast %112 : vector<16x1xf32> to vector<16x128xf32>
    %114 = arith.cmpf oeq, %110, %113 : vector<16x128xf32>
    %c128_i32_30 = arith.constant 128 : i32
    %115 = vector.broadcast %c128_i32_30 : i32 to vector<16x128xi32>
    %116 = arith.select %114, %3, %115 : vector<16x128xi1>, vector<16x128xi32>
    %cst_31 = arith.constant dense<2147483647> : vector<16xi32>
    %117 = vector.multi_reduction <minsi>, %116, %cst_31 [1] : vector<16x128xi32> to vector<16xi32>
    %118 = vector.shape_cast %117 : vector<16xi32> to vector<16x1xi32>
    %119 = vector.broadcast %118 : vector<16x1xi32> to vector<16x128xi32>
    %120 = arith.cmpi eq, %3, %119 : vector<16x128xi32>
    %121 = arith.extui %120 : vector<16x128xi1> to vector<16x128xi32>
    %122 = arith.sitofp %121 : vector<16x128xi32> to vector<16x128xf32>
    %cst_32 = arith.constant 0x7F800000 : f32
    %123 = vector.broadcast %cst_32 : f32 to vector<16x128xf32>
    %124 = arith.select %120, %123, %110 : vector<16x128xi1>, vector<16x128xf32>
    %cst_33 = arith.constant dense<0x7F800000> : vector<16xf32>
    %125 = vector.multi_reduction <minimumf>, %124, %cst_33 [1] : vector<16x128xf32> to vector<16xf32>
    %126 = vector.shape_cast %125 : vector<16xf32> to vector<16x1xf32>
    %127 = vector.broadcast %126 : vector<16x1xf32> to vector<16x128xf32>
    %128 = arith.cmpf oeq, %124, %127 : vector<16x128xf32>
    %c128_i32_34 = arith.constant 128 : i32
    %129 = vector.broadcast %c128_i32_34 : i32 to vector<16x128xi32>
    %130 = arith.select %128, %3, %129 : vector<16x128xi1>, vector<16x128xi32>
    %cst_35 = arith.constant dense<2147483647> : vector<16xi32>
    %131 = vector.multi_reduction <minsi>, %130, %cst_35 [1] : vector<16x128xi32> to vector<16xi32>
    %132 = vector.shape_cast %131 : vector<16xi32> to vector<16x1xi32>
    %133 = vector.broadcast %132 : vector<16x1xi32> to vector<16x128xi32>
    %134 = arith.cmpi eq, %3, %133 : vector<16x128xi32>
    %135 = arith.extui %134 : vector<16x128xi1> to vector<16x128xi32>
    %136 = arith.sitofp %135 : vector<16x128xi32> to vector<16x128xf32>
    %cst_36 = arith.constant 0x7F800000 : f32
    %137 = vector.broadcast %cst_36 : f32 to vector<16x128xf32>
    %138 = arith.select %134, %137, %124 : vector<16x128xi1>, vector<16x128xf32>
    %cst_37 = arith.constant dense<0x7F800000> : vector<16xf32>
    %139 = vector.multi_reduction <minimumf>, %138, %cst_37 [1] : vector<16x128xf32> to vector<16xf32>
    %140 = vector.shape_cast %139 : vector<16xf32> to vector<16x1xf32>
    %141 = vector.broadcast %140 : vector<16x1xf32> to vector<16x128xf32>
    %142 = arith.cmpf oeq, %138, %141 : vector<16x128xf32>
    %c128_i32_38 = arith.constant 128 : i32
    %143 = vector.broadcast %c128_i32_38 : i32 to vector<16x128xi32>
    %144 = arith.select %142, %3, %143 : vector<16x128xi1>, vector<16x128xi32>
    %cst_39 = arith.constant dense<2147483647> : vector<16xi32>
    %145 = vector.multi_reduction <minsi>, %144, %cst_39 [1] : vector<16x128xi32> to vector<16xi32>
    %146 = vector.shape_cast %145 : vector<16xi32> to vector<16x1xi32>
    %147 = vector.broadcast %146 : vector<16x1xi32> to vector<16x128xi32>
    %148 = arith.cmpi eq, %3, %147 : vector<16x128xi32>
    %149 = arith.extui %148 : vector<16x128xi1> to vector<16x128xi32>
    %150 = arith.sitofp %149 : vector<16x128xi32> to vector<16x128xf32>
    %cst_40 = arith.constant 0x7F800000 : f32
    %151 = vector.broadcast %cst_40 : f32 to vector<16x128xf32>
    %152 = arith.select %148, %151, %138 : vector<16x128xi1>, vector<16x128xf32>
    %cst_41 = arith.constant dense<0x7F800000> : vector<16xf32>
    %153 = vector.multi_reduction <minimumf>, %152, %cst_41 [1] : vector<16x128xf32> to vector<16xf32>
    %154 = vector.shape_cast %153 : vector<16xf32> to vector<16x1xf32>
    %155 = vector.broadcast %154 : vector<16x1xf32> to vector<16x128xf32>
    %156 = arith.cmpf oeq, %152, %155 : vector<16x128xf32>
    %c128_i32_42 = arith.constant 128 : i32
    %157 = vector.broadcast %c128_i32_42 : i32 to vector<16x128xi32>
    %158 = arith.select %156, %3, %157 : vector<16x128xi1>, vector<16x128xi32>
    %cst_43 = arith.constant dense<2147483647> : vector<16xi32>
    %159 = vector.multi_reduction <minsi>, %158, %cst_43 [1] : vector<16x128xi32> to vector<16xi32>
    %160 = vector.shape_cast %159 : vector<16xi32> to vector<16x1xi32>
    %161 = vector.broadcast %160 : vector<16x1xi32> to vector<16x128xi32>
    %162 = arith.cmpi eq, %3, %161 : vector<16x128xi32>
    %163 = arith.extui %162 : vector<16x128xi1> to vector<16x128xi32>
    %164 = arith.sitofp %163 : vector<16x128xi32> to vector<16x128xf32>
    %cst_44 = arith.constant 0x7F800000 : f32
    %165 = vector.broadcast %cst_44 : f32 to vector<16x128xf32>
    %166 = arith.select %162, %165, %152 : vector<16x128xi1>, vector<16x128xf32>
    %cst_45 = arith.constant dense<0x7F800000> : vector<16xf32>
    %167 = vector.multi_reduction <minimumf>, %166, %cst_45 [1] : vector<16x128xf32> to vector<16xf32>
    %168 = vector.shape_cast %167 : vector<16xf32> to vector<16x1xf32>
    %169 = vector.broadcast %168 : vector<16x1xf32> to vector<16x128xf32>
    %170 = arith.cmpf oeq, %166, %169 : vector<16x128xf32>
    %c128_i32_46 = arith.constant 128 : i32
    %171 = vector.broadcast %c128_i32_46 : i32 to vector<16x128xi32>
    %172 = arith.select %170, %3, %171 : vector<16x128xi1>, vector<16x128xi32>
    %cst_47 = arith.constant dense<2147483647> : vector<16xi32>
    %173 = vector.multi_reduction <minsi>, %172, %cst_47 [1] : vector<16x128xi32> to vector<16xi32>
    %174 = vector.shape_cast %173 : vector<16xi32> to vector<16x1xi32>
    %175 = vector.broadcast %174 : vector<16x1xi32> to vector<16x128xi32>
    %176 = arith.cmpi eq, %3, %175 : vector<16x128xi32>
    %177 = arith.extui %176 : vector<16x128xi1> to vector<16x128xi32>
    %178 = arith.sitofp %177 : vector<16x128xi32> to vector<16x128xf32>
    %179 = vector.shape_cast %80 : vector<16x128xf32> to vector<16x1x128xf32>
    %180 = vector.shape_cast %94 : vector<16x128xf32> to vector<16x1x128xf32>
    %181 = vector.shape_cast %108 : vector<16x128xf32> to vector<16x1x128xf32>
    %182 = vector.shape_cast %122 : vector<16x128xf32> to vector<16x1x128xf32>
    %183 = vector.shape_cast %136 : vector<16x128xf32> to vector<16x1x128xf32>
    %184 = vector.shape_cast %150 : vector<16x128xf32> to vector<16x1x128xf32>
    %185 = vector.shape_cast %164 : vector<16x128xf32> to vector<16x1x128xf32>
    %186 = vector.shape_cast %178 : vector<16x128xf32> to vector<16x1x128xf32>
    %187 = tpu.concatenate %179, %180, %181, %182, %183, %184, %185, %186 in 1 : vector<16x1x128xf32>, vector<16x1x128xf32>, vector<16x1x128xf32>, vector<16x1x128xf32>, vector<16x1x128xf32>, vector<16x1x128xf32>, vector<16x1x128xf32>, vector<16x1x128xf32> -> vector<16x8x128xf32>
    %188 = vector.shape_cast %187 : vector<16x8x128xf32> to vector<128x128xf32>
    %c0_48 = arith.constant 0 : index
    %c0_49 = arith.constant 0 : index
    %c0_50 = arith.constant 0 : index
    %189 = vector.load %arg1[%c0_48, %c0_49, %c0_50] : memref<1x128x32xf32, #tpu.memory_space<vmem>>, vector<1x128x32xf32>
    %190 = vector.shape_cast %189 : vector<1x128x32xf32> to vector<128x32xf32>
    %cst_51 = arith.constant dense<0.000000e+00> : vector<128x32xf32>
    %191 = tpu.matmul %188, %190, %cst_51 {dimension_numbers = #tpu.dot_dimension_numbers<[1], [0], [0], [1], [0, 0, 1, 1], [], []>, precision = #tpu.contract_precision<fp32>} : vector<128x128xf32>, vector<128x32xf32>, vector<128x32xf32> -> vector<128x32xf32>
    %192 = vector.shape_cast %191 : vector<128x32xf32> to vector<16x8x32xf32>
    %c0_52 = arith.constant 0 : index
    %c0_53 = arith.constant 0 : index
    %c0_54 = arith.constant 0 : index
    %193 = vector.load %arg2[%c0_52, %c0_53, %c0_54] : memref<1x128x3xf32, #tpu.memory_space<vmem>>, vector<1x128x3xf32>
    %194 = vector.shape_cast %193 : vector<1x128x3xf32> to vector<128x3xf32>
    %cst_55 = arith.constant dense<0.000000e+00> : vector<128x3xf32>
    %195 = tpu.matmul %188, %194, %cst_55 {dimension_numbers = #tpu.dot_dimension_numbers<[1], [0], [0], [1], [0, 0, 1, 1], [], []>, precision = #tpu.contract_precision<fp32>} : vector<128x128xf32>, vector<128x3xf32>, vector<128x3xf32> -> vector<128x3xf32>
    %196 = vector.shape_cast %195 : vector<128x3xf32> to vector<16x8x3xf32>
    %cst_56 = arith.constant dense<0.000000e+00> : vector<16x32xf32>
    %197 = vector.multi_reduction <add>, %192, %cst_56 [1] : vector<16x8x32xf32> to vector<16x32xf32>
    %198 = vector.shape_cast %197 : vector<16x32xf32> to vector<16x1x32xf32>
    %cst_57 = arith.constant 8.000000e+00 : f32
    %199 = vector.broadcast %cst_57 : f32 to vector<16x1x32xf32>
    %200 = arith.divf %198, %199 : vector<16x1x32xf32>
    %201 = vector.broadcast %200 : vector<16x1x32xf32> to vector<16x8x32xf32>
    %202 = arith.subf %192, %201 : vector<16x8x32xf32>
    %cst_58 = arith.constant dense<0.000000e+00> : vector<16x3xf32>
    %203 = vector.multi_reduction <add>, %196, %cst_58 [1] : vector<16x8x3xf32> to vector<16x3xf32>
    %204 = vector.shape_cast %203 : vector<16x3xf32> to vector<16x1x3xf32>
    %cst_59 = arith.constant 8.000000e+00 : f32
    %205 = vector.broadcast %cst_59 : f32 to vector<16x1x3xf32>
    %206 = arith.divf %204, %205 : vector<16x1x3xf32>
    %207 = vector.broadcast %206 : vector<16x1x3xf32> to vector<16x8x3xf32>
    %208 = arith.subf %196, %207 : vector<16x8x3xf32>
    %209 = vector.shape_cast %202 : vector<16x8x32xf32> to vector<1x16x8x32xf32>
    %cst_60 = arith.constant dense<0.000000e+00> : vector<1xf32>
    %210 = vector.multi_reduction <add>, %209, %cst_60 [1, 2, 3] : vector<1x16x8x32xf32> to vector<1xf32>
    %211 = vector.shape_cast %210 : vector<1xf32> to vector<1x1x1x1xf32>
    %212 = vector.extract %211[0, 0, 0, 0] : f32 from vector<1x1x1x1xf32>
    %213 = vector.shape_cast %208 : vector<16x8x3xf32> to vector<1x16x8x3xf32>
    %cst_61 = arith.constant dense<0.000000e+00> : vector<1xf32>
    %214 = vector.multi_reduction <add>, %213, %cst_61 [1, 2, 3] : vector<1x16x8x3xf32> to vector<1xf32>
    %215 = vector.shape_cast %214 : vector<1xf32> to vector<1x1x1x1xf32>
    %216 = vector.extract %215[0, 0, 0, 0] : f32 from vector<1x1x1x1xf32>
    %217 = arith.addf %212, %216 : f32
    %cst_62 = arith.constant 4.480000e+03 : f32
    %218 = arith.divf %217, %cst_62 : f32
    %219 = arith.mulf %202, %202 : vector<16x8x32xf32>
    %220 = vector.shape_cast %219 : vector<16x8x32xf32> to vector<1x16x8x32xf32>
    %cst_63 = arith.constant dense<0.000000e+00> : vector<1xf32>
    %221 = vector.multi_reduction <add>, %220, %cst_63 [1, 2, 3] : vector<1x16x8x32xf32> to vector<1xf32>
    %222 = vector.shape_cast %221 : vector<1xf32> to vector<1x1x1x1xf32>
    %223 = vector.extract %222[0, 0, 0, 0] : f32 from vector<1x1x1x1xf32>
    %224 = arith.mulf %208, %208 : vector<16x8x3xf32>
    %225 = vector.shape_cast %224 : vector<16x8x3xf32> to vector<1x16x8x3xf32>
    %cst_64 = arith.constant dense<0.000000e+00> : vector<1xf32>
    %226 = vector.multi_reduction <add>, %225, %cst_64 [1, 2, 3] : vector<1x16x8x3xf32> to vector<1xf32>
    %227 = vector.shape_cast %226 : vector<1xf32> to vector<1x1x1x1xf32>
    %228 = vector.extract %227[0, 0, 0, 0] : f32 from vector<1x1x1x1xf32>
    %229 = arith.addf %223, %228 : f32
    %cst_65 = arith.constant 4.480000e+03 : f32
    %230 = arith.mulf %cst_65, %218 : f32
    %231 = arith.mulf %230, %218 : f32
    %232 = arith.subf %229, %231 : f32
    %cst_66 = arith.constant 4.479000e+03 : f32
    %233 = arith.divf %232, %cst_66 : f32
    %234 = math.sqrt %233 : f32
    %cst_67 = arith.constant 9.99999974E-6 : f32
    %235 = arith.addf %234, %cst_67 : f32
    %cst_68 = arith.constant 1.000000e+00 : f32
    %236 = arith.divf %cst_68, %235 : f32
    %c0_69 = arith.constant 0 : index
    %c0_70 = arith.constant 0 : index
    %237 = vector.load %arg4[%c0_69, %c0_70] : memref<1x32xf32, #tpu.memory_space<vmem>>, vector<1x32xf32>
    %238 = vector.broadcast %236 : f32 to vector<1x32xf32>
    %239 = arith.mulf %237, %238 : vector<1x32xf32>
    %240 = vector.shape_cast %239 : vector<1x32xf32> to vector<1x1x32xf32>
    %241 = vector.broadcast %240 : vector<1x1x32xf32> to vector<16x8x32xf32>
    %242 = arith.mulf %202, %241 : vector<16x8x32xf32>
    %c0_71 = arith.constant 0 : index
    %c0_72 = arith.constant 0 : index
    %243 = vector.load %arg6[%c0_71, %c0_72] : memref<1x32xf32, #tpu.memory_space<vmem>>, vector<1x32xf32>
    %244 = vector.shape_cast %243 : vector<1x32xf32> to vector<1x1x32xf32>
    %245 = vector.broadcast %244 : vector<1x1x32xf32> to vector<16x8x32xf32>
    %246 = arith.addf %242, %245 : vector<16x8x32xf32>
    %c0_73 = arith.constant 0 : index
    %c0_74 = arith.constant 0 : index
    %c0_75 = arith.constant 0 : index
    %c0_76 = arith.constant 0 : index
    %247 = vector.load %arg9[%c0_73, %c0_74, %c0_75, %c0_76] : memref<1x16x8x32xf32, #tpu.memory_space<vmem>>, vector<1x16x8x32xf32>
    %248 = vector.shape_cast %247 : vector<1x16x8x32xf32> to vector<16x8x32xf32>
    %249 = vector.shape_cast %246 : vector<16x8x32xf32> to vector<1x16x8x32xf32>
    tpu.vector_store %arg9[%c0_73, %c0_74, %c0_75, %c0_76], %249 {strides = array<i32>} : memref<1x16x8x32xf32, #tpu.memory_space<vmem>>, vector<1x16x8x32xf32>,
    %c0_77 = arith.constant 0 : index
    %c0_78 = arith.constant 0 : index
    %250 = vector.load %arg5[%c0_77, %c0_78] : memref<1x3xf32, #tpu.memory_space<vmem>>, vector<1x3xf32>
    %251 = vector.broadcast %236 : f32 to vector<1x3xf32>
    %252 = arith.mulf %250, %251 : vector<1x3xf32>
    %253 = vector.shape_cast %252 : vector<1x3xf32> to vector<1x1x3xf32>
    %254 = vector.broadcast %253 : vector<1x1x3xf32> to vector<16x8x3xf32>
    %255 = arith.mulf %208, %254 : vector<16x8x3xf32>
    %c0_79 = arith.constant 0 : index
    %c0_80 = arith.constant 0 : index
    %256 = vector.load %arg7[%c0_79, %c0_80] : memref<1x3xf32, #tpu.memory_space<vmem>>, vector<1x3xf32>
    %257 = vector.shape_cast %256 : vector<1x3xf32> to vector<1x1x3xf32>
    %258 = vector.broadcast %257 : vector<1x1x3xf32> to vector<16x8x3xf32>
    %259 = arith.addf %255, %258 : vector<16x8x3xf32>
    %c0_81 = arith.constant 0 : index
    %c0_82 = arith.constant 0 : index
    %c0_83 = arith.constant 0 : index
    %c0_84 = arith.constant 0 : index
    %260 = vector.load %arg10[%c0_81, %c0_82, %c0_83, %c0_84] : memref<1x16x8x3xf32, #tpu.memory_space<vmem>>, vector<1x16x8x3xf32>
    %261 = vector.shape_cast %260 : vector<1x16x8x3xf32> to vector<16x8x3xf32>
    %262 = vector.shape_cast %259 : vector<16x8x3xf32> to vector<1x16x8x3xf32>
    tpu.vector_store %arg10[%c0_81, %c0_82, %c0_83, %c0_84], %262 {strides = array<i32>} : memref<1x16x8x3xf32, #tpu.memory_space<vmem>>, vector<1x16x8x3xf32>,
    %c0_85 = arith.constant 0 : index
    %c0_86 = arith.constant 0 : index
    %c0_87 = arith.constant 0 : index
    %263 = vector.load %arg8[%c0_85, %c0_86, %c0_87] : memref<1x16x3xf32, #tpu.memory_space<vmem>>, vector<1x16x3xf32>
    %264 = vector.shape_cast %263 : vector<1x16x3xf32> to vector<16x3xf32>
    %265 = vector.shape_cast %26 : vector<16x3xf32> to vector<1x16x3xf32>
    tpu.vector_store %arg8[%c0_85, %c0_86, %c0_87], %265 {strides = array<i32>} : memref<1x16x3xf32, #tpu.memory_space<vmem>>, vector<1x16x3xf32>,
    %c0_88 = arith.constant 0 : index
    %c0_89 = arith.constant 0 : index
    %c0_90 = arith.constant 0 : index
    %266 = vector.load %arg11[%c0_88, %c0_89, %c0_90] : memref<1x16x32xf32, #tpu.memory_space<vmem>>, vector<1x16x32xf32>
    %267 = vector.shape_cast %266 : vector<1x16x32xf32> to vector<16x32xf32>
    %268 = vector.shape_cast %29 : vector<16x32xf32> to vector<1x16x32xf32>
    tpu.vector_store %arg11[%c0_88, %c0_89, %c0_90], %268 {strides = array<i32>} : memref<1x16x32xf32, #tpu.memory_space<vmem>>, vector<1x16x32xf32>,
    return
  }
  func.func @transform_0(%arg0: i32) -> (i32, i32, i32) {
    %c0_i32 = arith.constant 0 : i32
    %c0_i32_0 = arith.constant 0 : i32
    %c0_i32_1 = arith.constant 0 : i32
    return %arg0, %c0_i32, %c0_i32_0 : i32, i32, i32
  }
  func.func @transform_1(%arg0: i32) -> (i32, i32, i32) {
    %c0_i32 = arith.constant 0 : i32
    %c0_i32_0 = arith.constant 0 : i32
    %c0_i32_1 = arith.constant 0 : i32
    return %arg0, %c0_i32, %c0_i32_0 : i32, i32, i32
  }
  func.func @transform_2(%arg0: i32) -> (i32, i32, i32) {
    %c0_i32 = arith.constant 0 : i32
    %c0_i32_0 = arith.constant 0 : i32
    %c0_i32_1 = arith.constant 0 : i32
    return %arg0, %c0_i32, %c0_i32_0 : i32, i32, i32
  }
  func.func @transform_3(%arg0: i32) -> (i32, i32) {
    %c0_i32 = arith.constant 0 : i32
    %c0_i32_0 = arith.constant 0 : i32
    %c0_i32_1 = arith.constant 0 : i32
    return %c0_i32, %c0_i32_0 : i32, i32
  }
  func.func @transform_4(%arg0: i32) -> (i32, i32) {
    %c0_i32 = arith.constant 0 : i32
    %c0_i32_0 = arith.constant 0 : i32
    %c0_i32_1 = arith.constant 0 : i32
    return %c0_i32, %c0_i32_0 : i32, i32
  }
  func.func @transform_5(%arg0: i32) -> (i32, i32) {
    %c0_i32 = arith.constant 0 : i32
    %c0_i32_0 = arith.constant 0 : i32
    %c0_i32_1 = arith.constant 0 : i32
    return %c0_i32, %c0_i32_0 : i32, i32
  }
  func.func @transform_6(%arg0: i32) -> (i32, i32) {
    %c0_i32 = arith.constant 0 : i32
    %c0_i32_0 = arith.constant 0 : i32
    %c0_i32_1 = arith.constant 0 : i32
    return %c0_i32, %c0_i32_0 : i32, i32
  }
  func.func @transform_7(%arg0: i32) -> (i32, i32, i32) {
    %c0_i32 = arith.constant 0 : i32
    %c0_i32_0 = arith.constant 0 : i32
    %c0_i32_1 = arith.constant 0 : i32
    return %arg0, %c0_i32, %c0_i32_0 : i32, i32, i32
  }
  func.func @transform_8(%arg0: i32) -> (i32, i32, i32, i32) {
    %c0_i32 = arith.constant 0 : i32
    %c0_i32_0 = arith.constant 0 : i32
    %c0_i32_1 = arith.constant 0 : i32
    %c0_i32_2 = arith.constant 0 : i32
    return %arg0, %c0_i32, %c0_i32_0, %c0_i32_1 : i32, i32, i32, i32
  }
  func.func @transform_9(%arg0: i32) -> (i32, i32, i32, i32) {
    %c0_i32 = arith.constant 0 : i32
    %c0_i32_0 = arith.constant 0 : i32
    %c0_i32_1 = arith.constant 0 : i32
    %c0_i32_2 = arith.constant 0 : i32
    return %arg0, %c0_i32, %c0_i32_0, %c0_i32_1 : i32, i32, i32, i32
  }
  func.func @transform_10(%arg0: i32) -> (i32, i32, i32) {
    %c0_i32 = arith.constant 0 : i32
    %c0_i32_0 = arith.constant 0 : i32
    %c0_i32_1 = arith.constant 0 : i32
    return %arg0, %c0_i32, %c0_i32_0 : i32, i32, i32
  }
}

</mosaic_0001>

<llo_original>
// kernel: tpu_custom_call.1
$region0: #{tpu_custom_call.1}
  #allocation0 [shape = 'u32[]', space=smem, size = 0x4, offset = 0x4, fixed_abs, tag = 'smem constant byte address 0x4 - core index']
  #allocation1 [shape = 'u32[72,128]{1,0:T(1,128)}', space=vmem, size = 0x9000, scoped, tag = 'internal scratch']
  #allocation2 [shape = 'f32[16,128]{1,0:T(8,128)}', space=vmem, size = 0x2000, scoped, tag = 'scratch operand']
  %s0 = inlined_call_operand.vmem [shape: f32[2,128,32], index: 0, kind: input, shape index: {}]
  %s1 = inlined_call_operand.vmem [shape: f32[2,128,3], index: 1, kind: input, shape index: {}]
  %s2 = inlined_call_operand.vmem [shape: f32[2,3,128], index: 2, kind: input, shape index: {}]
  %s3 = inlined_call_operand.vmem [shape: f32[1,32], index: 3, kind: input, shape index: {}]
  %s4 = inlined_call_operand.vmem [shape: f32[1,3], index: 4, kind: input, shape index: {}]
  %s5 = inlined_call_operand.vmem [shape: f32[1,32], index: 5, kind: input, shape index: {}]
  %s6 = inlined_call_operand.vmem [shape: f32[1,3], index: 6, kind: input, shape index: {}]
  %s7 = inlined_call_operand.vmem [shape: f32[2,16,3], index: 7, kind: output, shape index: {0}]
  %s8 = inlined_call_operand.hbm [shape: f32[2,16,8,32], index: 8, kind: output, shape index: {1}]
  %s9 = inlined_call_operand.vmem [shape: f32[2,16,8,3], index: 9, kind: output, shape index: {2}]
  %s10 = inlined_call_operand.hbm [shape: f32[2,16,32], index: 10, kind: output, shape index: {3}]
  %11 = xla_tuple %s7, %s8, %s9, %s10
  %s12 = sld [smem:[#allocation0]]
  $region92: #{tpu_custom_call.1} parent=0
    _
  %s14 = ssub.s32 1, %s12
  %s15 = scalar_select 0, %s14, %s12
  $region1: #{tpu_custom_call.1} parent=0
    #allocation3 [shape = 'u8[131072]{0}', space=vmem, size = 0x20000, scoped, tag = 'output window, operand 1']
    #allocation4 [shape = 's32[2]{0}', space=sflag, size = 0x8, scoped, tag = 'scoped memory for tpu_custom_call.1']
    #allocation5 [shape = 'u8[16384]{0}', space=vmem, size = 0x4000, scoped, tag = 'output window, operand 3']
    #allocation6 [shape = 's32[2]{0}', space=sflag, size = 0x8, scoped, tag = 'scoped memory for tpu_custom_call.1']
    %16 = vsyncpa [#allocation4], 0
    %s17 = scalar_lea.sflag [#allocation4], 1
    %18 = vsyncpa %s17, 0
    %19 = vsyncpa [#allocation6], 0
    %s20 = scalar_lea.sflag [#allocation6], 1
    %21 = vsyncpa %s20, 0
    loop: start=0, step=1, limit=4
    $region2: #{tpu_custom_call.1} parent=1 // loop_pre_header
      _
    $region3: #{tpu_custom_call.1} parent=1 // loop_header
      %s23 = sphi 0, %s27
      %p24 = scmp.ge.s32.totalorder %s23, 4
      %s33 = sphi 0, %s35
      %s36 = sphi 0, %s33
      %s37 = sphi 0, %s36
      %s53 = sphi 0, %s37
      %s59 = sphi 0, %s61
      %s62 = sphi 0, %s59
      %s63 = sphi 0, %s62
      %s79 = sphi 0, %s63
      %s85 = sphi 0, %s87
      %s88 = sphi 0, %s85
      %s89 = sphi 0, %s88
      %s105 = sphi 0, %s89
      %s109 = sphi 0, %s109
      %s111 = sphi 0, %s109
      %s112 = sphi 0, %s111
      %s126 = sphi 0, %s112
      %s130 = sphi 0, %s130
      %s132 = sphi 0, %s130
      %s133 = sphi 0, %s132
      %s147 = sphi 0, %s133
      %s151 = sphi 0, %s151
      %s153 = sphi 0, %s151
      %s154 = sphi 0, %s153
      %s168 = sphi 0, %s154
      %s172 = sphi 0, %s172
      %s174 = sphi 0, %s172
      %s175 = sphi 0, %s174
      %s189 = sphi 0, %s175
      %s195 = sphi 0, %s197
      %s198 = sphi 0, %s195
      %s199 = sphi 0, %s198
      %s215 = sphi 0, %s199
      %s221 = sphi 0, %s223
      %s224 = sphi 0, %s221
      %s225 = sphi 0, %s224
      %s241 = sphi 0, %s225
      %s247 = sphi 0, %s249
      %s250 = sphi 0, %s247
      %s251 = sphi 0, %s250
      %s267 = sphi 0, %s251
      %s273 = sphi 0, %s275
      %s276 = sphi 0, %s273
      %s277 = sphi 0, %s276
      %s293 = sphi 0, %s277
    $region4: #{tpu_custom_call.1} parent=1 // loop_header_branch
      %26 = sbr.rel (%p24) target = $region8
    $region5: #{tpu_custom_call.1} parent=1 // loop_body
      %s28 = ssub.s32 %s23, 1
      %s29 = ssub.s32 %s23, 2
      %s30 = sadd.s32 %s23, 1
      %s31 = ssub.s32 %s23, %s30
      %p32 = scmp.eq.s32.totalorder %s31, 0
      %s34 = sadd.s32 %s33, 1
      %s35 = scalar_select %p32, %s33, %s34
      %p38 = pneg %p32
      %p39 = scmp.eq.s32.totalorder %s23, 1
      %p40 = por %p38, %p39
      %p41 = scmp.ne.s32.totalorder %s33, %s36
      %p42 = scmp.eq.s32.totalorder %s23, 0
      %p43 = por %p41, %p42
      %p44 = scmp.ne.s32.totalorder %s33, %s36
      %p45 = scmp.eq.s32.totalorder %s28, 1
      %p46 = por %p44, %p45
      %p47 = scmp.ne.s32.totalorder %s36, %s37
      %p48 = scmp.eq.s32.totalorder %s28, 0
      %p49 = por %p47, %p48
      %p50 = scmp.ne.s32.totalorder %s36, %s37
      %p51 = scmp.eq.s32.totalorder %s29, 1
      %p52 = por %p50, %p51
      %p54 = scmp.ne.s32.totalorder %s37, %s53
      %p55 = scmp.eq.s32.totalorder %s29, 0
      %p56 = por %p54, %p55
      %s57 = ssub.s32 %s23, %s30
      %p58 = scmp.eq.s32.totalorder %s57, 0
      %s60 = sadd.s32 %s59, 1
      %s61 = scalar_select %p58, %s59, %s60
      %p64 = pneg %p58
      %p65 = scmp.eq.s32.totalorder %s23, 1
      %p66 = por %p64, %p65
      %p67 = scmp.ne.s32.totalorder %s59, %s62
      %p68 = scmp.eq.s32.totalorder %s23, 0
      %p69 = por %p67, %p68
      %p70 = scmp.ne.s32.totalorder %s59, %s62
      %p71 = scmp.eq.s32.totalorder %s28, 1
      %p72 = por %p70, %p71
      %p73 = scmp.ne.s32.totalorder %s62, %s63
      %p74 = scmp.eq.s32.totalorder %s28, 0
      %p75 = por %p73, %p74
      %p76 = scmp.ne.s32.totalorder %s62, %s63
      %p77 = scmp.eq.s32.totalorder %s29, 1
      %p78 = por %p76, %p77
      %p80 = scmp.ne.s32.totalorder %s63, %s79
      %p81 = scmp.eq.s32.totalorder %s29, 0
      %p82 = por %p80, %p81
      %s83 = ssub.s32 %s23, %s30
      %p84 = scmp.eq.s32.totalorder %s83, 0
      %s86 = sadd.s32 %s85, 1
      %s87 = scalar_select %p84, %s85, %s86
      %p90 = pneg %p84
      %p91 = scmp.eq.s32.totalorder %s23, 1
      %p92 = por %p90, %p91
      %p93 = scmp.ne.s32.totalorder %s85, %s88
      %p94 = scmp.eq.s32.totalorder %s23, 0
      %p95 = por %p93, %p94
      %p96 = scmp.ne.s32.totalorder %s85, %s88
      %p97 = scmp.eq.s32.totalorder %s28, 1
      %p98 = por %p96, %p97
      %p99 = scmp.ne.s32.totalorder %s88, %s89
      %p100 = scmp.eq.s32.totalorder %s28, 0
      %p101 = por %p99, %p100
      %p102 = scmp.ne.s32.totalorder %s88, %s89
      %p103 = scmp.eq.s32.totalorder %s29, 1
      %p104 = por %p102, %p103
      %p106 = scmp.ne.s32.totalorder %s89, %s105
      %p107 = scmp.eq.s32.totalorder %s29, 0
      %p108 = por %p106, %p107
      %s110 = sadd.s32 %s109, 1
      %p113 = scmp.eq.s32.totalorder %s23, 1
      %p114 = scmp.ne.s32.totalorder %s109, %s111
      %p115 = scmp.eq.s32.totalorder %s23, 0
      %p116 = por %p114, %p115
      %p117 = scmp.ne.s32.totalorder %s109, %s111
      %p118 = scmp.eq.s32.totalorder %s28, 1
      %p119 = por %p117, %p118
      %p120 = scmp.ne.s32.totalorder %s111, %s112
      %p121 = scmp.eq.s32.totalorder %s28, 0
      %p122 = por %p120, %p121
      %p123 = scmp.ne.s32.totalorder %s111, %s112
      %p124 = scmp.eq.s32.totalorder %s29, 1
      %p125 = por %p123, %p124
      %p127 = scmp.ne.s32.totalorder %s112, %s126
      %p128 = scmp.eq.s32.totalorder %s29, 0
      %p129 = por %p127, %p128
      %s131 = sadd.s32 %s130, 1
      %p134 = scmp.eq.s32.totalorder %s23, 1
      %p135 = scmp.ne.s32.totalorder %s130, %s132
      %p136 = scmp.eq.s32.totalorder %s23, 0
      %p137 = por %p135, %p136
      %p138 = scmp.ne.s32.totalorder %s130, %s132
      %p139 = scmp.eq.s32.totalorder %s28, 1
      %p140 = por %p138, %p139
      %p141 = scmp.ne.s32.totalorder %s132, %s133
      %p142 = scmp.eq.s32.totalorder %s28, 0
      %p143 = por %p141, %p142
      %p144 = scmp.ne.s32.totalorder %s132, %s133
      %p145 = scmp.eq.s32.totalorder %s29, 1
      %p146 = por %p144, %p145
      %p148 = scmp.ne.s32.totalorder %s133, %s147
      %p149 = scmp.eq.s32.totalorder %s29, 0
      %p150 = por %p148, %p149
      %s152 = sadd.s32 %s151, 1
      %p155 = scmp.eq.s32.totalorder %s23, 1
      %p156 = scmp.ne.s32.totalorder %s151, %s153
      %p157 = scmp.eq.s32.totalorder %s23, 0
      %p158 = por %p156, %p157
      %p159 = scmp.ne.s32.totalorder %s151, %s153
      %p160 = scmp.eq.s32.totalorder %s28, 1
      %p161 = por %p159, %p160
      %p162 = scmp.ne.s32.totalorder %s153, %s154
      %p163 = scmp.eq.s32.totalorder %s28, 0
      %p164 = por %p162, %p163
      %p165 = scmp.ne.s32.totalorder %s153, %s154
      %p166 = scmp.eq.s32.totalorder %s29, 1
      %p167 = por %p165, %p166
      %p169 = scmp.ne.s32.totalorder %s154, %s168
      %p170 = scmp.eq.s32.totalorder %s29, 0
      %p171 = por %p169, %p170
      %s173 = sadd.s32 %s172, 1
      %p176 = scmp.eq.s32.totalorder %s23, 1
      %p177 = scmp.ne.s32.totalorder %s172, %s174
      %p178 = scmp.eq.s32.totalorder %s23, 0
      %p179 = por %p177, %p178
      %p180 = scmp.ne.s32.totalorder %s172, %s174
      %p181 = scmp.eq.s32.totalorder %s28, 1
      %p182 = por %p180, %p181
      %p183 = scmp.ne.s32.totalorder %s174, %s175
      %p184 = scmp.eq.s32.totalorder %s28, 0
      %p185 = por %p183, %p184
      %p186 = scmp.ne.s32.totalorder %s174, %s175
      %p187 = scmp.eq.s32.totalorder %s29, 1
      %p188 = por %p186, %p187
      %p190 = scmp.ne.s32.totalorder %s175, %s189
      %p191 = scmp.eq.s32.totalorder %s29, 0
      %p192 = por %p190, %p191
      %s193 = ssub.s32 %s23, %s30
      %p194 = scmp.eq.s32.totalorder %s193, 0
      %s196 = sadd.s32 %s195, 1
      %s197 = scalar_select %p194, %s195, %s196
      %p200 = pneg %p194
      %p201 = scmp.eq.s32.totalorder %s23, 1
      %p202 = por %p200, %p201
      %p203 = scmp.ne.s32.totalorder %s195, %s198
      %p204 = scmp.eq.s32.totalorder %s23, 0
      %p205 = por %p203, %p204
      %p206 = scmp.ne.s32.totalorder %s195, %s198
      %p207 = scmp.eq.s32.totalorder %s28, 1
      %p208 = por %p206, %p207
      %p209 = scmp.ne.s32.totalorder %s198, %s199
      %p210 = scmp.eq.s32.totalorder %s28, 0
      %p211 = por %p209, %p210
      %p212 = scmp.ne.s32.totalorder %s198, %s199
      %p213 = scmp.eq.s32.totalorder %s29, 1
      %p214 = por %p212, %p213
      %p216 = scmp.ne.s32.totalorder %s199, %s215
      %p217 = scmp.eq.s32.totalorder %s29, 0
      %p218 = por %p216, %p217
      %s219 = ssub.s32 %s23, %s30
      %p220 = scmp.eq.s32.totalorder %s219, 0
      %s222 = sadd.s32 %s221, 1
      %s223 = scalar_select %p220, %s221, %s222
      %p226 = pneg %p220
      %p227 = scmp.eq.s32.totalorder %s23, 1
      %p228 = por %p226, %p227
      %p229 = scmp.ne.s32.totalorder %s221, %s224
      %p230 = scmp.eq.s32.totalorder %s23, 0
      %p231 = por %p229, %p230
      %p232 = scmp.ne.s32.totalorder %s221, %s224
      %p233 = scmp.eq.s32.totalorder %s28, 1
      %p234 = por %p232, %p233
      %p235 = scmp.ne.s32.totalorder %s224, %s225
      %p236 = scmp.eq.s32.totalorder %s28, 0
      %p237 = por %p235, %p236
      %p238 = scmp.ne.s32.totalorder %s224, %s225
      %p239 = scmp.eq.s32.totalorder %s29, 1
      %p240 = por %p238, %p239
      %p242 = scmp.ne.s32.totalorder %s225, %s241
      %p243 = scmp.eq.s32.totalorder %s29, 0
      %p244 = por %p242, %p243
      %s245 = ssub.s32 %s23, %s30
      %p246 = scmp.eq.s32.totalorder %s245, 0
      %s248 = sadd.s32 %s247, 1
      %s249 = scalar_select %p246, %s247, %s248
      %p252 = pneg %p246
      %p253 = scmp.eq.s32.totalorder %s23, 1
      %p254 = por %p252, %p253
      %p255 = scmp.ne.s32.totalorder %s247, %s250
      %p256 = scmp.eq.s32.totalorder %s23, 0
      %p257 = por %p255, %p256
      %p258 = scmp.ne.s32.totalorder %s247, %s250
      %p259 = scmp.eq.s32.totalorder %s28, 1
      %p260 = por %p258, %p259
      %p261 = scmp.ne.s32.totalorder %s250, %s251
      %p262 = scmp.eq.s32.totalorder %s28, 0
      %p263 = por %p261, %p262
      %p264 = scmp.ne.s32.totalorder %s250, %s251
      %p265 = scmp.eq.s32.totalorder %s29, 1
      %p266 = por %p264, %p265
      %p268 = scmp.ne.s32.totalorder %s251, %s267
      %p269 = scmp.eq.s32.totalorder %s29, 0
      %p270 = por %p268, %p269
      %s271 = ssub.s32 %s23, %s30
      %p272 = scmp.eq.s32.totalorder %s271, 0
      %s274 = sadd.s32 %s273, 1
      %s275 = scalar_select %p272, %s273, %s274
      %p278 = pneg %p272
      %p279 = scmp.eq.s32.totalorder %s23, 1
      %p280 = por %p278, %p279
      %p281 = scmp.ne.s32.totalorder %s273, %s276
      %p282 = scmp.eq.s32.totalorder %s23, 0
      %p283 = por %p281, %p282
      %p284 = scmp.ne.s32.totalorder %s273, %s276
      %p285 = scmp.eq.s32.totalorder %s28, 1
      %p286 = por %p284, %p285
      %p287 = scmp.ne.s32.totalorder %s276, %s277
      %p288 = scmp.eq.s32.totalorder %s28, 0
      %p289 = por %p287, %p288
      %p290 = scmp.ne.s32.totalorder %s276, %s277
      %p291 = scmp.eq.s32.totalorder %s29, 1
      %p292 = por %p290, %p291
      %p294 = scmp.ne.s32.totalorder %s277, %s293
      %p295 = scmp.eq.s32.totalorder %s29, 0
      %p296 = por %p294, %p295
      %p297 = scmp.le.s32.totalorder 1, %s23
      %p298 = scmp.lt.s32.totalorder %s23, 3
      %p299 = pnand %p297, %p298
      %p300 = pneg %p299
      // Predicated region
      $region9: #{tpu_custom_call.1} parent=5 // pred_check
        _
      $region10: #{tpu_custom_call.1} parent=5 // pred_check_branch
        %302 = sbr.rel (%p299) target = $region12
      $region11: #{tpu_custom_call.1} parent=5 // pred_region
        %s303 = ssub.s32 %s23, 1
        // Predicated region
        $region13: #{tpu_custom_call.1} parent=11 // pred_check
          %p304 = pneg %p122
        $region14: #{tpu_custom_call.1} parent=11 // pred_check_branch
          %306 = sbr.rel (%p304) target = $region16
        $region15: #{tpu_custom_call.1} parent=11 // pred_region
          _
        $region16: #{tpu_custom_call.1} parent=11 // pred_fallthru
          _
        // Predicated region
        $region17: #{tpu_custom_call.1} parent=11 // pred_check
          %p307 = pneg %p143
        $region18: #{tpu_custom_call.1} parent=11 // pred_check_branch
          %309 = sbr.rel (%p307) target = $region20
        $region19: #{tpu_custom_call.1} parent=11 // pred_region
          _
        $region20: #{tpu_custom_call.1} parent=11 // pred_fallthru
          _
        // Predicated region
        $region21: #{tpu_custom_call.1} parent=11 // pred_check
          %p310 = pneg %p164
        $region22: #{tpu_custom_call.1} parent=11 // pred_check_branch
          %312 = sbr.rel (%p310) target = $region24
        $region23: #{tpu_custom_call.1} parent=11 // pred_region
          _
        $region24: #{tpu_custom_call.1} parent=11 // pred_fallthru
          _
        // Predicated region
        $region25: #{tpu_custom_call.1} parent=11 // pred_check
          %p313 = pneg %p185
        $region26: #{tpu_custom_call.1} parent=11 // pred_check_branch
          %315 = sbr.rel (%p313) target = $region28
        $region27: #{tpu_custom_call.1} parent=11 // pred_region
          _
        $region28: #{tpu_custom_call.1} parent=11 // pred_fallthru
          _
      $region12: #{tpu_custom_call.1} parent=5 // pred_fallthru
        _
      %p316 = scmp.lt.s32.totalorder %s23, 2
      // Predicated region
      $region29: #{tpu_custom_call.1} parent=5 // pred_check
        %p317 = pneg %p316
      $region30: #{tpu_custom_call.1} parent=5 // pred_check_branch
        %319 = sbr.rel (%p317) target = $region32
      $region31: #{tpu_custom_call.1} parent=5 // pred_region
        // Predicated region
        $region33: #{tpu_custom_call.1} parent=31 // pred_check
          %p320 = pneg %p43
        $region34: #{tpu_custom_call.1} parent=31 // pred_check_branch
          %322 = sbr.rel (%p320) target = $region36
        $region35: #{tpu_custom_call.1} parent=31 // pred_region
          %p323 = scmp.lt.s32.totalorder %s23, 1
          %s324 = scalar_select %p323, %s23, 1
          %s325 = smul.addr %s324, 16
          %s326 = smul.addr %s325, 8
          %s327 = scalar_lea.vmem %s0, %s326
        $region36: #{tpu_custom_call.1} parent=31 // pred_fallthru
          _
        // Predicated region
        $region37: #{tpu_custom_call.1} parent=31 // pred_check
          %p328 = pneg %p69
        $region38: #{tpu_custom_call.1} parent=31 // pred_check_branch
          %330 = sbr.rel (%p328) target = $region40
        $region39: #{tpu_custom_call.1} parent=31 // pred_region
          %p331 = scmp.lt.s32.totalorder %s23, 1
          %s332 = scalar_select %p331, %s23, 1
          %s333 = smul.addr %s332, 16
          %s334 = smul.addr %s333, 8
          %s335 = scalar_lea.vmem %s1, %s334
        $region40: #{tpu_custom_call.1} parent=31 // pred_fallthru
          _
        // Predicated region
        $region41: #{tpu_custom_call.1} parent=31 // pred_check
          %p336 = pneg %p95
        $region42: #{tpu_custom_call.1} parent=31 // pred_check_branch
          %338 = sbr.rel (%p336) target = $region44
        $region43: #{tpu_custom_call.1} parent=31 // pred_region
          %p339 = scmp.lt.s32.totalorder %s23, 1
          %s340 = scalar_select %p339, %s23, 1
          %s341 = smul.addr %s340, 4
          %s342 = scalar_lea.vmem %s2, %s341
        $region44: #{tpu_custom_call.1} parent=31 // pred_fallthru
          _
      $region32: #{tpu_custom_call.1} parent=5 // pred_fallthru
        _
      %p343 = scmp.le.s32.totalorder 1, %s23
      %p344 = scmp.lt.s32.totalorder %s23, 3
      %p345 = pnand %p343, %p344
      %p346 = pneg %p345
      // Predicated region
      $region45: #{tpu_custom_call.1} parent=5 // pred_check
        _
      $region46: #{tpu_custom_call.1} parent=5 // pred_check_branch
        %348 = sbr.rel (%p345) target = $region48
      $region47: #{tpu_custom_call.1} parent=5 // pred_region
        %s349 = ssub.s32 %s23, 1
        %p350 = scmp.lt.s32.totalorder %s28, 1
        %s351 = scalar_select %p350, %s28, 1
        %s352 = smul.addr %s351, 16
        %s353 = smul.addr %s352, 8
        %s354 = scalar_lea.vmem %s0, %s353
        %p355 = pneg %p49
        %p356 = pneg %p46
        %p357 = scmp.lt.s32.totalorder %s28, 1
        %s358 = scalar_select %p357, %s28, 1
        %s359 = smul.addr %s358, 16
        %s360 = smul.addr %s359, 8
        %s361 = scalar_lea.vmem %s1, %s360
        %p362 = pneg %p75
        %p363 = pneg %p72
        %p364 = scmp.lt.s32.totalorder %s28, 1
        %s365 = scalar_select %p364, %s28, 1
        %s366 = smul.addr %s365, 4
        %s367 = scalar_lea.vmem %s2, %s366
        %p368 = pneg %p101
        %p369 = pneg %p98
        %p370 = pneg %p122
        %p371 = pneg %p119
        %p372 = pneg %p143
        %p373 = pneg %p140
        %p374 = pneg %p164
        %p375 = pneg %p161
        %p376 = pneg %p185
        %p377 = pneg %p182
        %p378 = pneg %p211
        %p379 = pneg %p208
        %p380 = scmp.lt.s32.totalorder %s28, 1
        %s381 = scalar_select %p380, %s28, 1
        %s382 = smul.addr %s381, 2
        %s383 = smul.addr %s382, 8
        %s384 = scalar_lea.vmem %s7, %s383
        %p385 = pneg %p237
        %p386 = pneg %p234
        %s387 = sand.u32 %s224, 1
        %s388 = scalar_lea.sflag [#allocation4], %s387
        %s389 = sand.u32 %s224, 1
        %s390 = smul.addr %s389, 128
        %s391 = scalar_lea.vmem [#allocation3], %s390
        %p392 = pneg %p263
        %p393 = pneg %p260
        %p394 = scmp.lt.s32.totalorder %s28, 1
        %s395 = scalar_select %p394, %s28, 1
        %s396 = smul.addr %s395, 16
        %s397 = smul.addr %s396, 8
        %s398 = scalar_lea.vmem %s9, %s397
        %p399 = pneg %p289
        %p400 = pneg %p286
        %s401 = sand.u32 %s276, 1
        %s402 = scalar_lea.sflag [#allocation6], %s401
        %s403 = sand.u32 %s276, 1
        %s404 = smul.addr %s403, 16
        %s405 = scalar_lea.vmem [#allocation5], %s404
        %p406 = scmp.lt.s32.totalorder %s28, 1
        %s407 = scalar_select %p406, %s28, 1
        %s408 = smul.addr %s407, 16
        %s409 = smul.addr %s408, 8
        %s410 = scalar_lea.vmem %s0, %s409
        %p411 = scmp.lt.s32.totalorder %s28, 1
        %s412 = scalar_select %p411, %s28, 1
        %s413 = smul.addr %s412, 16
        %s414 = smul.addr %s413, 8
        %s415 = scalar_lea.vmem %s1, %s414
        %p416 = scmp.lt.s32.totalorder %s28, 1
        %s417 = scalar_select %p416, %s28, 1
        %s418 = smul.addr %s417, 4
        %s419 = scalar_lea.vmem %s2, %s418
        %p420 = scmp.lt.s32.totalorder %s28, 1
        %s421 = scalar_select %p420, %s28, 1
        %s422 = smul.addr %s421, 2
        %s423 = smul.addr %s422, 8
        %s424 = scalar_lea.vmem %s7, %s423
        %p425 = scmp.lt.s32.totalorder %s28, 1
        %s426 = scalar_select %p425, %s28, 1
        %s427 = smul.addr %s426, 16
        %s428 = smul.addr %s427, 8
        %s429 = scalar_lea.vmem %s9, %s428
        %v430 = vld [vmem:[%s419] sm:$0x7]
        %v431 = vlaneseq
        %v432 = vand.u32 %v431, 127
        %vm433 = vcmp.lt.s32.totalorder %v432, 64
        %v434 = vmul.f32 %v430, %v430
        %v436 = vrot.slane %v434, 1
        %v438 = vadd.f32 %v434, %v436
        %v439 = vrot.slane %v434, 2
        %v441 = vadd.f32 %v438, %v439
        %v442 = vsel %vm433, inf, -inf
        loop: start=0, step=1, limit=16
        $region49: #{tpu_custom_call.1} parent=47 // loop_pre_header
          _
        $region50: #{tpu_custom_call.1} parent=47 // loop_header
          %s444 = sphi 0, %s448
          %p445 = scmp.ge.s32.totalorder %s444, 16
          %v449 = vphi 0, %v503
          %v450 = vphi %v442, %v482
        $region51: #{tpu_custom_call.1} parent=47 // loop_header_branch
          %447 = sbr.rel (%p445) target = $region55
        $region52: #{tpu_custom_call.1} parent=47 // loop_body
          %vm451 = vcmp.eq.s32.totalorder %v432, %v449
          %v452 = vsel %vm451, 1, 0
          %v453 = vcvt.s32.f32 %v452
          %s454 = scalar_lea.vmem [#allocation2], %s444
          %455 = vst [vmem:[%s454] sm:$0x1] %v453
          %v456 = vperm.slane %v452, 0
          %vm457 = vcmp.eq.s32.totalorder %v456, 1
          %v458 = vsel %vm457, %v430, 0.0
          %vm459 = vcmask 1042432
          %v460 = vsel %vm459, %v458, 0.0
          %461 = vadd.xlane.f32.xlu0 %v460
          %v462 = vpop.xlane.xlu0 %461
          %v463 = vmul.f32 %v462, %v462
          %v464 = vsel %vm459, %v463, 0.0
          %v465 = vrot.slane %v464, 4
          %v466 = vadd.f32 %v464, %v465
          %v467 = vrot.slane %v466, 2
          %v468 = vadd.f32 %v466, %v467
          %v469 = vrot.slane %v468, 1
          %v470 = vadd.f32 %v468, %v469
          %v471 = vmul.f32 %v462, %v430
          %v473 = vrot.slane %v471, 1
          %v475 = vadd.f32 %v471, %v473
          %v476 = vrot.slane %v471, 2
          %v478 = vadd.f32 %v475, %v476
          %v479 = vadd.f32 %v441, %v470
          %v480 = vmul.f32 %v478, 2.0
          %v481 = vsub.f32 %v479, %v480
          %v482 = vmin.f32 %v450, %v481
          %vm483 = vcmask 1040384
          %v484 = vsel %vm483, %v482, -inf
          %485 = vmax.xlane.f32.xlu0 %v484
          %v486 = vpop.xlane.xlu0 %485
          %vm487 = vcmp.eq.f32.partialorder %v482, %v486
          %v488 = vsel %vm487, %v432, 128
          %v489 = vsel %vm483, %v488, 2147483647
          %v490 = vand.u32 %v489, 65535
          %v491 = vshra.s32 %v489, 16
          %v492 = vcvt.s32.f32 %v490
          %v493 = vcvt.s32.f32 %v491
          %494 = vmin.xlane.f32.xlu0 %v493
          %v495 = vpop.xlane.xlu0 %494
          %vm496 = vcmp.eq.f32.partialorder %v493, %v495
          %v497 = vsel %vm496, %v492, inf
          %498 = vmin.xlane.f32.xlu0 %v497
          %v499 = vpop.xlane.xlu0 %498
          %v500 = vcvt.f32.s32 %v499
          %v501 = vcvt.f32.s32 %v495
          %v502 = vshll.u32 %v501, 16
          %v503 = vadd.s32 %v502, %v500
        $region53: #{tpu_custom_call.1} parent=47 // loop_footer
          %s448 = sadd.s32 1, %s444
        $region54: #{tpu_custom_call.1} parent=47 // loop_footer_branch
          %443 = sbr.rel target = $region50
        $region55: #{tpu_custom_call.1} parent=47 // loop_exit
          _
        %v504 = vld [vmem:[#allocation2] sm:$0xff]
        %v505 = vld [vmem:[#allocation2 + $0x8] sm:$0xff]
        %v506 = vld [vmem:[%s415] sm:$0xff]
        %v507 = vld [vmem:[%s415 + $0x8] sm:$0xff]
        %v508 = vld [vmem:[%s415 + $0x10] sm:$0xff]
        %v509 = vld [vmem:[%s415 + $0x18] sm:$0xff]
        %v510 = vld [vmem:[%s415 + $0x20] sm:$0xff]
        %v511 = vld [vmem:[%s415 + $0x28] sm:$0xff]
        %v512 = vld [vmem:[%s415 + $0x30] sm:$0xff]
        %v513 = vld [vmem:[%s415 + $0x38] sm:$0xff]
        %v514 = vld [vmem:[%s415 + $0x40] sm:$0xff]
        %v515 = vld [vmem:[%s415 + $0x48] sm:$0xff]
        %v516 = vld [vmem:[%s415 + $0x50] sm:$0xff]
        %v517 = vld [vmem:[%s415 + $0x58] sm:$0xff]
        %v518 = vld [vmem:[%s415 + $0x60] sm:$0xff]
        %v519 = vld [vmem:[%s415 + $0x68] sm:$0xff]
        %v520 = vld [vmem:[%s415 + $0x70] sm:$0xff]
        %v521 = vld [vmem:[%s415 + $0x78] sm:$0xff]
        %v522 = vand.u32 %v521, 4294901760
        %523 = vmatpush.msra.mxu0 %v522
        %v524 = vand.u32 %v520, 4294901760
        %525 = vmatpush.msra.mxu0 %v524
        %v526 = vand.u32 %v519, 4294901760
        %527 = vmatpush.msra.mxu0 %v526
        %v528 = vand.u32 %v518, 4294901760
        %529 = vmatpush.msra.mxu0 %v528
        %v530 = vand.u32 %v517, 4294901760
        %531 = vmatpush.msra.mxu0 %v530
        %v532 = vand.u32 %v516, 4294901760
        %533 = vmatpush.msra.mxu0 %v532
        %v534 = vand.u32 %v515, 4294901760
        %535 = vmatpush.msra.mxu0 %v534
        %v536 = vand.u32 %v514, 4294901760
        %537 = vmatpush.msra.mxu0 %v536
        %v538 = vand.u32 %v513, 4294901760
        %539 = vmatpush.msra.mxu0 %v538
        %v540 = vand.u32 %v512, 4294901760
        %541 = vmatpush.msra.mxu0 %v540
        %v542 = vand.u32 %v511, 4294901760
        %543 = vmatpush.msra.mxu0 %v542
        %v544 = vand.u32 %v510, 4294901760
        %545 = vmatpush.msra.mxu0 %v544
        %v546 = vand.u32 %v509, 4294901760
        %547 = vmatpush.msra.mxu0 %v546
        %v548 = vand.u32 %v508, 4294901760
        %549 = vmatpush.msra.mxu0 %v548
        %v550 = vand.u32 %v507, 4294901760
        %551 = vmatpush.msra.mxu0 %v550
        %v552 = vand.u32 %v506, 4294901760
        %553 = vmatpush.msra.mxu0 %v552
        %v554 = vand.u32 %v504, 4294901760
        %v555 = vsub.f32 %v504, %v554
        %v556 = vand.u32 %v555, 4294901760
        %v557 = vsub.f32 %v555, %v556
        %v558 = vand.u32 %v557, 4294901760
        %559 = vmatmul.f32.gmra.mxu0 %v558
        %v560 = vpop.f32.mrf.mxu0
        %v561 = vadd.f32 0.0, %v560
        %v562 = vand.u32 %v505, 4294901760
        %v563 = vsub.f32 %v505, %v562
        %v564 = vand.u32 %v563, 4294901760
        %v565 = vsub.f32 %v563, %v564
        %v566 = vand.u32 %v565, 4294901760
        %567 = vmatmul.f32.gmra.mxu0 %v566
        %v568 = vpop.f32.mrf.mxu0
        %v569 = vadd.f32 0.0, %v568
        %570 = vdwg.mxu0
        %v571 = vand.u32 %v521, 4294901760
        %v572 = vsub.f32 %v521, %v571
        %v573 = vand.u32 %v572, 4294901760
        %v574 = vsub.f32 %v572, %v573
        %v575 = vand.u32 %v574, 4294901760
        %576 = vmatpush.msra.mxu0 %v575
        %v577 = vand.u32 %v520, 4294901760
        %v578 = vsub.f32 %v520, %v577
        %v579 = vand.u32 %v578, 4294901760
        %v580 = vsub.f32 %v578, %v579
        %v581 = vand.u32 %v580, 4294901760
        %582 = vmatpush.msra.mxu0 %v581
        %v583 = vand.u32 %v519, 4294901760
        %v584 = vsub.f32 %v519, %v583
        %v585 = vand.u32 %v584, 4294901760
        %v586 = vsub.f32 %v584, %v585
        %v587 = vand.u32 %v586, 4294901760
        %588 = vmatpush.msra.mxu0 %v587
        %v589 = vand.u32 %v518, 4294901760
        %v590 = vsub.f32 %v518, %v589
        %v591 = vand.u32 %v590, 4294901760
        %v592 = vsub.f32 %v590, %v591
        %v593 = vand.u32 %v592, 4294901760
        %594 = vmatpush.msra.mxu0 %v593
        %v595 = vand.u32 %v517, 4294901760
        %v596 = vsub.f32 %v517, %v595
        %v597 = vand.u32 %v596, 4294901760
        %v598 = vsub.f32 %v596, %v597
        %v599 = vand.u32 %v598, 4294901760
        %600 = vmatpush.msra.mxu0 %v599
        %v601 = vand.u32 %v516, 4294901760
        %v602 = vsub.f32 %v516, %v601
        %v603 = vand.u32 %v602, 4294901760
        %v604 = vsub.f32 %v602, %v603
        %v605 = vand.u32 %v604, 4294901760
        %606 = vmatpush.msra.mxu0 %v605
        %v607 = vand.u32 %v515, 4294901760
        %v608 = vsub.f32 %v515, %v607
        %v609 = vand.u32 %v608, 4294901760
        %v610 = vsub.f32 %v608, %v609
        %v611 = vand.u32 %v610, 4294901760
        %612 = vmatpush.msra.mxu0 %v611
        %v613 = vand.u32 %v514, 4294901760
        %v614 = vsub.f32 %v514, %v613
        %v615 = vand.u32 %v614, 4294901760
        %v616 = vsub.f32 %v614, %v615
        %v617 = vand.u32 %v616, 4294901760
        %618 = vmatpush.msra.mxu0 %v617
        %v619 = vand.u32 %v513, 4294901760
        %v620 = vsub.f32 %v513, %v619
        %v621 = vand.u32 %v620, 4294901760
        %v622 = vsub.f32 %v620, %v621
        %v623 = vand.u32 %v622, 4294901760
        %624 = vmatpush.msra.mxu0 %v623
        %v625 = vand.u32 %v512, 4294901760
        %v626 = vsub.f32 %v512, %v625
        %v627 = vand.u32 %v626, 4294901760
        %v628 = vsub.f32 %v626, %v627
        %v629 = vand.u32 %v628, 4294901760
        %630 = vmatpush.msra.mxu0 %v629
        %v631 = vand.u32 %v511, 4294901760
        %v632 = vsub.f32 %v511, %v631
        %v633 = vand.u32 %v632, 4294901760
        %v634 = vsub.f32 %v632, %v633
        %v635 = vand.u32 %v634, 4294901760
        %636 = vmatpush.msra.mxu0 %v635
        %v637 = vand.u32 %v510, 4294901760
        %v638 = vsub.f32 %v510, %v637
        %v639 = vand.u32 %v638, 4294901760
        %v640 = vsub.f32 %v638, %v639
        %v641 = vand.u32 %v640, 4294901760
        %642 = vmatpush.msra.mxu0 %v641
        %v643 = vand.u32 %v509, 4294901760
        %v644 = vsub.f32 %v509, %v643
        %v645 = vand.u32 %v644, 4294901760
        %v646 = vsub.f32 %v644, %v645
        %v647 = vand.u32 %v646, 4294901760
        %648 = vmatpush.msra.mxu0 %v647
        %v649 = vand.u32 %v508, 4294901760
        %v650 = vsub.f32 %v508, %v649
        %v651 = vand.u32 %v650, 4294901760
        %v652 = vsub.f32 %v650, %v651
        %v653 = vand.u32 %v652, 4294901760
        %654 = vmatpush.msra.mxu0 %v653
        %v655 = vand.u32 %v507, 4294901760
        %v656 = vsub.f32 %v507, %v655
        %v657 = vand.u32 %v656, 4294901760
        %v658 = vsub.f32 %v656, %v657
        %v659 = vand.u32 %v658, 4294901760
        %660 = vmatpush.msra.mxu0 %v659
        %v661 = vand.u32 %v506, 4294901760
        %v662 = vsub.f32 %v506, %v661
        %v663 = vand.u32 %v662, 4294901760
        %v664 = vsub.f32 %v662, %v663
        %v665 = vand.u32 %v664, 4294901760
        %666 = vmatpush.msra.mxu0 %v665
        %v667 = vand.u32 %v504, 4294901760
        %668 = vmatmul.f32.gmra.mxu0 %v667
        %v669 = vpop.f32.mrf.mxu0
        %v670 = vadd.f32 %v561, %v669
        %v671 = vand.u32 %v505, 4294901760
        %672 = vmatmul.f32.gmra.mxu0 %v671
        %v673 = vpop.f32.mrf.mxu0
        %v674 = vadd.f32 %v569, %v673
        %675 = vdwg.mxu0
        %v676 = vand.u32 %v521, 4294901760
        %v677 = vsub.f32 %v521, %v676
        %678 = vmatpush.msra.mxu0 %v677
        %v679 = vand.u32 %v520, 4294901760
        %v680 = vsub.f32 %v520, %v679
        %681 = vmatpush.msra.mxu0 %v680
        %v682 = vand.u32 %v519, 4294901760
        %v683 = vsub.f32 %v519, %v682
        %684 = vmatpush.msra.mxu0 %v683
        %v685 = vand.u32 %v518, 4294901760
        %v686 = vsub.f32 %v518, %v685
        %687 = vmatpush.msra.mxu0 %v686
        %v688 = vand.u32 %v517, 4294901760
        %v689 = vsub.f32 %v517, %v688
        %690 = vmatpush.msra.mxu0 %v689
        %v691 = vand.u32 %v516, 4294901760
        %v692 = vsub.f32 %v516, %v691
        %693 = vmatpush.msra.mxu0 %v692
        %v694 = vand.u32 %v515, 4294901760
        %v695 = vsub.f32 %v515, %v694
        %696 = vmatpush.msra.mxu0 %v695
        %v697 = vand.u32 %v514, 4294901760
        %v698 = vsub.f32 %v514, %v697
        %699 = vmatpush.msra.mxu0 %v698
        %v700 = vand.u32 %v513, 4294901760
        %v701 = vsub.f32 %v513, %v700
        %702 = vmatpush.msra.mxu0 %v701
        %v703 = vand.u32 %v512, 4294901760
        %v704 = vsub.f32 %v512, %v703
        %705 = vmatpush.msra.mxu0 %v704
        %v706 = vand.u32 %v511, 4294901760
        %v707 = vsub.f32 %v511, %v706
        %708 = vmatpush.msra.mxu0 %v707
        %v709 = vand.u32 %v510, 4294901760
        %v710 = vsub.f32 %v510, %v709
        %711 = vmatpush.msra.mxu0 %v710
        %v712 = vand.u32 %v509, 4294901760
        %v713 = vsub.f32 %v509, %v712
        %714 = vmatpush.msra.mxu0 %v713
        %v715 = vand.u32 %v508, 4294901760
        %v716 = vsub.f32 %v508, %v715
        %717 = vmatpush.msra.mxu0 %v716
        %v718 = vand.u32 %v507, 4294901760
        %v719 = vsub.f32 %v507, %v718
        %720 = vmatpush.msra.mxu0 %v719
        %v721 = vand.u32 %v506, 4294901760
        %v722 = vsub.f32 %v506, %v721
        %723 = vmatpush.msra.mxu0 %v722
        %v724 = vand.u32 %v504, 4294901760
        %v725 = vsub.f32 %v504, %v724
        %726 = vmatmul.f32.gmra.mxu0 %v725
        %v727 = vpop.f32.mrf.mxu0
        %v728 = vadd.f32 %v670, %v727
        %v729 = vand.u32 %v505, 4294901760
        %v730 = vsub.f32 %v505, %v729
        %731 = vmatmul.f32.gmra.mxu0 %v730
        %v732 = vpop.f32.mrf.mxu0
        %v733 = vadd.f32 %v674, %v732
        %734 = vdwg.mxu0
        %v735 = vand.u32 %v521, 4294901760
        %736 = vmatpush.msra.mxu0 %v735
        %v737 = vand.u32 %v520, 4294901760
        %738 = vmatpush.msra.mxu0 %v737
        %v739 = vand.u32 %v519, 4294901760
        %740 = vmatpush.msra.mxu0 %v739
        %v741 = vand.u32 %v518, 4294901760
        %742 = vmatpush.msra.mxu0 %v741
        %v743 = vand.u32 %v517, 4294901760
        %744 = vmatpush.msra.mxu0 %v743
        %v745 = vand.u32 %v516, 4294901760
        %746 = vmatpush.msra.mxu0 %v745
        %v747 = vand.u32 %v515, 4294901760
        %748 = vmatpush.msra.mxu0 %v747
        %v749 = vand.u32 %v514, 4294901760
        %750 = vmatpush.msra.mxu0 %v749
        %v751 = vand.u32 %v513, 4294901760
        %752 = vmatpush.msra.mxu0 %v751
        %v753 = vand.u32 %v512, 4294901760
        %754 = vmatpush.msra.mxu0 %v753
        %v755 = vand.u32 %v511, 4294901760
        %756 = vmatpush.msra.mxu0 %v755
        %v757 = vand.u32 %v510, 4294901760
        %758 = vmatpush.msra.mxu0 %v757
        %v759 = vand.u32 %v509, 4294901760
        %760 = vmatpush.msra.mxu0 %v759
        %v761 = vand.u32 %v508, 4294901760
        %762 = vmatpush.msra.mxu0 %v761
        %v763 = vand.u32 %v507, 4294901760
        %764 = vmatpush.msra.mxu0 %v763
        %v765 = vand.u32 %v506, 4294901760
        %766 = vmatpush.msra.mxu0 %v765
        %v767 = vand.u32 %v504, 4294901760
        %v768 = vsub.f32 %v504, %v767
        %v769 = vand.u32 %v768, 4294901760
        %770 = vmatmul.f32.gmra.mxu0 %v769
        %v771 = vpop.f32.mrf.mxu0
        %v772 = vadd.f32 %v728, %v771
        %v773 = vand.u32 %v505, 4294901760
        %v774 = vsub.f32 %v505, %v773
        %v775 = vand.u32 %v774, 4294901760
        %776 = vmatmul.f32.gmra.mxu0 %v775
        %v777 = vpop.f32.mrf.mxu0
        %v778 = vadd.f32 %v733, %v777
        %779 = vdwg.mxu0
        %v780 = vand.u32 %v521, 4294901760
        %v781 = vsub.f32 %v521, %v780
        %v782 = vand.u32 %v781, 4294901760
        %783 = vmatpush.msra.mxu0 %v782
        %v784 = vand.u32 %v520, 4294901760
        %v785 = vsub.f32 %v520, %v784
        %v786 = vand.u32 %v785, 4294901760
        %787 = vmatpush.msra.mxu0 %v786
        %v788 = vand.u32 %v519, 4294901760
        %v789 = vsub.f32 %v519, %v788
        %v790 = vand.u32 %v789, 4294901760
        %791 = vmatpush.msra.mxu0 %v790
        %v792 = vand.u32 %v518, 4294901760
        %v793 = vsub.f32 %v518, %v792
        %v794 = vand.u32 %v793, 4294901760
        %795 = vmatpush.msra.mxu0 %v794
        %v796 = vand.u32 %v517, 4294901760
        %v797 = vsub.f32 %v517, %v796
        %v798 = vand.u32 %v797, 4294901760
        %799 = vmatpush.msra.mxu0 %v798
        %v800 = vand.u32 %v516, 4294901760
        %v801 = vsub.f32 %v516, %v800
        %v802 = vand.u32 %v801, 4294901760
        %803 = vmatpush.msra.mxu0 %v802
        %v804 = vand.u32 %v515, 4294901760
        %v805 = vsub.f32 %v515, %v804
        %v806 = vand.u32 %v805, 4294901760
        %807 = vmatpush.msra.mxu0 %v806
        %v808 = vand.u32 %v514, 4294901760
        %v809 = vsub.f32 %v514, %v808
        %v810 = vand.u32 %v809, 4294901760
        %811 = vmatpush.msra.mxu0 %v810
        %v812 = vand.u32 %v513, 4294901760
        %v813 = vsub.f32 %v513, %v812
        %v814 = vand.u32 %v813, 4294901760
        %815 = vmatpush.msra.mxu0 %v814
        %v816 = vand.u32 %v512, 4294901760
        %v817 = vsub.f32 %v512, %v816
        %v818 = vand.u32 %v817, 4294901760
        %819 = vmatpush.msra.mxu0 %v818
        %v820 = vand.u32 %v511, 4294901760
        %v821 = vsub.f32 %v511, %v820
        %v822 = vand.u32 %v821, 4294901760
        %823 = vmatpush.msra.mxu0 %v822
        %v824 = vand.u32 %v510, 4294901760
        %v825 = vsub.f32 %v510, %v824
        %v826 = vand.u32 %v825, 4294901760
        %827 = vmatpush.msra.mxu0 %v826
        %v828 = vand.u32 %v509, 4294901760
        %v829 = vsub.f32 %v509, %v828
        %v830 = vand.u32 %v829, 4294901760
        %831 = vmatpush.msra.mxu0 %v830
        %v832 = vand.u32 %v508, 4294901760
        %v833 = vsub.f32 %v508, %v832
        %v834 = vand.u32 %v833, 4294901760
        %835 = vmatpush.msra.mxu0 %v834
        %v836 = vand.u32 %v507, 4294901760
        %v837 = vsub.f32 %v507, %v836
        %v838 = vand.u32 %v837, 4294901760
        %839 = vmatpush.msra.mxu0 %v838
        %v840 = vand.u32 %v506, 4294901760
        %v841 = vsub.f32 %v506, %v840
        %v842 = vand.u32 %v841, 4294901760
        %843 = vmatpush.msra.mxu0 %v842
        %v844 = vand.u32 %v504, 4294901760
        %845 = vmatmul.f32.gmra.mxu0 %v844
        %v846 = vpop.f32.mrf.mxu0
        %v847 = vadd.f32 %v772, %v846
        %v848 = vand.u32 %v505, 4294901760
        %849 = vmatmul.f32.gmra.mxu0 %v848
        %v850 = vpop.f32.mrf.mxu0
        %v851 = vadd.f32 %v778, %v850
        %852 = vdwg.mxu0
        %v853 = vand.u32 %v521, 4294901760
        %854 = vmatpush.msra.mxu0 %v853
        %v855 = vand.u32 %v520, 4294901760
        %856 = vmatpush.msra.mxu0 %v855
        %v857 = vand.u32 %v519, 4294901760
        %858 = vmatpush.msra.mxu0 %v857
        %v859 = vand.u32 %v518, 4294901760
        %860 = vmatpush.msra.mxu0 %v859
        %v861 = vand.u32 %v517, 4294901760
        %862 = vmatpush.msra.mxu0 %v861
        %v863 = vand.u32 %v516, 4294901760
        %864 = vmatpush.msra.mxu0 %v863
        %v865 = vand.u32 %v515, 4294901760
        %866 = vmatpush.msra.mxu0 %v865
        %v867 = vand.u32 %v514, 4294901760
        %868 = vmatpush.msra.mxu0 %v867
        %v869 = vand.u32 %v513, 4294901760
        %870 = vmatpush.msra.mxu0 %v869
        %v871 = vand.u32 %v512, 4294901760
        %872 = vmatpush.msra.mxu0 %v871
        %v873 = vand.u32 %v511, 4294901760
        %874 = vmatpush.msra.mxu0 %v873
        %v875 = vand.u32 %v510, 4294901760
        %876 = vmatpush.msra.mxu0 %v875
        %v877 = vand.u32 %v509, 4294901760
        %878 = vmatpush.msra.mxu0 %v877
        %v879 = vand.u32 %v508, 4294901760
        %880 = vmatpush.msra.mxu0 %v879
        %v881 = vand.u32 %v507, 4294901760
        %882 = vmatpush.msra.mxu0 %v881
        %v883 = vand.u32 %v506, 4294901760
        %884 = vmatpush.msra.mxu0 %v883
        %v885 = vand.u32 %v504, 4294901760
        %886 = vmatmul.f32.gmra.mxu0 %v885
        %v887 = vpop.f32.mrf.mxu0
        %v888 = vadd.f32 %v847, %v887
        %v889 = vand.u32 %v505, 4294901760
        %890 = vmatmul.f32.gmra.mxu0 %v889
        %v891 = vpop.f32.mrf.mxu0
        %v892 = vadd.f32 %v851, %v891
        %893 = vdwg.mxu0
        %v894 = vld [vmem:[%s410] sm:$0xff]
        %v895 = vld [vmem:[%s410 + $0x8] sm:$0xff]
        %v896 = vld [vmem:[%s410 + $0x10] sm:$0xff]
        %v897 = vld [vmem:[%s410 + $0x18] sm:$0xff]
        %v898 = vld [vmem:[%s410 + $0x20] sm:$0xff]
        %v899 = vld [vmem:[%s410 + $0x28] sm:$0xff]
        %v900 = vld [vmem:[%s410 + $0x30] sm:$0xff]
        %v901 = vld [vmem:[%s410 + $0x38] sm:$0xff]
        %v902 = vld [vmem:[%s410 + $0x40] sm:$0xff]
        %v903 = vld [vmem:[%s410 + $0x48] sm:$0xff]
        %v904 = vld [vmem:[%s410 + $0x50] sm:$0xff]
        %v905 = vld [vmem:[%s410 + $0x58] sm:$0xff]
        %v906 = vld [vmem:[%s410 + $0x60] sm:$0xff]
        %v907 = vld [vmem:[%s410 + $0x68] sm:$0xff]
        %v908 = vld [vmem:[%s410 + $0x70] sm:$0xff]
        %v909 = vld [vmem:[%s410 + $0x78] sm:$0xff]
        %v910 = vand.u32 %v909, 4294901760
        %911 = vmatpush.msra.mxu0 %v910
        %v912 = vand.u32 %v908, 4294901760
        %913 = vmatpush.msra.mxu0 %v912
        %v914 = vand.u32 %v907, 4294901760
        %915 = vmatpush.msra.mxu0 %v914
        %v916 = vand.u32 %v906, 4294901760
        %917 = vmatpush.msra.mxu0 %v916
        %v918 = vand.u32 %v905, 4294901760
        %919 = vmatpush.msra.mxu0 %v918
        %v920 = vand.u32 %v904, 4294901760
        %921 = vmatpush.msra.mxu0 %v920
        %v922 = vand.u32 %v903, 4294901760
        %923 = vmatpush.msra.mxu0 %v922
        %v924 = vand.u32 %v902, 4294901760
        %925 = vmatpush.msra.mxu0 %v924
        %v926 = vand.u32 %v901, 4294901760
        %927 = vmatpush.msra.mxu0 %v926
        %v928 = vand.u32 %v900, 4294901760
        %929 = vmatpush.msra.mxu0 %v928
        %v930 = vand.u32 %v899, 4294901760
        %931 = vmatpush.msra.mxu0 %v930
        %v932 = vand.u32 %v898, 4294901760
        %933 = vmatpush.msra.mxu0 %v932
        %v934 = vand.u32 %v897, 4294901760
        %935 = vmatpush.msra.mxu0 %v934
        %v936 = vand.u32 %v896, 4294901760
        %937 = vmatpush.msra.mxu0 %v936
        %v938 = vand.u32 %v895, 4294901760
        %939 = vmatpush.msra.mxu0 %v938
        %v940 = vand.u32 %v894, 4294901760
        %941 = vmatpush.msra.mxu0 %v940
        %v942 = vand.u32 %v504, 4294901760
        %v943 = vsub.f32 %v504, %v942
        %v944 = vand.u32 %v943, 4294901760
        %v945 = vsub.f32 %v943, %v944
        %v946 = vand.u32 %v945, 4294901760
        %947 = vmatmul.f32.gmra.mxu0 %v946
        %v948 = vpop.f32.mrf.mxu0
        %v949 = vadd.f32 0.0, %v948
        %v950 = vand.u32 %v505, 4294901760
        %v951 = vsub.f32 %v505, %v950
        %v952 = vand.u32 %v951, 4294901760
        %v953 = vsub.f32 %v951, %v952
        %v954 = vand.u32 %v953, 4294901760
        %955 = vmatmul.f32.gmra.mxu0 %v954
        %v956 = vpop.f32.mrf.mxu0
        %v957 = vadd.f32 0.0, %v956
        %958 = vdwg.mxu0
        %v959 = vand.u32 %v909, 4294901760
        %v960 = vsub.f32 %v909, %v959
        %v961 = vand.u32 %v960, 4294901760
        %v962 = vsub.f32 %v960, %v961
        %v963 = vand.u32 %v962, 4294901760
        %964 = vmatpush.msra.mxu0 %v963
        %v965 = vand.u32 %v908, 4294901760
        %v966 = vsub.f32 %v908, %v965
        %v967 = vand.u32 %v966, 4294901760
        %v968 = vsub.f32 %v966, %v967
        %v969 = vand.u32 %v968, 4294901760
        %970 = vmatpush.msra.mxu0 %v969
        %v971 = vand.u32 %v907, 4294901760
        %v972 = vsub.f32 %v907, %v971
        %v973 = vand.u32 %v972, 4294901760
        %v974 = vsub.f32 %v972, %v973
        %v975 = vand.u32 %v974, 4294901760
        %976 = vmatpush.msra.mxu0 %v975
        %v977 = vand.u32 %v906, 4294901760
        %v978 = vsub.f32 %v906, %v977
        %v979 = vand.u32 %v978, 4294901760
        %v980 = vsub.f32 %v978, %v979
        %v981 = vand.u32 %v980, 4294901760
        %982 = vmatpush.msra.mxu0 %v981
        %v983 = vand.u32 %v905, 4294901760
        %v984 = vsub.f32 %v905, %v983
        %v985 = vand.u32 %v984, 4294901760
        %v986 = vsub.f32 %v984, %v985
        %v987 = vand.u32 %v986, 4294901760
        %988 = vmatpush.msra.mxu0 %v987
        %v989 = vand.u32 %v904, 4294901760
        %v990 = vsub.f32 %v904, %v989
        %v991 = vand.u32 %v990, 4294901760
        %v992 = vsub.f32 %v990, %v991
        %v993 = vand.u32 %v992, 4294901760
        %994 = vmatpush.msra.mxu0 %v993
        %v995 = vand.u32 %v903, 4294901760
        %v996 = vsub.f32 %v903, %v995
        %v997 = vand.u32 %v996, 4294901760
        %v998 = vsub.f32 %v996, %v997
        %v999 = vand.u32 %v998, 4294901760
        %1000 = vmatpush.msra.mxu0 %v999
        %v1001 = vand.u32 %v902, 4294901760
        %v1002 = vsub.f32 %v902, %v1001
        %v1003 = vand.u32 %v1002, 4294901760
        %v1004 = vsub.f32 %v1002, %v1003
        %v1005 = vand.u32 %v1004, 4294901760
        %1006 = vmatpush.msra.mxu0 %v1005
        %v1007 = vand.u32 %v901, 4294901760
        %v1008 = vsub.f32 %v901, %v1007
        %v1009 = vand.u32 %v1008, 4294901760
        %v1010 = vsub.f32 %v1008, %v1009
        %v1011 = vand.u32 %v1010, 4294901760
        %1012 = vmatpush.msra.mxu0 %v1011
        %v1013 = vand.u32 %v900, 4294901760
        %v1014 = vsub.f32 %v900, %v1013
        %v1015 = vand.u32 %v1014, 4294901760
        %v1016 = vsub.f32 %v1014, %v1015
        %v1017 = vand.u32 %v1016, 4294901760
        %1018 = vmatpush.msra.mxu0 %v1017
        %v1019 = vand.u32 %v899, 4294901760
        %v1020 = vsub.f32 %v899, %v1019
        %v1021 = vand.u32 %v1020, 4294901760
        %v1022 = vsub.f32 %v1020, %v1021
        %v1023 = vand.u32 %v1022, 4294901760
        %1024 = vmatpush.msra.mxu0 %v1023
        %v1025 = vand.u32 %v898, 4294901760
        %v1026 = vsub.f32 %v898, %v1025
        %v1027 = vand.u32 %v1026, 4294901760
        %v1028 = vsub.f32 %v1026, %v1027
        %v1029 = vand.u32 %v1028, 4294901760
        %1030 = vmatpush.msra.mxu0 %v1029
        %v1031 = vand.u32 %v897, 4294901760
        %v1032 = vsub.f32 %v897, %v1031
        %v1033 = vand.u32 %v1032, 4294901760
        %v1034 = vsub.f32 %v1032, %v1033
        %v1035 = vand.u32 %v1034, 4294901760
        %1036 = vmatpush.msra.mxu0 %v1035
        %v1037 = vand.u32 %v896, 4294901760
        %v1038 = vsub.f32 %v896, %v1037
        %v1039 = vand.u32 %v1038, 4294901760
        %v1040 = vsub.f32 %v1038, %v1039
        %v1041 = vand.u32 %v1040, 4294901760
        %1042 = vmatpush.msra.mxu0 %v1041
        %v1043 = vand.u32 %v895, 4294901760
        %v1044 = vsub.f32 %v895, %v1043
        %v1045 = vand.u32 %v1044, 4294901760
        %v1046 = vsub.f32 %v1044, %v1045
        %v1047 = vand.u32 %v1046, 4294901760
        %1048 = vmatpush.msra.mxu0 %v1047
        %v1049 = vand.u32 %v894, 4294901760
        %v1050 = vsub.f32 %v894, %v1049
        %v1051 = vand.u32 %v1050, 4294901760
        %v1052 = vsub.f32 %v1050, %v1051
        %v1053 = vand.u32 %v1052, 4294901760
        %1054 = vmatpush.msra.mxu0 %v1053
        %v1055 = vand.u32 %v504, 4294901760
        %1056 = vmatmul.f32.gmra.mxu0 %v1055
        %v1057 = vpop.f32.mrf.mxu0
        %v1058 = vadd.f32 %v949, %v1057
        %v1059 = vand.u32 %v505, 4294901760
        %1060 = vmatmul.f32.gmra.mxu0 %v1059
        %v1061 = vpop.f32.mrf.mxu0
        %v1062 = vadd.f32 %v957, %v1061
        %1063 = vdwg.mxu0
        %v1064 = vand.u32 %v909, 4294901760
        %v1065 = vsub.f32 %v909, %v1064
        %1066 = vmatpush.msra.mxu0 %v1065
        %v1067 = vand.u32 %v908, 4294901760
        %v1068 = vsub.f32 %v908, %v1067
        %1069 = vmatpush.msra.mxu0 %v1068
        %v1070 = vand.u32 %v907, 4294901760
        %v1071 = vsub.f32 %v907, %v1070
        %1072 = vmatpush.msra.mxu0 %v1071
        %v1073 = vand.u32 %v906, 4294901760
        %v1074 = vsub.f32 %v906, %v1073
        %1075 = vmatpush.msra.mxu0 %v1074
        %v1076 = vand.u32 %v905, 4294901760
        %v1077 = vsub.f32 %v905, %v1076
        %1078 = vmatpush.msra.mxu0 %v1077
        %v1079 = vand.u32 %v904, 4294901760
        %v1080 = vsub.f32 %v904, %v1079
        %1081 = vmatpush.msra.mxu0 %v1080
        %v1082 = vand.u32 %v903, 4294901760
        %v1083 = vsub.f32 %v903, %v1082
        %1084 = vmatpush.msra.mxu0 %v1083
        %v1085 = vand.u32 %v902, 4294901760
        %v1086 = vsub.f32 %v902, %v1085
        %1087 = vmatpush.msra.mxu0 %v1086
        %v1088 = vand.u32 %v901, 4294901760
        %v1089 = vsub.f32 %v901, %v1088
        %1090 = vmatpush.msra.mxu0 %v1089
        %v1091 = vand.u32 %v900, 4294901760
        %v1092 = vsub.f32 %v900, %v1091
        %1093 = vmatpush.msra.mxu0 %v1092
        %v1094 = vand.u32 %v899, 4294901760
        %v1095 = vsub.f32 %v899, %v1094
        %1096 = vmatpush.msra.mxu0 %v1095
        %v1097 = vand.u32 %v898, 4294901760
        %v1098 = vsub.f32 %v898, %v1097
        %1099 = vmatpush.msra.mxu0 %v1098
        %v1100 = vand.u32 %v897, 4294901760
        %v1101 = vsub.f32 %v897, %v1100
        %1102 = vmatpush.msra.mxu0 %v1101
        %v1103 = vand.u32 %v896, 4294901760
        %v1104 = vsub.f32 %v896, %v1103
        %1105 = vmatpush.msra.mxu0 %v1104
        %v1106 = vand.u32 %v895, 4294901760
        %v1107 = vsub.f32 %v895, %v1106
        %1108 = vmatpush.msra.mxu0 %v1107
        %v1109 = vand.u32 %v894, 4294901760
        %v1110 = vsub.f32 %v894, %v1109
        %1111 = vmatpush.msra.mxu0 %v1110
        %v1112 = vand.u32 %v504, 4294901760
        %v1113 = vsub.f32 %v504, %v1112
        %1114 = vmatmul.f32.gmra.mxu0 %v1113
        %v1115 = vpop.f32.mrf.mxu0
        %v1116 = vadd.f32 %v1058, %v1115
        %v1117 = vand.u32 %v505, 4294901760
        %v1118 = vsub.f32 %v505, %v1117
        %1119 = vmatmul.f32.gmra.mxu0 %v1118
        %v1120 = vpop.f32.mrf.mxu0
        %v1121 = vadd.f32 %v1062, %v1120
        %1122 = vdwg.mxu0
        %v1123 = vand.u32 %v909, 4294901760
        %1124 = vmatpush.msra.mxu0 %v1123
        %v1125 = vand.u32 %v908, 4294901760
        %1126 = vmatpush.msra.mxu0 %v1125
        %v1127 = vand.u32 %v907, 4294901760
        %1128 = vmatpush.msra.mxu0 %v1127
        %v1129 = vand.u32 %v906, 4294901760
        %1130 = vmatpush.msra.mxu0 %v1129
        %v1131 = vand.u32 %v905, 4294901760
        %1132 = vmatpush.msra.mxu0 %v1131
        %v1133 = vand.u32 %v904, 4294901760
        %1134 = vmatpush.msra.mxu0 %v1133
        %v1135 = vand.u32 %v903, 4294901760
        %1136 = vmatpush.msra.mxu0 %v1135
        %v1137 = vand.u32 %v902, 4294901760
        %1138 = vmatpush.msra.mxu0 %v1137
        %v1139 = vand.u32 %v901, 4294901760
        %1140 = vmatpush.msra.mxu0 %v1139
        %v1141 = vand.u32 %v900, 4294901760
        %1142 = vmatpush.msra.mxu0 %v1141
        %v1143 = vand.u32 %v899, 4294901760
        %1144 = vmatpush.msra.mxu0 %v1143
        %v1145 = vand.u32 %v898, 4294901760
        %1146 = vmatpush.msra.mxu0 %v1145
        %v1147 = vand.u32 %v897, 4294901760
        %1148 = vmatpush.msra.mxu0 %v1147
        %v1149 = vand.u32 %v896, 4294901760
        %1150 = vmatpush.msra.mxu0 %v1149
        %v1151 = vand.u32 %v895, 4294901760
        %1152 = vmatpush.msra.mxu0 %v1151
        %v1153 = vand.u32 %v894, 4294901760
        %1154 = vmatpush.msra.mxu0 %v1153
        %v1155 = vand.u32 %v504, 4294901760
        %v1156 = vsub.f32 %v504, %v1155
        %v1157 = vand.u32 %v1156, 4294901760
        %1158 = vmatmul.f32.gmra.mxu0 %v1157
        %v1159 = vpop.f32.mrf.mxu0
        %v1160 = vadd.f32 %v1116, %v1159
        %v1161 = vand.u32 %v505, 4294901760
        %v1162 = vsub.f32 %v505, %v1161
        %v1163 = vand.u32 %v1162, 4294901760
        %1164 = vmatmul.f32.gmra.mxu0 %v1163
        %v1165 = vpop.f32.mrf.mxu0
        %v1166 = vadd.f32 %v1121, %v1165
        %1167 = vdwg.mxu0
        %v1168 = vand.u32 %v909, 4294901760
        %v1169 = vsub.f32 %v909, %v1168
        %v1170 = vand.u32 %v1169, 4294901760
        %1171 = vmatpush.msra.mxu0 %v1170
        %v1172 = vand.u32 %v908, 4294901760
        %v1173 = vsub.f32 %v908, %v1172
        %v1174 = vand.u32 %v1173, 4294901760
        %1175 = vmatpush.msra.mxu0 %v1174
        %v1176 = vand.u32 %v907, 4294901760
        %v1177 = vsub.f32 %v907, %v1176
        %v1178 = vand.u32 %v1177, 4294901760
        %1179 = vmatpush.msra.mxu0 %v1178
        %v1180 = vand.u32 %v906, 4294901760
        %v1181 = vsub.f32 %v906, %v1180
        %v1182 = vand.u32 %v1181, 4294901760
        %1183 = vmatpush.msra.mxu0 %v1182
        %v1184 = vand.u32 %v905, 4294901760
        %v1185 = vsub.f32 %v905, %v1184
        %v1186 = vand.u32 %v1185, 4294901760
        %1187 = vmatpush.msra.mxu0 %v1186
        %v1188 = vand.u32 %v904, 4294901760
        %v1189 = vsub.f32 %v904, %v1188
        %v1190 = vand.u32 %v1189, 4294901760
        %1191 = vmatpush.msra.mxu0 %v1190
        %v1192 = vand.u32 %v903, 4294901760
        %v1193 = vsub.f32 %v903, %v1192
        %v1194 = vand.u32 %v1193, 4294901760
        %1195 = vmatpush.msra.mxu0 %v1194
        %v1196 = vand.u32 %v902, 4294901760
        %v1197 = vsub.f32 %v902, %v1196
        %v1198 = vand.u32 %v1197, 4294901760
        %1199 = vmatpush.msra.mxu0 %v1198
        %v1200 = vand.u32 %v901, 4294901760
        %v1201 = vsub.f32 %v901, %v1200
        %v1202 = vand.u32 %v1201, 4294901760
        %1203 = vmatpush.msra.mxu0 %v1202
        %v1204 = vand.u32 %v900, 4294901760
        %v1205 = vsub.f32 %v900, %v1204
        %v1206 = vand.u32 %v1205, 4294901760
        %1207 = vmatpush.msra.mxu0 %v1206
        %v1208 = vand.u32 %v899, 4294901760
        %v1209 = vsub.f32 %v899, %v1208
        %v1210 = vand.u32 %v1209, 4294901760
        %1211 = vmatpush.msra.mxu0 %v1210
        %v1212 = vand.u32 %v898, 4294901760
        %v1213 = vsub.f32 %v898, %v1212
        %v1214 = vand.u32 %v1213, 4294901760
        %1215 = vmatpush.msra.mxu0 %v1214
        %v1216 = vand.u32 %v897, 4294901760
        %v1217 = vsub.f32 %v897, %v1216
        %v1218 = vand.u32 %v1217, 4294901760
        %1219 = vmatpush.msra.mxu0 %v1218
        %v1220 = vand.u32 %v896, 4294901760
        %v1221 = vsub.f32 %v896, %v1220
        %v1222 = vand.u32 %v1221, 4294901760
        %1223 = vmatpush.msra.mxu0 %v1222
        %v1224 = vand.u32 %v895, 4294901760
        %v1225 = vsub.f32 %v895, %v1224
        %v1226 = vand.u32 %v1225, 4294901760
        %1227 = vmatpush.msra.mxu0 %v1226
        %v1228 = vand.u32 %v894, 4294901760
        %v1229 = vsub.f32 %v894, %v1228
        %v1230 = vand.u32 %v1229, 4294901760
        %1231 = vmatpush.msra.mxu0 %v1230
        %v1232 = vand.u32 %v504, 4294901760
        %1233 = vmatmul.f32.gmra.mxu0 %v1232
        %v1234 = vpop.f32.mrf.mxu0
        %v1235 = vadd.f32 %v1160, %v1234
        %v1236 = vand.u32 %v505, 4294901760
        %1237 = vmatmul.f32.gmra.mxu0 %v1236
        %v1238 = vpop.f32.mrf.mxu0
        %v1239 = vadd.f32 %v1166, %v1238
        %1240 = vdwg.mxu0
        %v1241 = vand.u32 %v909, 4294901760
        %1242 = vmatpush.msra.mxu0 %v1241
        %v1243 = vand.u32 %v908, 4294901760
        %1244 = vmatpush.msra.mxu0 %v1243
        %v1245 = vand.u32 %v907, 4294901760
        %1246 = vmatpush.msra.mxu0 %v1245
        %v1247 = vand.u32 %v906, 4294901760
        %1248 = vmatpush.msra.mxu0 %v1247
        %v1249 = vand.u32 %v905, 4294901760
        %1250 = vmatpush.msra.mxu0 %v1249
        %v1251 = vand.u32 %v904, 4294901760
        %1252 = vmatpush.msra.mxu0 %v1251
        %v1253 = vand.u32 %v903, 4294901760
        %1254 = vmatpush.msra.mxu0 %v1253
        %v1255 = vand.u32 %v902, 4294901760
        %1256 = vmatpush.msra.mxu0 %v1255
        %v1257 = vand.u32 %v901, 4294901760
        %1258 = vmatpush.msra.mxu0 %v1257
        %v1259 = vand.u32 %v900, 4294901760
        %1260 = vmatpush.msra.mxu0 %v1259
        %v1261 = vand.u32 %v899, 4294901760
        %1262 = vmatpush.msra.mxu0 %v1261
        %v1263 = vand.u32 %v898, 4294901760
        %1264 = vmatpush.msra.mxu0 %v1263
        %v1265 = vand.u32 %v897, 4294901760
        %1266 = vmatpush.msra.mxu0 %v1265
        %v1267 = vand.u32 %v896, 4294901760
        %1268 = vmatpush.msra.mxu0 %v1267
        %v1269 = vand.u32 %v895, 4294901760
        %1270 = vmatpush.msra.mxu0 %v1269
        %v1271 = vand.u32 %v894, 4294901760
        %1272 = vmatpush.msra.mxu0 %v1271
        %v1273 = vand.u32 %v504, 4294901760
        %1274 = vmatmul.f32.gmra.mxu0 %v1273
        %v1275 = vpop.f32.mrf.mxu0
        %v1276 = vadd.f32 %v1235, %v1275
        %v1277 = vand.u32 %v505, 4294901760
        %1278 = vmatmul.f32.gmra.mxu0 %v1277
        %v1279 = vpop.f32.mrf.mxu0
        %v1280 = vadd.f32 %v1239, %v1279
        %1281 = vdwg.mxu0
        %v1282 = vmul.f32 %v888, %v888
        %v1283 = vmul.f32 %v892, %v892
        %1286 = vrot.lane.b32.xlu0 %v1282, 127
        %v1287 = vpop.permute.xlu0 %1286
        %1288 = vrot.lane.b32.xlu0 %v1283, 127
        %v1289 = vpop.permute.xlu0 %1288
        %v1292 = vadd.f32 %v1282, %v1287
        %v1293 = vadd.f32 %v1283, %v1289
        %1294 = vrot.lane.b32.xlu0 %v1282, 126
        %v1295 = vpop.permute.xlu0 %1294
        %1296 = vrot.lane.b32.xlu0 %v1283, 126
        %v1297 = vpop.permute.xlu0 %1296
        %v1300 = vadd.f32 %v1292, %v1295
        %v1301 = vadd.f32 %v1293, %v1297
        %1303 = vset.pattern.permute.xlu0 0
        %1304 = vperm.xlu0 %1303, %v888
        %v1305 = vpop.permute.xlu0 %1304
        %1308 = vset.pattern.permute.xlu0 0
        %1309 = vperm.xlu0 %1308, %v892
        %v1310 = vpop.permute.xlu0 %1309
        %v1312 = vperm.slane %v430, 0
        %v1313 = vmul.f32 %v1305, %v1312
        %v1314 = vmul.f32 %v1310, %v1312
        %1315 = vset.pattern.permute.xlu0 1
        %1316 = vperm.xlu0 %1315, %v888
        %v1317 = vpop.permute.xlu0 %1316
        %1319 = vset.pattern.permute.xlu0 1
        %1320 = vperm.xlu0 %1319, %v892
        %v1321 = vpop.permute.xlu0 %1320
        %v1323 = vperm.slane %v430, 1
        %v1324 = vmul.f32 %v1317, %v1323
        %v1325 = vmul.f32 %v1321, %v1323
        %v1326 = vadd.f32 %v1313, %v1324
        %v1327 = vadd.f32 %v1314, %v1325
        %1328 = vset.pattern.permute.xlu0 2
        %1329 = vperm.xlu0 %1328, %v888
        %v1330 = vpop.permute.xlu0 %1329
        %1332 = vset.pattern.permute.xlu0 2
        %1333 = vperm.xlu0 %1332, %v892
        %v1334 = vpop.permute.xlu0 %1333
        %v1336 = vperm.slane %v430, 2
        %v1337 = vmul.f32 %v1330, %v1336
        %v1338 = vmul.f32 %v1334, %v1336
        %v1339 = vadd.f32 %v1326, %v1337
        %v1340 = vadd.f32 %v1327, %v1338
        %v1341 = vsel %vm433, 0.0, inf
        %1343 = vset.pattern.permute.xlu0 0
        %1344 = vperm.xlu0 %1343, %v1300
        %v1345 = vpop.permute.xlu0 %1344
        %1348 = vset.pattern.permute.xlu0 0
        %1349 = vperm.xlu0 %1348, %v1301
        %v1350 = vpop.permute.xlu0 %1349
        %v1352 = vperm.slane %v441, 0
        %v1353 = vadd.f32 %v1345, %v1352
        %v1354 = vadd.f32 %v1350, %v1352
        %v1355 = vmul.f32 %v1339, 2.0
        %v1356 = vmul.f32 %v1340, 2.0
        %v1357 = vsub.f32 %v1353, %v1355
        %v1358 = vsub.f32 %v1354, %v1356
        %v1359 = vadd.f32 %v1357, %v1341
        %v1360 = vadd.f32 %v1358, %v1341
        %1361 = vmin.xlane.f32.xlu0 %v1359
        %v1362 = vpop.xlane.xlu0 %1361
        %1363 = vmin.xlane.f32.xlu0 %v1360
        %v1364 = vpop.xlane.xlu0 %1363
        %vm1365 = vcmp.eq.f32.partialorder %v1359, %v1362
        %vm1366 = vcmp.eq.f32.partialorder %v1360, %v1364
        %v1367 = vsel %vm1365, %v432, 128
        %v1368 = vsel %vm1366, %v432, 128
        %v1369 = vand.u32 %v1367, 65535
        %v1370 = vshra.s32 %v1367, 16
        %v1371 = vcvt.s32.f32 %v1369
        %v1372 = vcvt.s32.f32 %v1370
        %1373 = vmin.xlane.f32.xlu0 %v1372
        %v1374 = vpop.xlane.xlu0 %1373
        %vm1375 = vcmp.eq.f32.partialorder %v1372, %v1374
        %v1376 = vsel %vm1375, %v1371, inf
        %1377 = vmin.xlane.f32.xlu0 %v1376
        %v1378 = vpop.xlane.xlu0 %1377
        %v1379 = vcvt.f32.s32 %v1378
        %v1380 = vcvt.f32.s32 %v1374
        %v1381 = vshll.u32 %v1380, 16
        %v1382 = vadd.s32 %v1381, %v1379
        %v1383 = vand.u32 %v1368, 65535
        %v1384 = vshra.s32 %v1368, 16
        %v1385 = vcvt.s32.f32 %v1383
        %v1386 = vcvt.s32.f32 %v1384
        %1387 = vmin.xlane.f32.xlu0 %v1386
        %v1388 = vpop.xlane.xlu0 %1387
        %vm1389 = vcmp.eq.f32.partialorder %v1386, %v1388
        %v1390 = vsel %vm1389, %v1385, inf
        %1391 = vmin.xlane.f32.xlu0 %v1390
        %v1392 = vpop.xlane.xlu0 %1391
        %v1393 = vcvt.f32.s32 %v1392
        %v1394 = vcvt.f32.s32 %v1388
        %v1395 = vshll.u32 %v1394, 16
        %v1396 = vadd.s32 %v1395, %v1393
        %vm1397 = vcmp.eq.s32.totalorder %v432, %v1382
        %vm1398 = vcmp.eq.s32.totalorder %v432, %v1396
        %v1399 = vsel %vm1397, 1, 0
        %v1400 = vsel %vm1398, 1, 0
        %v1401 = vcvt.s32.f32 %v1399
        %v1402 = vcvt.s32.f32 %v1400
        %v1403 = vsel %vm1397, inf, %v1359
        %v1404 = vsel %vm1398, inf, %v1360
        %1405 = vmin.xlane.f32.xlu0 %v1403
        %v1406 = vpop.xlane.xlu0 %1405
        %1407 = vmin.xlane.f32.xlu0 %v1404
        %v1408 = vpop.xlane.xlu0 %1407
        %vm1409 = vcmp.eq.f32.partialorder %v1403, %v1406
        %vm1410 = vcmp.eq.f32.partialorder %v1404, %v1408
        %v1411 = vsel %vm1409, %v432, 128
        %v1412 = vsel %vm1410, %v432, 128
        %v1413 = vand.u32 %v1411, 65535
        %v1414 = vshra.s32 %v1411, 16
        %v1415 = vcvt.s32.f32 %v1413
        %v1416 = vcvt.s32.f32 %v1414
        %1417 = vmin.xlane.f32.xlu0 %v1416
        %v1418 = vpop.xlane.xlu0 %1417
        %vm1419 = vcmp.eq.f32.partialorder %v1416, %v1418
        %v1420 = vsel %vm1419, %v1415, inf
        %1421 = vmin.xlane.f32.xlu0 %v1420
        %v1422 = vpop.xlane.xlu0 %1421
        %v1423 = vcvt.f32.s32 %v1422
        %v1424 = vcvt.f32.s32 %v1418
        %v1425 = vshll.u32 %v1424, 16
        %v1426 = vadd.s32 %v1425, %v1423
        %v1427 = vand.u32 %v1412, 65535
        %v1428 = vshra.s32 %v1412, 16
        %v1429 = vcvt.s32.f32 %v1427
        %v1430 = vcvt.s32.f32 %v1428
        %1431 = vmin.xlane.f32.xlu0 %v1430
        %v1432 = vpop.xlane.xlu0 %1431
        %vm1433 = vcmp.eq.f32.partialorder %v1430, %v1432
        %v1434 = vsel %vm1433, %v1429, inf
        %1435 = vmin.xlane.f32.xlu0 %v1434
        %v1436 = vpop.xlane.xlu0 %1435
        %v1437 = vcvt.f32.s32 %v1436
        %v1438 = vcvt.f32.s32 %v1432
        %v1439 = vshll.u32 %v1438, 16
        %v1440 = vadd.s32 %v1439, %v1437
        %vm1441 = vcmp.eq.s32.totalorder %v432, %v1426
        %vm1442 = vcmp.eq.s32.totalorder %v432, %v1440
        %v1443 = vsel %vm1441, 1, 0
        %v1444 = vsel %vm1442, 1, 0
        %v1445 = vcvt.s32.f32 %v1443
        %v1446 = vcvt.s32.f32 %v1444
        %v1447 = vsel %vm1441, inf, %v1403
        %v1448 = vsel %vm1442, inf, %v1404
        %1449 = vmin.xlane.f32.xlu0 %v1447
        %v1450 = vpop.xlane.xlu0 %1449
        %1451 = vmin.xlane.f32.xlu0 %v1448
        %v1452 = vpop.xlane.xlu0 %1451
        %vm1453 = vcmp.eq.f32.partialorder %v1447, %v1450
        %vm1454 = vcmp.eq.f32.partialorder %v1448, %v1452
        %v1455 = vsel %vm1453, %v432, 128
        %v1456 = vsel %vm1454, %v432, 128
        %v1457 = vand.u32 %v1455, 65535
        %v1458 = vshra.s32 %v1455, 16
        %v1459 = vcvt.s32.f32 %v1457
        %v1460 = vcvt.s32.f32 %v1458
        %1461 = vmin.xlane.f32.xlu0 %v1460
        %v1462 = vpop.xlane.xlu0 %1461
        %vm1463 = vcmp.eq.f32.partialorder %v1460, %v1462
        %v1464 = vsel %vm1463, %v1459, inf
        %1465 = vmin.xlane.f32.xlu0 %v1464
        %v1466 = vpop.xlane.xlu0 %1465
        %v1467 = vcvt.f32.s32 %v1466
        %v1468 = vcvt.f32.s32 %v1462
        %v1469 = vshll.u32 %v1468, 16
        %v1470 = vadd.s32 %v1469, %v1467
        %v1471 = vand.u32 %v1456, 65535
        %v1472 = vshra.s32 %v1456, 16
        %v1473 = vcvt.s32.f32 %v1471
        %v1474 = vcvt.s32.f32 %v1472
        %1475 = vmin.xlane.f32.xlu0 %v1474
        %v1476 = vpop.xlane.xlu0 %1475
        %vm1477 = vcmp.eq.f32.partialorder %v1474, %v1476
        %v1478 = vsel %vm1477, %v1473, inf
        %1479 = vmin.xlane.f32.xlu0 %v1478
        %v1480 = vpop.xlane.xlu0 %1479
        %v1481 = vcvt.f32.s32 %v1480
        %v1482 = vcvt.f32.s32 %v1476
        %v1483 = vshll.u32 %v1482, 16
        %v1484 = vadd.s32 %v1483, %v1481
        %vm1485 = vcmp.eq.s32.totalorder %v432, %v1470
        %vm1486 = vcmp.eq.s32.totalorder %v432, %v1484
        %v1487 = vsel %vm1485, 1, 0
        %v1488 = vsel %vm1486, 1, 0
        %v1489 = vcvt.s32.f32 %v1487
        %v1490 = vcvt.s32.f32 %v1488
        %v1491 = vsel %vm1485, inf, %v1447
        %v1492 = vsel %vm1486, inf, %v1448
        %1493 = vmin.xlane.f32.xlu0 %v1491
        %v1494 = vpop.xlane.xlu0 %1493
        %1495 = vmin.xlane.f32.xlu0 %v1492
        %v1496 = vpop.xlane.xlu0 %1495
        %vm1497 = vcmp.eq.f32.partialorder %v1491, %v1494
        %vm1498 = vcmp.eq.f32.partialorder %v1492, %v1496
        %v1499 = vsel %vm1497, %v432, 128
        %v1500 = vsel %vm1498, %v432, 128
        %v1501 = vand.u32 %v1499, 65535
        %v1502 = vshra.s32 %v1499, 16
        %v1503 = vcvt.s32.f32 %v1501
        %v1504 = vcvt.s32.f32 %v1502
        %1505 = vmin.xlane.f32.xlu0 %v1504
        %v1506 = vpop.xlane.xlu0 %1505
        %vm1507 = vcmp.eq.f32.partialorder %v1504, %v1506
        %v1508 = vsel %vm1507, %v1503, inf
        %1509 = vmin.xlane.f32.xlu0 %v1508
        %v1510 = vpop.xlane.xlu0 %1509
        %v1511 = vcvt.f32.s32 %v1510
        %v1512 = vcvt.f32.s32 %v1506
        %v1513 = vshll.u32 %v1512, 16
        %v1514 = vadd.s32 %v1513, %v1511
        %v1515 = vand.u32 %v1500, 65535
        %v1516 = vshra.s32 %v1500, 16
        %v1517 = vcvt.s32.f32 %v1515
        %v1518 = vcvt.s32.f32 %v1516
        %1519 = vmin.xlane.f32.xlu0 %v1518
        %v1520 = vpop.xlane.xlu0 %1519
        %vm1521 = vcmp.eq.f32.partialorder %v1518, %v1520
        %v1522 = vsel %vm1521, %v1517, inf
        %1523 = vmin.xlane.f32.xlu0 %v1522
        %v1524 = vpop.xlane.xlu0 %1523
        %v1525 = vcvt.f32.s32 %v1524
        %v1526 = vcvt.f32.s32 %v1520
        %v1527 = vshll.u32 %v1526, 16
        %v1528 = vadd.s32 %v1527, %v1525
        %vm1529 = vcmp.eq.s32.totalorder %v432, %v1514
        %vm1530 = vcmp.eq.s32.totalorder %v432, %v1528
        %v1531 = vsel %vm1529, 1, 0
        %v1532 = vsel %vm1530, 1, 0
        %v1533 = vcvt.s32.f32 %v1531
        %v1534 = vcvt.s32.f32 %v1532
        %v1535 = vsel %vm1529, inf, %v1491
        %v1536 = vsel %vm1530, inf, %v1492
        %1537 = vmin.xlane.f32.xlu0 %v1535
        %v1538 = vpop.xlane.xlu0 %1537
        %1539 = vmin.xlane.f32.xlu0 %v1536
        %v1540 = vpop.xlane.xlu0 %1539
        %vm1541 = vcmp.eq.f32.partialorder %v1535, %v1538
        %vm1542 = vcmp.eq.f32.partialorder %v1536, %v1540
        %v1543 = vsel %vm1541, %v432, 128
        %v1544 = vsel %vm1542, %v432, 128
        %v1545 = vand.u32 %v1543, 65535
        %v1546 = vshra.s32 %v1543, 16
        %v1547 = vcvt.s32.f32 %v1545
        %v1548 = vcvt.s32.f32 %v1546
        %1549 = vmin.xlane.f32.xlu0 %v1548
        %v1550 = vpop.xlane.xlu0 %1549
        %vm1551 = vcmp.eq.f32.partialorder %v1548, %v1550
        %v1552 = vsel %vm1551, %v1547, inf
        %1553 = vmin.xlane.f32.xlu0 %v1552
        %v1554 = vpop.xlane.xlu0 %1553
        %v1555 = vcvt.f32.s32 %v1554
        %v1556 = vcvt.f32.s32 %v1550
        %v1557 = vshll.u32 %v1556, 16
        %v1558 = vadd.s32 %v1557, %v1555
        %v1559 = vand.u32 %v1544, 65535
        %v1560 = vshra.s32 %v1544, 16
        %v1561 = vcvt.s32.f32 %v1559
        %v1562 = vcvt.s32.f32 %v1560
        %1563 = vmin.xlane.f32.xlu0 %v1562
        %v1564 = vpop.xlane.xlu0 %1563
        %vm1565 = vcmp.eq.f32.partialorder %v1562, %v1564
        %v1566 = vsel %vm1565, %v1561, inf
        %1567 = vmin.xlane.f32.xlu0 %v1566
        %v1568 = vpop.xlane.xlu0 %1567
        %v1569 = vcvt.f32.s32 %v1568
        %v1570 = vcvt.f32.s32 %v1564
        %v1571 = vshll.u32 %v1570, 16
        %v1572 = vadd.s32 %v1571, %v1569
        %vm1573 = vcmp.eq.s32.totalorder %v432, %v1558
        %vm1574 = vcmp.eq.s32.totalorder %v432, %v1572
        %v1575 = vsel %vm1573, 1, 0
        %v1576 = vsel %vm1574, 1, 0
        %v1577 = vcvt.s32.f32 %v1575
        %v1578 = vcvt.s32.f32 %v1576
        %v1579 = vsel %vm1573, inf, %v1535
        %v1580 = vsel %vm1574, inf, %v1536
        %1581 = vmin.xlane.f32.xlu0 %v1579
        %v1582 = vpop.xlane.xlu0 %1581
        %1583 = vmin.xlane.f32.xlu0 %v1580
        %v1584 = vpop.xlane.xlu0 %1583
        %vm1585 = vcmp.eq.f32.partialorder %v1579, %v1582
        %vm1586 = vcmp.eq.f32.partialorder %v1580, %v1584
        %v1587 = vsel %vm1585, %v432, 128
        %v1588 = vsel %vm1586, %v432, 128
        %v1589 = vand.u32 %v1587, 65535
        %v1590 = vshra.s32 %v1587, 16
        %v1591 = vcvt.s32.f32 %v1589
        %v1592 = vcvt.s32.f32 %v1590
        %1593 = vmin.xlane.f32.xlu0 %v1592
        %v1594 = vpop.xlane.xlu0 %1593
        %vm1595 = vcmp.eq.f32.partialorder %v1592, %v1594
        %v1596 = vsel %vm1595, %v1591, inf
        %1597 = vmin.xlane.f32.xlu0 %v1596
        %v1598 = vpop.xlane.xlu0 %1597
        %v1599 = vcvt.f32.s32 %v1598
        %v1600 = vcvt.f32.s32 %v1594
        %v1601 = vshll.u32 %v1600, 16
        %v1602 = vadd.s32 %v1601, %v1599
        %v1603 = vand.u32 %v1588, 65535
        %v1604 = vshra.s32 %v1588, 16
        %v1605 = vcvt.s32.f32 %v1603
        %v1606 = vcvt.s32.f32 %v1604
        %1607 = vmin.xlane.f32.xlu0 %v1606
        %v1608 = vpop.xlane.xlu0 %1607
        %vm1609 = vcmp.eq.f32.partialorder %v1606, %v1608
        %v1610 = vsel %vm1609, %v1605, inf
        %1611 = vmin.xlane.f32.xlu0 %v1610
        %v1612 = vpop.xlane.xlu0 %1611
        %v1613 = vcvt.f32.s32 %v1612
        %v1614 = vcvt.f32.s32 %v1608
        %v1615 = vshll.u32 %v1614, 16
        %v1616 = vadd.s32 %v1615, %v1613
        %vm1617 = vcmp.eq.s32.totalorder %v432, %v1602
        %vm1618 = vcmp.eq.s32.totalorder %v432, %v1616
        %v1619 = vsel %vm1617, 1, 0
        %v1620 = vsel %vm1618, 1, 0
        %v1621 = vcvt.s32.f32 %v1619
        %v1622 = vcvt.s32.f32 %v1620
        %v1623 = vsel %vm1617, inf, %v1579
        %v1624 = vsel %vm1618, inf, %v1580
        %1625 = vmin.xlane.f32.xlu0 %v1623
        %v1626 = vpop.xlane.xlu0 %1625
        %1627 = vmin.xlane.f32.xlu0 %v1624
        %v1628 = vpop.xlane.xlu0 %1627
        %vm1629 = vcmp.eq.f32.partialorder %v1623, %v1626
        %vm1630 = vcmp.eq.f32.partialorder %v1624, %v1628
        %v1631 = vsel %vm1629, %v432, 128
        %v1632 = vsel %vm1630, %v432, 128
        %v1633 = vand.u32 %v1631, 65535
        %v1634 = vshra.s32 %v1631, 16
        %v1635 = vcvt.s32.f32 %v1633
        %v1636 = vcvt.s32.f32 %v1634
        %1637 = vmin.xlane.f32.xlu0 %v1636
        %v1638 = vpop.xlane.xlu0 %1637
        %vm1639 = vcmp.eq.f32.partialorder %v1636, %v1638
        %v1640 = vsel %vm1639, %v1635, inf
        %1641 = vmin.xlane.f32.xlu0 %v1640
        %v1642 = vpop.xlane.xlu0 %1641
        %v1643 = vcvt.f32.s32 %v1642
        %v1644 = vcvt.f32.s32 %v1638
        %v1645 = vshll.u32 %v1644, 16
        %v1646 = vadd.s32 %v1645, %v1643
        %v1647 = vand.u32 %v1632, 65535
        %v1648 = vshra.s32 %v1632, 16
        %v1649 = vcvt.s32.f32 %v1647
        %v1650 = vcvt.s32.f32 %v1648
        %1651 = vmin.xlane.f32.xlu0 %v1650
        %v1652 = vpop.xlane.xlu0 %1651
        %vm1653 = vcmp.eq.f32.partialorder %v1650, %v1652
        %v1654 = vsel %vm1653, %v1649, inf
        %1655 = vmin.xlane.f32.xlu0 %v1654
        %v1656 = vpop.xlane.xlu0 %1655
        %v1657 = vcvt.f32.s32 %v1656
        %v1658 = vcvt.f32.s32 %v1652
        %v1659 = vshll.u32 %v1658, 16
        %v1660 = vadd.s32 %v1659, %v1657
        %vm1661 = vcmp.eq.s32.totalorder %v432, %v1646
        %vm1662 = vcmp.eq.s32.totalorder %v432, %v1660
        %v1663 = vsel %vm1661, 1, 0
        %v1664 = vsel %vm1662, 1, 0
        %v1665 = vcvt.s32.f32 %v1663
        %v1666 = vcvt.s32.f32 %v1664
        %v1667 = vsel %vm1661, inf, %v1623
        %v1668 = vsel %vm1662, inf, %v1624
        %1669 = vmin.xlane.f32.xlu0 %v1667
        %v1670 = vpop.xlane.xlu0 %1669
        %1671 = vmin.xlane.f32.xlu0 %v1668
        %v1672 = vpop.xlane.xlu0 %1671
        %vm1673 = vcmp.eq.f32.partialorder %v1667, %v1670
        %vm1674 = vcmp.eq.f32.partialorder %v1668, %v1672
        %v1675 = vsel %vm1673, %v432, 128
        %v1676 = vsel %vm1674, %v432, 128
        %v1677 = vand.u32 %v1675, 65535
        %v1678 = vshra.s32 %v1675, 16
        %v1679 = vcvt.s32.f32 %v1677
        %v1680 = vcvt.s32.f32 %v1678
        %1681 = vmin.xlane.f32.xlu0 %v1680
        %v1682 = vpop.xlane.xlu0 %1681
        %vm1683 = vcmp.eq.f32.partialorder %v1680, %v1682
        %v1684 = vsel %vm1683, %v1679, inf
        %1685 = vmin.xlane.f32.xlu0 %v1684
        %v1686 = vpop.xlane.xlu0 %1685
        %v1687 = vcvt.f32.s32 %v1686
        %v1688 = vcvt.f32.s32 %v1682
        %v1689 = vshll.u32 %v1688, 16
        %v1690 = vadd.s32 %v1689, %v1687
        %v1691 = vand.u32 %v1676, 65535
        %v1692 = vshra.s32 %v1676, 16
        %v1693 = vcvt.s32.f32 %v1691
        %v1694 = vcvt.s32.f32 %v1692
        %1695 = vmin.xlane.f32.xlu0 %v1694
        %v1696 = vpop.xlane.xlu0 %1695
        %vm1697 = vcmp.eq.f32.partialorder %v1694, %v1696
        %v1698 = vsel %vm1697, %v1693, inf
        %1699 = vmin.xlane.f32.xlu0 %v1698
        %v1700 = vpop.xlane.xlu0 %1699
        %v1701 = vcvt.f32.s32 %v1700
        %v1702 = vcvt.f32.s32 %v1696
        %v1703 = vshll.u32 %v1702, 16
        %v1704 = vadd.s32 %v1703, %v1701
        %vm1705 = vcmp.eq.s32.totalorder %v432, %v1690
        %vm1706 = vcmp.eq.s32.totalorder %v432, %v1704
        %v1707 = vsel %vm1705, 1, 0
        %v1708 = vsel %vm1706, 1, 0
        %v1709 = vcvt.s32.f32 %v1707
        %v1710 = vcvt.s32.f32 %v1708
        %v1713 = vrot.slane %v1401, 1
        %v1714 = vrot.slane %v1401, 2
        %v1715 = vrot.slane %v1401, 3
        %v1716 = vrot.slane %v1401, 4
        %v1717 = vrot.slane %v1401, 5
        %v1718 = vrot.slane %v1401, 6
        %v1719 = vrot.slane %v1401, 7
        %v1720 = vrot.slane %v1402, 1
        %v1721 = vrot.slane %v1402, 2
        %v1722 = vrot.slane %v1402, 3
        %v1723 = vrot.slane %v1402, 4
        %v1724 = vrot.slane %v1402, 5
        %v1725 = vrot.slane %v1402, 6
        %v1726 = vrot.slane %v1402, 7
        %v1743 = vrot.slane %v1445, 1
        %v1744 = vrot.slane %v1445, 2
        %v1745 = vrot.slane %v1445, 3
        %v1746 = vrot.slane %v1445, 4
        %v1747 = vrot.slane %v1445, 5
        %v1748 = vrot.slane %v1445, 6
        %v1749 = vrot.slane %v1445, 7
        %v1750 = vrot.slane %v1446, 1
        %v1751 = vrot.slane %v1446, 2
        %v1752 = vrot.slane %v1446, 3
        %v1753 = vrot.slane %v1446, 4
        %v1754 = vrot.slane %v1446, 5
        %v1755 = vrot.slane %v1446, 6
        %v1756 = vrot.slane %v1446, 7
        %v1759 = vrot.slane %v1489, 1
        %v1760 = vrot.slane %v1489, 2
        %v1761 = vrot.slane %v1489, 3
        %v1762 = vrot.slane %v1489, 4
        %v1763 = vrot.slane %v1489, 5
        %v1764 = vrot.slane %v1489, 6
        %v1765 = vrot.slane %v1489, 7
        %v1766 = vrot.slane %v1490, 1
        %v1767 = vrot.slane %v1490, 2
        %v1768 = vrot.slane %v1490, 3
        %v1769 = vrot.slane %v1490, 4
        %v1770 = vrot.slane %v1490, 5
        %v1771 = vrot.slane %v1490, 6
        %v1772 = vrot.slane %v1490, 7
        %v1775 = vrot.slane %v1533, 1
        %v1776 = vrot.slane %v1533, 2
        %v1777 = vrot.slane %v1533, 3
        %v1778 = vrot.slane %v1533, 4
        %v1779 = vrot.slane %v1533, 5
        %v1780 = vrot.slane %v1533, 6
        %v1781 = vrot.slane %v1533, 7
        %v1782 = vrot.slane %v1534, 1
        %v1783 = vrot.slane %v1534, 2
        %v1784 = vrot.slane %v1534, 3
        %v1785 = vrot.slane %v1534, 4
        %v1786 = vrot.slane %v1534, 5
        %v1787 = vrot.slane %v1534, 6
        %v1788 = vrot.slane %v1534, 7
        %v1791 = vrot.slane %v1577, 1
        %v1792 = vrot.slane %v1577, 2
        %v1793 = vrot.slane %v1577, 3
        %v1794 = vrot.slane %v1577, 4
        %v1795 = vrot.slane %v1577, 5
        %v1796 = vrot.slane %v1577, 6
        %v1797 = vrot.slane %v1577, 7
        %v1798 = vrot.slane %v1578, 1
        %v1799 = vrot.slane %v1578, 2
        %v1800 = vrot.slane %v1578, 3
        %v1801 = vrot.slane %v1578, 4
        %v1802 = vrot.slane %v1578, 5
        %v1803 = vrot.slane %v1578, 6
        %v1804 = vrot.slane %v1578, 7
        %v1807 = vrot.slane %v1621, 1
        %v1808 = vrot.slane %v1621, 2
        %v1809 = vrot.slane %v1621, 3
        %v1810 = vrot.slane %v1621, 4
        %v1811 = vrot.slane %v1621, 5
        %v1812 = vrot.slane %v1621, 6
        %v1813 = vrot.slane %v1621, 7
        %v1814 = vrot.slane %v1622, 1
        %v1815 = vrot.slane %v1622, 2
        %v1816 = vrot.slane %v1622, 3
        %v1817 = vrot.slane %v1622, 4
        %v1818 = vrot.slane %v1622, 5
        %v1819 = vrot.slane %v1622, 6
        %v1820 = vrot.slane %v1622, 7
        %v1823 = vrot.slane %v1665, 1
        %v1824 = vrot.slane %v1665, 2
        %v1825 = vrot.slane %v1665, 3
        %v1826 = vrot.slane %v1665, 4
        %v1827 = vrot.slane %v1665, 5
        %v1828 = vrot.slane %v1665, 6
        %v1829 = vrot.slane %v1665, 7
        %v1830 = vrot.slane %v1666, 1
        %v1831 = vrot.slane %v1666, 2
        %v1832 = vrot.slane %v1666, 3
        %v1833 = vrot.slane %v1666, 4
        %v1834 = vrot.slane %v1666, 5
        %v1835 = vrot.slane %v1666, 6
        %v1836 = vrot.slane %v1666, 7
        %v1839 = vrot.slane %v1709, 1
        %v1840 = vrot.slane %v1709, 2
        %v1841 = vrot.slane %v1709, 3
        %v1842 = vrot.slane %v1709, 4
        %v1843 = vrot.slane %v1709, 5
        %v1844 = vrot.slane %v1709, 6
        %v1845 = vrot.slane %v1709, 7
        %v1846 = vrot.slane %v1710, 1
        %v1847 = vrot.slane %v1710, 2
        %v1848 = vrot.slane %v1710, 3
        %v1849 = vrot.slane %v1710, 4
        %v1850 = vrot.slane %v1710, 5
        %v1851 = vrot.slane %v1710, 6
        %v1852 = vrot.slane %v1710, 7
        %v1853 = vperm.slane %v1445, 0
        %v1854 = vperm.slane %v1743, 0
        %v1855 = vperm.slane %v1744, 0
        %v1856 = vperm.slane %v1745, 0
        %v1857 = vperm.slane %v1746, 0
        %v1858 = vperm.slane %v1747, 0
        %v1859 = vperm.slane %v1748, 0
        %v1860 = vperm.slane %v1749, 0
        %v1861 = vperm.slane %v1446, 0
        %v1862 = vperm.slane %v1750, 0
        %v1863 = vperm.slane %v1751, 0
        %v1864 = vperm.slane %v1752, 0
        %v1865 = vperm.slane %v1753, 0
        %v1866 = vperm.slane %v1754, 0
        %v1867 = vperm.slane %v1755, 0
        %v1868 = vperm.slane %v1756, 0
        %v1885 = vperm.slane %v1489, 0
        %v1886 = vperm.slane %v1759, 0
        %v1887 = vperm.slane %v1760, 0
        %v1888 = vperm.slane %v1761, 0
        %v1889 = vperm.slane %v1762, 0
        %v1890 = vperm.slane %v1763, 0
        %v1891 = vperm.slane %v1764, 0
        %v1892 = vperm.slane %v1765, 0
        %v1893 = vperm.slane %v1490, 0
        %v1894 = vperm.slane %v1766, 0
        %v1895 = vperm.slane %v1767, 0
        %v1896 = vperm.slane %v1768, 0
        %v1897 = vperm.slane %v1769, 0
        %v1898 = vperm.slane %v1770, 0
        %v1899 = vperm.slane %v1771, 0
        %v1900 = vperm.slane %v1772, 0
        %v1917 = vperm.slane %v1533, 0
        %v1918 = vperm.slane %v1775, 0
        %v1919 = vperm.slane %v1776, 0
        %v1920 = vperm.slane %v1777, 0
        %v1921 = vperm.slane %v1778, 0
        %v1922 = vperm.slane %v1779, 0
        %v1923 = vperm.slane %v1780, 0
        %v1924 = vperm.slane %v1781, 0
        %v1925 = vperm.slane %v1534, 0
        %v1926 = vperm.slane %v1782, 0
        %v1927 = vperm.slane %v1783, 0
        %v1928 = vperm.slane %v1784, 0
        %v1929 = vperm.slane %v1785, 0
        %v1930 = vperm.slane %v1786, 0
        %v1931 = vperm.slane %v1787, 0
        %v1932 = vperm.slane %v1788, 0
        %v1949 = vperm.slane %v1577, 0
        %v1950 = vperm.slane %v1791, 0
        %v1951 = vperm.slane %v1792, 0
        %v1952 = vperm.slane %v1793, 0
        %v1953 = vperm.slane %v1794, 0
        %v1954 = vperm.slane %v1795, 0
        %v1955 = vperm.slane %v1796, 0
        %v1956 = vperm.slane %v1797, 0
        %v1957 = vperm.slane %v1578, 0
        %v1958 = vperm.slane %v1798, 0
        %v1959 = vperm.slane %v1799, 0
        %v1960 = vperm.slane %v1800, 0
        %v1961 = vperm.slane %v1801, 0
        %v1962 = vperm.slane %v1802, 0
        %v1963 = vperm.slane %v1803, 0
        %v1964 = vperm.slane %v1804, 0
        %v1981 = vperm.slane %v1621, 0
        %v1982 = vperm.slane %v1807, 0
        %v1983 = vperm.slane %v1808, 0
        %v1984 = vperm.slane %v1809, 0
        %v1985 = vperm.slane %v1810, 0
        %v1986 = vperm.slane %v1811, 0
        %v1987 = vperm.slane %v1812, 0
        %v1988 = vperm.slane %v1813, 0
        %v1989 = vperm.slane %v1622, 0
        %v1990 = vperm.slane %v1814, 0
        %v1991 = vperm.slane %v1815, 0
        %v1992 = vperm.slane %v1816, 0
        %v1993 = vperm.slane %v1817, 0
        %v1994 = vperm.slane %v1818, 0
        %v1995 = vperm.slane %v1819, 0
        %v1996 = vperm.slane %v1820, 0
        %v2013 = vperm.slane %v1665, 0
        %v2014 = vperm.slane %v1823, 0
        %v2015 = vperm.slane %v1824, 0
        %v2016 = vperm.slane %v1825, 0
        %v2017 = vperm.slane %v1826, 0
        %v2018 = vperm.slane %v1827, 0
        %v2019 = vperm.slane %v1828, 0
        %v2020 = vperm.slane %v1829, 0
        %v2021 = vperm.slane %v1666, 0
        %v2022 = vperm.slane %v1830, 0
        %v2023 = vperm.slane %v1831, 0
        %v2024 = vperm.slane %v1832, 0
        %v2025 = vperm.slane %v1833, 0
        %v2026 = vperm.slane %v1834, 0
        %v2027 = vperm.slane %v1835, 0
        %v2028 = vperm.slane %v1836, 0
        %v2045 = vperm.slane %v1709, 0
        %v2046 = vperm.slane %v1839, 0
        %v2047 = vperm.slane %v1840, 0
        %v2048 = vperm.slane %v1841, 0
        %v2049 = vperm.slane %v1842, 0
        %v2050 = vperm.slane %v1843, 0
        %v2051 = vperm.slane %v1844, 0
        %v2052 = vperm.slane %v1845, 0
        %v2053 = vperm.slane %v1710, 0
        %v2054 = vperm.slane %v1846, 0
        %v2055 = vperm.slane %v1847, 0
        %v2056 = vperm.slane %v1848, 0
        %v2057 = vperm.slane %v1849, 0
        %v2058 = vperm.slane %v1850, 0
        %v2059 = vperm.slane %v1851, 0
        %v2060 = vperm.slane %v1852, 0
        %vm2077 = vcmask 1040384
        %v2078 = vsel %vm2077, %v1401, %v1853
        %v2079 = vsel %vm2077, %v1713, %v1854
        %v2080 = vsel %vm2077, %v1714, %v1855
        %v2081 = vsel %vm2077, %v1715, %v1856
        %v2082 = vsel %vm2077, %v1716, %v1857
        %v2083 = vsel %vm2077, %v1717, %v1858
        %v2084 = vsel %vm2077, %v1718, %v1859
        %v2085 = vsel %vm2077, %v1719, %v1860
        %v2086 = vsel %vm2077, %v1402, %v1861
        %v2087 = vsel %vm2077, %v1720, %v1862
        %v2088 = vsel %vm2077, %v1721, %v1863
        %v2089 = vsel %vm2077, %v1722, %v1864
        %v2090 = vsel %vm2077, %v1723, %v1865
        %v2091 = vsel %vm2077, %v1724, %v1866
        %v2092 = vsel %vm2077, %v1725, %v1867
        %v2093 = vsel %vm2077, %v1726, %v1868
        %vm2094 = vcmask 1041408
        %v2095 = vsel %vm2094, %v2078, %v1885
        %v2096 = vsel %vm2094, %v2079, %v1886
        %v2097 = vsel %vm2094, %v2080, %v1887
        %v2098 = vsel %vm2094, %v2081, %v1888
        %v2099 = vsel %vm2094, %v2082, %v1889
        %v2100 = vsel %vm2094, %v2083, %v1890
        %v2101 = vsel %vm2094, %v2084, %v1891
        %v2102 = vsel %vm2094, %v2085, %v1892
        %v2103 = vsel %vm2094, %v2086, %v1893
        %v2104 = vsel %vm2094, %v2087, %v1894
        %v2105 = vsel %vm2094, %v2088, %v1895
        %v2106 = vsel %vm2094, %v2089, %v1896
        %v2107 = vsel %vm2094, %v2090, %v1897
        %v2108 = vsel %vm2094, %v2091, %v1898
        %v2109 = vsel %vm2094, %v2092, %v1899
        %v2110 = vsel %vm2094, %v2093, %v1900
        %vm2111 = vcmask 1042432
        %v2112 = vsel %vm2111, %v2095, %v1917
        %v2113 = vsel %vm2111, %v2096, %v1918
        %v2114 = vsel %vm2111, %v2097, %v1919
        %v2115 = vsel %vm2111, %v2098, %v1920
        %v2116 = vsel %vm2111, %v2099, %v1921
        %v2117 = vsel %vm2111, %v2100, %v1922
        %v2118 = vsel %vm2111, %v2101, %v1923
        %v2119 = vsel %vm2111, %v2102, %v1924
        %v2120 = vsel %vm2111, %v2103, %v1925
        %v2121 = vsel %vm2111, %v2104, %v1926
        %v2122 = vsel %vm2111, %v2105, %v1927
        %v2123 = vsel %vm2111, %v2106, %v1928
        %v2124 = vsel %vm2111, %v2107, %v1929
        %v2125 = vsel %vm2111, %v2108, %v1930
        %v2126 = vsel %vm2111, %v2109, %v1931
        %v2127 = vsel %vm2111, %v2110, %v1932
        %vm2128 = vcmask 1043456
        %v2129 = vsel %vm2128, %v2112, %v1949
        %v2130 = vsel %vm2128, %v2113, %v1950
        %v2131 = vsel %vm2128, %v2114, %v1951
        %v2132 = vsel %vm2128, %v2115, %v1952
        %v2133 = vsel %vm2128, %v2116, %v1953
        %v2134 = vsel %vm2128, %v2117, %v1954
        %v2135 = vsel %vm2128, %v2118, %v1955
        %v2136 = vsel %vm2128, %v2119, %v1956
        %v2137 = vsel %vm2128, %v2120, %v1957
        %v2138 = vsel %vm2128, %v2121, %v1958
        %v2139 = vsel %vm2128, %v2122, %v1959
        %v2140 = vsel %vm2128, %v2123, %v1960
        %v2141 = vsel %vm2128, %v2124, %v1961
        %v2142 = vsel %vm2128, %v2125, %v1962
        %v2143 = vsel %vm2128, %v2126, %v1963
        %v2144 = vsel %vm2128, %v2127, %v1964
        %vm2145 = vcmask 1044480
        %v2146 = vsel %vm2145, %v2129, %v1981
        %v2147 = vsel %vm2145, %v2130, %v1982
        %v2148 = vsel %vm2145, %v2131, %v1983
        %v2149 = vsel %vm2145, %v2132, %v1984
        %v2150 = vsel %vm2145, %v2133, %v1985
        %v2151 = vsel %vm2145, %v2134, %v1986
        %v2152 = vsel %vm2145, %v2135, %v1987
        %v2153 = vsel %vm2145, %v2136, %v1988
        %v2154 = vsel %vm2145, %v2137, %v1989
        %v2155 = vsel %vm2145, %v2138, %v1990
        %v2156 = vsel %vm2145, %v2139, %v1991
        %v2157 = vsel %vm2145, %v2140, %v1992
        %v2158 = vsel %vm2145, %v2141, %v1993
        %v2159 = vsel %vm2145, %v2142, %v1994
        %v2160 = vsel %vm2145, %v2143, %v1995
        %v2161 = vsel %vm2145, %v2144, %v1996
        %vm2162 = vcmask 1045504
        %v2163 = vsel %vm2162, %v2146, %v2013
        %v2164 = vsel %vm2162, %v2147, %v2014
        %v2165 = vsel %vm2162, %v2148, %v2015
        %v2166 = vsel %vm2162, %v2149, %v2016
        %v2167 = vsel %vm2162, %v2150, %v2017
        %v2168 = vsel %vm2162, %v2151, %v2018
        %v2169 = vsel %vm2162, %v2152, %v2019
        %v2170 = vsel %vm2162, %v2153, %v2020
        %v2171 = vsel %vm2162, %v2154, %v2021
        %v2172 = vsel %vm2162, %v2155, %v2022
        %v2173 = vsel %vm2162, %v2156, %v2023
        %v2174 = vsel %vm2162, %v2157, %v2024
        %v2175 = vsel %vm2162, %v2158, %v2025
        %v2176 = vsel %vm2162, %v2159, %v2026
        %v2177 = vsel %vm2162, %v2160, %v2027
        %v2178 = vsel %vm2162, %v2161, %v2028
        %vm2179 = vcmask 1046528
        %v2180 = vsel %vm2179, %v2163, %v2045
        %v2181 = vsel %vm2179, %v2164, %v2046
        %v2182 = vsel %vm2179, %v2165, %v2047
        %v2183 = vsel %vm2179, %v2166, %v2048
        %v2184 = vsel %vm2179, %v2167, %v2049
        %v2185 = vsel %vm2179, %v2168, %v2050
        %v2186 = vsel %vm2179, %v2169, %v2051
        %v2187 = vsel %vm2179, %v2170, %v2052
        %v2188 = vsel %vm2179, %v2171, %v2053
        %v2189 = vsel %vm2179, %v2172, %v2054
        %v2190 = vsel %vm2179, %v2173, %v2055
        %v2191 = vsel %vm2179, %v2174, %v2056
        %v2192 = vsel %vm2179, %v2175, %v2057
        %v2193 = vsel %vm2179, %v2176, %v2058
        %v2194 = vsel %vm2179, %v2177, %v2059
        %v2195 = vsel %vm2179, %v2178, %v2060
        %v2196 = vand.u32 %v909, 4294901760
        %2197 = vmatpush.msra.mxu0 %v2196
        %v2198 = vand.u32 %v908, 4294901760
        %2199 = vmatpush.msra.mxu0 %v2198
        %v2200 = vand.u32 %v907, 4294901760
        %2201 = vmatpush.msra.mxu0 %v2200
        %v2202 = vand.u32 %v906, 4294901760
        %2203 = vmatpush.msra.mxu0 %v2202
        %v2204 = vand.u32 %v905, 4294901760
        %2205 = vmatpush.msra.mxu0 %v2204
        %v2206 = vand.u32 %v904, 4294901760
        %2207 = vmatpush.msra.mxu0 %v2206
        %v2208 = vand.u32 %v903, 4294901760
        %2209 = vmatpush.msra.mxu0 %v2208
        %v2210 = vand.u32 %v902, 4294901760
        %2211 = vmatpush.msra.mxu0 %v2210
        %v2212 = vand.u32 %v901, 4294901760
        %2213 = vmatpush.msra.mxu0 %v2212
        %v2214 = vand.u32 %v900, 4294901760
        %2215 = vmatpush.msra.mxu0 %v2214
        %v2216 = vand.u32 %v899, 4294901760
        %2217 = vmatpush.msra.mxu0 %v2216
        %v2218 = vand.u32 %v898, 4294901760
        %2219 = vmatpush.msra.mxu0 %v2218
        %v2220 = vand.u32 %v897, 4294901760
        %2221 = vmatpush.msra.mxu0 %v2220
        %v2222 = vand.u32 %v896, 4294901760
        %2223 = vmatpush.msra.mxu0 %v2222
        %v2224 = vand.u32 %v895, 4294901760
        %2225 = vmatpush.msra.mxu0 %v2224
        %v2226 = vand.u32 %v894, 4294901760
        %2227 = vmatpush.msra.mxu0 %v2226
        %v2228 = vand.u32 %v2180, 4294901760
        %v2229 = vsub.f32 %v2180, %v2228
        %v2230 = vand.u32 %v2229, 4294901760
        %v2231 = vsub.f32 %v2229, %v2230
        %v2232 = vand.u32 %v2231, 4294901760
        %2233 = vmatmul.f32.gmra.mxu0 %v2232
        %v2234 = vpop.f32.mrf.mxu0
        %v2235 = vadd.f32 0.0, %v2234
        %v2236 = vand.u32 %v2181, 4294901760
        %v2237 = vsub.f32 %v2181, %v2236
        %v2238 = vand.u32 %v2237, 4294901760
        %v2239 = vsub.f32 %v2237, %v2238
        %v2240 = vand.u32 %v2239, 4294901760
        %2241 = vmatmul.f32.gmra.mxu0 %v2240
        %v2242 = vpop.f32.mrf.mxu0
        %v2243 = vadd.f32 0.0, %v2242
        %v2244 = vand.u32 %v2182, 4294901760
        %v2245 = vsub.f32 %v2182, %v2244
        %v2246 = vand.u32 %v2245, 4294901760
        %v2247 = vsub.f32 %v2245, %v2246
        %v2248 = vand.u32 %v2247, 4294901760
        %2249 = vmatmul.f32.gmra.mxu0 %v2248
        %v2250 = vpop.f32.mrf.mxu0
        %v2251 = vadd.f32 0.0, %v2250
        %v2252 = vand.u32 %v2183, 4294901760
        %v2253 = vsub.f32 %v2183, %v2252
        %v2254 = vand.u32 %v2253, 4294901760
        %v2255 = vsub.f32 %v2253, %v2254
        %v2256 = vand.u32 %v2255, 4294901760
        %2257 = vmatmul.f32.gmra.mxu0 %v2256
        %v2258 = vpop.f32.mrf.mxu0
        %v2259 = vadd.f32 0.0, %v2258
        %v2260 = vand.u32 %v2184, 4294901760
        %v2261 = vsub.f32 %v2184, %v2260
        %v2262 = vand.u32 %v2261, 4294901760
        %v2263 = vsub.f32 %v2261, %v2262
        %v2264 = vand.u32 %v2263, 4294901760
        %2265 = vmatmul.f32.gmra.mxu0 %v2264
        %v2266 = vpop.f32.mrf.mxu0
        %v2267 = vadd.f32 0.0, %v2266
        %v2268 = vand.u32 %v2185, 4294901760
        %v2269 = vsub.f32 %v2185, %v2268
        %v2270 = vand.u32 %v2269, 4294901760
        %v2271 = vsub.f32 %v2269, %v2270
        %v2272 = vand.u32 %v2271, 4294901760
        %2273 = vmatmul.f32.gmra.mxu0 %v2272
        %v2274 = vpop.f32.mrf.mxu0
        %v2275 = vadd.f32 0.0, %v2274
        %v2276 = vand.u32 %v2186, 4294901760
        %v2277 = vsub.f32 %v2186, %v2276
        %v2278 = vand.u32 %v2277, 4294901760
        %v2279 = vsub.f32 %v2277, %v2278
        %v2280 = vand.u32 %v2279, 4294901760
        %2281 = vmatmul.f32.gmra.mxu0 %v2280
        %v2282 = vpop.f32.mrf.mxu0
        %v2283 = vadd.f32 0.0, %v2282
        %v2284 = vand.u32 %v2187, 4294901760
        %v2285 = vsub.f32 %v2187, %v2284
        %v2286 = vand.u32 %v2285, 4294901760
        %v2287 = vsub.f32 %v2285, %v2286
        %v2288 = vand.u32 %v2287, 4294901760
        %2289 = vmatmul.f32.gmra.mxu0 %v2288
        %v2290 = vpop.f32.mrf.mxu0
        %v2291 = vadd.f32 0.0, %v2290
        %v2292 = vand.u32 %v2188, 4294901760
        %v2293 = vsub.f32 %v2188, %v2292
        %v2294 = vand.u32 %v2293, 4294901760
        %v2295 = vsub.f32 %v2293, %v2294
        %v2296 = vand.u32 %v2295, 4294901760
        %2297 = vmatmul.f32.gmra.mxu0 %v2296
        %v2298 = vpop.f32.mrf.mxu0
        %v2299 = vadd.f32 0.0, %v2298
        %v2300 = vand.u32 %v2189, 4294901760
        %v2301 = vsub.f32 %v2189, %v2300
        %v2302 = vand.u32 %v2301, 4294901760
        %v2303 = vsub.f32 %v2301, %v2302
        %v2304 = vand.u32 %v2303, 4294901760
        %2305 = vmatmul.f32.gmra.mxu0 %v2304
        %v2306 = vpop.f32.mrf.mxu0
        %v2307 = vadd.f32 0.0, %v2306
        %v2308 = vand.u32 %v2190, 4294901760
        %v2309 = vsub.f32 %v2190, %v2308
        %v2310 = vand.u32 %v2309, 4294901760
        %v2311 = vsub.f32 %v2309, %v2310
        %v2312 = vand.u32 %v2311, 4294901760
        %2313 = vmatmul.f32.gmra.mxu0 %v2312
        %v2314 = vpop.f32.mrf.mxu0
        %v2315 = vadd.f32 0.0, %v2314
        %v2316 = vand.u32 %v2191, 4294901760
        %v2317 = vsub.f32 %v2191, %v2316
        %v2318 = vand.u32 %v2317, 4294901760
        %v2319 = vsub.f32 %v2317, %v2318
        %v2320 = vand.u32 %v2319, 4294901760
        %2321 = vmatmul.f32.gmra.mxu0 %v2320
        %v2322 = vpop.f32.mrf.mxu0
        %v2323 = vadd.f32 0.0, %v2322
        %v2324 = vand.u32 %v2192, 4294901760
        %v2325 = vsub.f32 %v2192, %v2324
        %v2326 = vand.u32 %v2325, 4294901760
        %v2327 = vsub.f32 %v2325, %v2326
        %v2328 = vand.u32 %v2327, 4294901760
        %2329 = vmatmul.f32.gmra.mxu0 %v2328
        %v2330 = vpop.f32.mrf.mxu0
        %v2331 = vadd.f32 0.0, %v2330
        %v2332 = vand.u32 %v2193, 4294901760
        %v2333 = vsub.f32 %v2193, %v2332
        %v2334 = vand.u32 %v2333, 4294901760
        %v2335 = vsub.f32 %v2333, %v2334
        %v2336 = vand.u32 %v2335, 4294901760
        %2337 = vmatmul.f32.gmra.mxu0 %v2336
        %v2338 = vpop.f32.mrf.mxu0
        %v2339 = vadd.f32 0.0, %v2338
        %v2340 = vand.u32 %v2194, 4294901760
        %v2341 = vsub.f32 %v2194, %v2340
        %v2342 = vand.u32 %v2341, 4294901760
        %v2343 = vsub.f32 %v2341, %v2342
        %v2344 = vand.u32 %v2343, 4294901760
        %2345 = vmatmul.f32.gmra.mxu0 %v2344
        %v2346 = vpop.f32.mrf.mxu0
        %v2347 = vadd.f32 0.0, %v2346
        %v2348 = vand.u32 %v2195, 4294901760
        %v2349 = vsub.f32 %v2195, %v2348
        %v2350 = vand.u32 %v2349, 4294901760
        %v2351 = vsub.f32 %v2349, %v2350
        %v2352 = vand.u32 %v2351, 4294901760
        %2353 = vmatmul.f32.gmra.mxu0 %v2352
        %v2354 = vpop.f32.mrf.mxu0
        %v2355 = vadd.f32 0.0, %v2354
        %2356 = vdwg.mxu0
        %v2357 = vand.u32 %v909, 4294901760
        %v2358 = vsub.f32 %v909, %v2357
        %v2359 = vand.u32 %v2358, 4294901760
        %v2360 = vsub.f32 %v2358, %v2359
        %v2361 = vand.u32 %v2360, 4294901760
        %2362 = vmatpush.msra.mxu0 %v2361
        %v2363 = vand.u32 %v908, 4294901760
        %v2364 = vsub.f32 %v908, %v2363
        %v2365 = vand.u32 %v2364, 4294901760
        %v2366 = vsub.f32 %v2364, %v2365
        %v2367 = vand.u32 %v2366, 4294901760
        %2368 = vmatpush.msra.mxu0 %v2367
        %v2369 = vand.u32 %v907, 4294901760
        %v2370 = vsub.f32 %v907, %v2369
        %v2371 = vand.u32 %v2370, 4294901760
        %v2372 = vsub.f32 %v2370, %v2371
        %v2373 = vand.u32 %v2372, 4294901760
        %2374 = vmatpush.msra.mxu0 %v2373
        %v2375 = vand.u32 %v906, 4294901760
        %v2376 = vsub.f32 %v906, %v2375
        %v2377 = vand.u32 %v2376, 4294901760
        %v2378 = vsub.f32 %v2376, %v2377
        %v2379 = vand.u32 %v2378, 4294901760
        %2380 = vmatpush.msra.mxu0 %v2379
        %v2381 = vand.u32 %v905, 4294901760
        %v2382 = vsub.f32 %v905, %v2381
        %v2383 = vand.u32 %v2382, 4294901760
        %v2384 = vsub.f32 %v2382, %v2383
        %v2385 = vand.u32 %v2384, 4294901760
        %2386 = vmatpush.msra.mxu0 %v2385
        %v2387 = vand.u32 %v904, 4294901760
        %v2388 = vsub.f32 %v904, %v2387
        %v2389 = vand.u32 %v2388, 4294901760
        %v2390 = vsub.f32 %v2388, %v2389
        %v2391 = vand.u32 %v2390, 4294901760
        %2392 = vmatpush.msra.mxu0 %v2391
        %v2393 = vand.u32 %v903, 4294901760
        %v2394 = vsub.f32 %v903, %v2393
        %v2395 = vand.u32 %v2394, 4294901760
        %v2396 = vsub.f32 %v2394, %v2395
        %v2397 = vand.u32 %v2396, 4294901760
        %2398 = vmatpush.msra.mxu0 %v2397
        %v2399 = vand.u32 %v902, 4294901760
        %v2400 = vsub.f32 %v902, %v2399
        %v2401 = vand.u32 %v2400, 4294901760
        %v2402 = vsub.f32 %v2400, %v2401
        %v2403 = vand.u32 %v2402, 4294901760
        %2404 = vmatpush.msra.mxu0 %v2403
        %v2405 = vand.u32 %v901, 4294901760
        %v2406 = vsub.f32 %v901, %v2405
        %v2407 = vand.u32 %v2406, 4294901760
        %v2408 = vsub.f32 %v2406, %v2407
        %v2409 = vand.u32 %v2408, 4294901760
        %2410 = vmatpush.msra.mxu0 %v2409
        %v2411 = vand.u32 %v900, 4294901760
        %v2412 = vsub.f32 %v900, %v2411
        %v2413 = vand.u32 %v2412, 4294901760
        %v2414 = vsub.f32 %v2412, %v2413
        %v2415 = vand.u32 %v2414, 4294901760
        %2416 = vmatpush.msra.mxu0 %v2415
        %v2417 = vand.u32 %v899, 4294901760
        %v2418 = vsub.f32 %v899, %v2417
        %v2419 = vand.u32 %v2418, 4294901760
        %v2420 = vsub.f32 %v2418, %v2419
        %v2421 = vand.u32 %v2420, 4294901760
        %2422 = vmatpush.msra.mxu0 %v2421
        %v2423 = vand.u32 %v898, 4294901760
        %v2424 = vsub.f32 %v898, %v2423
        %v2425 = vand.u32 %v2424, 4294901760
        %v2426 = vsub.f32 %v2424, %v2425
        %v2427 = vand.u32 %v2426, 4294901760
        %2428 = vmatpush.msra.mxu0 %v2427
        %v2429 = vand.u32 %v897, 4294901760
        %v2430 = vsub.f32 %v897, %v2429
        %v2431 = vand.u32 %v2430, 4294901760
        %v2432 = vsub.f32 %v2430, %v2431
        %v2433 = vand.u32 %v2432, 4294901760
        %2434 = vmatpush.msra.mxu0 %v2433
        %v2435 = vand.u32 %v896, 4294901760
        %v2436 = vsub.f32 %v896, %v2435
        %v2437 = vand.u32 %v2436, 4294901760
        %v2438 = vsub.f32 %v2436, %v2437
        %v2439 = vand.u32 %v2438, 4294901760
        %2440 = vmatpush.msra.mxu0 %v2439
        %v2441 = vand.u32 %v895, 4294901760
        %v2442 = vsub.f32 %v895, %v2441
        %v2443 = vand.u32 %v2442, 4294901760
        %v2444 = vsub.f32 %v2442, %v2443
        %v2445 = vand.u32 %v2444, 4294901760
        %2446 = vmatpush.msra.mxu0 %v2445
        %v2447 = vand.u32 %v894, 4294901760
        %v2448 = vsub.f32 %v894, %v2447
        %v2449 = vand.u32 %v2448, 4294901760
        %v2450 = vsub.f32 %v2448, %v2449
        %v2451 = vand.u32 %v2450, 4294901760
        %2452 = vmatpush.msra.mxu0 %v2451
        %v2453 = vand.u32 %v2180, 4294901760
        %2454 = vmatmul.f32.gmra.mxu0 %v2453
        %v2455 = vpop.f32.mrf.mxu0
        %v2456 = vadd.f32 %v2235, %v2455
        %v2457 = vand.u32 %v2181, 4294901760
        %2458 = vmatmul.f32.gmra.mxu0 %v2457
        %v2459 = vpop.f32.mrf.mxu0
        %v2460 = vadd.f32 %v2243, %v2459
        %v2461 = vand.u32 %v2182, 4294901760
        %2462 = vmatmul.f32.gmra.mxu0 %v2461
        %v2463 = vpop.f32.mrf.mxu0
        %v2464 = vadd.f32 %v2251, %v2463
        %v2465 = vand.u32 %v2183, 4294901760
        %2466 = vmatmul.f32.gmra.mxu0 %v2465
        %v2467 = vpop.f32.mrf.mxu0
        %v2468 = vadd.f32 %v2259, %v2467
        %v2469 = vand.u32 %v2184, 4294901760
        %2470 = vmatmul.f32.gmra.mxu0 %v2469
        %v2471 = vpop.f32.mrf.mxu0
        %v2472 = vadd.f32 %v2267, %v2471
        %v2473 = vand.u32 %v2185, 4294901760
        %2474 = vmatmul.f32.gmra.mxu0 %v2473
        %v2475 = vpop.f32.mrf.mxu0
        %v2476 = vadd.f32 %v2275, %v2475
        %v2477 = vand.u32 %v2186, 4294901760
        %2478 = vmatmul.f32.gmra.mxu0 %v2477
        %v2479 = vpop.f32.mrf.mxu0
        %v2480 = vadd.f32 %v2283, %v2479
        %v2481 = vand.u32 %v2187, 4294901760
        %2482 = vmatmul.f32.gmra.mxu0 %v2481
        %v2483 = vpop.f32.mrf.mxu0
        %v2484 = vadd.f32 %v2291, %v2483
        %v2485 = vand.u32 %v2188, 4294901760
        %2486 = vmatmul.f32.gmra.mxu0 %v2485
        %v2487 = vpop.f32.mrf.mxu0
        %v2488 = vadd.f32 %v2299, %v2487
        %v2489 = vand.u32 %v2189, 4294901760
        %2490 = vmatmul.f32.gmra.mxu0 %v2489
        %v2491 = vpop.f32.mrf.mxu0
        %v2492 = vadd.f32 %v2307, %v2491
        %v2493 = vand.u32 %v2190, 4294901760
        %2494 = vmatmul.f32.gmra.mxu0 %v2493
        %v2495 = vpop.f32.mrf.mxu0
        %v2496 = vadd.f32 %v2315, %v2495
        %v2497 = vand.u32 %v2191, 4294901760
        %2498 = vmatmul.f32.gmra.mxu0 %v2497
        %v2499 = vpop.f32.mrf.mxu0
        %v2500 = vadd.f32 %v2323, %v2499
        %v2501 = vand.u32 %v2192, 4294901760
        %2502 = vmatmul.f32.gmra.mxu0 %v2501
        %v2503 = vpop.f32.mrf.mxu0
        %v2504 = vadd.f32 %v2331, %v2503
        %v2505 = vand.u32 %v2193, 4294901760
        %2506 = vmatmul.f32.gmra.mxu0 %v2505
        %v2507 = vpop.f32.mrf.mxu0
        %v2508 = vadd.f32 %v2339, %v2507
        %v2509 = vand.u32 %v2194, 4294901760
        %2510 = vmatmul.f32.gmra.mxu0 %v2509
        %v2511 = vpop.f32.mrf.mxu0
        %v2512 = vadd.f32 %v2347, %v2511
        %v2513 = vand.u32 %v2195, 4294901760
        %2514 = vmatmul.f32.gmra.mxu0 %v2513
        %v2515 = vpop.f32.mrf.mxu0
        %v2516 = vadd.f32 %v2355, %v2515
        %2517 = vdwg.mxu0
        %v2518 = vand.u32 %v909, 4294901760
        %v2519 = vsub.f32 %v909, %v2518
        %2520 = vmatpush.msra.mxu0 %v2519
        %v2521 = vand.u32 %v908, 4294901760
        %v2522 = vsub.f32 %v908, %v2521
        %2523 = vmatpush.msra.mxu0 %v2522
        %v2524 = vand.u32 %v907, 4294901760
        %v2525 = vsub.f32 %v907, %v2524
        %2526 = vmatpush.msra.mxu0 %v2525
        %v2527 = vand.u32 %v906, 4294901760
        %v2528 = vsub.f32 %v906, %v2527
        %2529 = vmatpush.msra.mxu0 %v2528
        %v2530 = vand.u32 %v905, 4294901760
        %v2531 = vsub.f32 %v905, %v2530
        %2532 = vmatpush.msra.mxu0 %v2531
        %v2533 = vand.u32 %v904, 4294901760
        %v2534 = vsub.f32 %v904, %v2533
        %2535 = vmatpush.msra.mxu0 %v2534
        %v2536 = vand.u32 %v903, 4294901760
        %v2537 = vsub.f32 %v903, %v2536
        %2538 = vmatpush.msra.mxu0 %v2537
        %v2539 = vand.u32 %v902, 4294901760
        %v2540 = vsub.f32 %v902, %v2539
        %2541 = vmatpush.msra.mxu0 %v2540
        %v2542 = vand.u32 %v901, 4294901760
        %v2543 = vsub.f32 %v901, %v2542
        %2544 = vmatpush.msra.mxu0 %v2543
        %v2545 = vand.u32 %v900, 4294901760
        %v2546 = vsub.f32 %v900, %v2545
        %2547 = vmatpush.msra.mxu0 %v2546
        %v2548 = vand.u32 %v899, 4294901760
        %v2549 = vsub.f32 %v899, %v2548
        %2550 = vmatpush.msra.mxu0 %v2549
        %v2551 = vand.u32 %v898, 4294901760
        %v2552 = vsub.f32 %v898, %v2551
        %2553 = vmatpush.msra.mxu0 %v2552
        %v2554 = vand.u32 %v897, 4294901760
        %v2555 = vsub.f32 %v897, %v2554
        %2556 = vmatpush.msra.mxu0 %v2555
        %v2557 = vand.u32 %v896, 4294901760
        %v2558 = vsub.f32 %v896, %v2557
        %2559 = vmatpush.msra.mxu0 %v2558
        %v2560 = vand.u32 %v895, 4294901760
        %v2561 = vsub.f32 %v895, %v2560
        %2562 = vmatpush.msra.mxu0 %v2561
        %v2563 = vand.u32 %v894, 4294901760
        %v2564 = vsub.f32 %v894, %v2563
        %2565 = vmatpush.msra.mxu0 %v2564
        %v2566 = vand.u32 %v2180, 4294901760
        %v2567 = vsub.f32 %v2180, %v2566
        %2568 = vmatmul.f32.gmra.mxu0 %v2567
        %v2569 = vpop.f32.mrf.mxu0
        %v2570 = vadd.f32 %v2456, %v2569
        %v2571 = vand.u32 %v2181, 4294901760
        %v2572 = vsub.f32 %v2181, %v2571
        %2573 = vmatmul.f32.gmra.mxu0 %v2572
        %v2574 = vpop.f32.mrf.mxu0
        %v2575 = vadd.f32 %v2460, %v2574
        %v2576 = vand.u32 %v2182, 4294901760
        %v2577 = vsub.f32 %v2182, %v2576
        %2578 = vmatmul.f32.gmra.mxu0 %v2577
        %v2579 = vpop.f32.mrf.mxu0
        %v2580 = vadd.f32 %v2464, %v2579
        %v2581 = vand.u32 %v2183, 4294901760
        %v2582 = vsub.f32 %v2183, %v2581
        %2583 = vmatmul.f32.gmra.mxu0 %v2582
        %v2584 = vpop.f32.mrf.mxu0
        %v2585 = vadd.f32 %v2468, %v2584
        %v2586 = vand.u32 %v2184, 4294901760
        %v2587 = vsub.f32 %v2184, %v2586
        %2588 = vmatmul.f32.gmra.mxu0 %v2587
        %v2589 = vpop.f32.mrf.mxu0
        %v2590 = vadd.f32 %v2472, %v2589
        %v2591 = vand.u32 %v2185, 4294901760
        %v2592 = vsub.f32 %v2185, %v2591
        %2593 = vmatmul.f32.gmra.mxu0 %v2592
        %v2594 = vpop.f32.mrf.mxu0
        %v2595 = vadd.f32 %v2476, %v2594
        %v2596 = vand.u32 %v2186, 4294901760
        %v2597 = vsub.f32 %v2186, %v2596
        %2598 = vmatmul.f32.gmra.mxu0 %v2597
        %v2599 = vpop.f32.mrf.mxu0
        %v2600 = vadd.f32 %v2480, %v2599
        %v2601 = vand.u32 %v2187, 4294901760
        %v2602 = vsub.f32 %v2187, %v2601
        %2603 = vmatmul.f32.gmra.mxu0 %v2602
        %v2604 = vpop.f32.mrf.mxu0
        %v2605 = vadd.f32 %v2484, %v2604
        %v2606 = vand.u32 %v2188, 4294901760
        %v2607 = vsub.f32 %v2188, %v2606
        %2608 = vmatmul.f32.gmra.mxu0 %v2607
        %v2609 = vpop.f32.mrf.mxu0
        %v2610 = vadd.f32 %v2488, %v2609
        %v2611 = vand.u32 %v2189, 4294901760
        %v2612 = vsub.f32 %v2189, %v2611
        %2613 = vmatmul.f32.gmra.mxu0 %v2612
        %v2614 = vpop.f32.mrf.mxu0
        %v2615 = vadd.f32 %v2492, %v2614
        %v2616 = vand.u32 %v2190, 4294901760
        %v2617 = vsub.f32 %v2190, %v2616
        %2618 = vmatmul.f32.gmra.mxu0 %v2617
        %v2619 = vpop.f32.mrf.mxu0
        %v2620 = vadd.f32 %v2496, %v2619
        %v2621 = vand.u32 %v2191, 4294901760
        %v2622 = vsub.f32 %v2191, %v2621
        %2623 = vmatmul.f32.gmra.mxu0 %v2622
        %v2624 = vpop.f32.mrf.mxu0
        %v2625 = vadd.f32 %v2500, %v2624
        %v2626 = vand.u32 %v2192, 4294901760
        %v2627 = vsub.f32 %v2192, %v2626
        %2628 = vmatmul.f32.gmra.mxu0 %v2627
        %v2629 = vpop.f32.mrf.mxu0
        %v2630 = vadd.f32 %v2504, %v2629
        %v2631 = vand.u32 %v2193, 4294901760
        %v2632 = vsub.f32 %v2193, %v2631
        %2633 = vmatmul.f32.gmra.mxu0 %v2632
        %v2634 = vpop.f32.mrf.mxu0
        %v2635 = vadd.f32 %v2508, %v2634
        %v2636 = vand.u32 %v2194, 4294901760
        %v2637 = vsub.f32 %v2194, %v2636
        %2638 = vmatmul.f32.gmra.mxu0 %v2637
        %v2639 = vpop.f32.mrf.mxu0
        %v2640 = vadd.f32 %v2512, %v2639
        %v2641 = vand.u32 %v2195, 4294901760
        %v2642 = vsub.f32 %v2195, %v2641
        %2643 = vmatmul.f32.gmra.mxu0 %v2642
        %v2644 = vpop.f32.mrf.mxu0
        %v2645 = vadd.f32 %v2516, %v2644
        %2646 = vdwg.mxu0
        %v2647 = vand.u32 %v909, 4294901760
        %2648 = vmatpush.msra.mxu0 %v2647
        %v2649 = vand.u32 %v908, 4294901760
        %2650 = vmatpush.msra.mxu0 %v2649
        %v2651 = vand.u32 %v907, 4294901760
        %2652 = vmatpush.msra.mxu0 %v2651
        %v2653 = vand.u32 %v906, 4294901760
        %2654 = vmatpush.msra.mxu0 %v2653
        %v2655 = vand.u32 %v905, 4294901760
        %2656 = vmatpush.msra.mxu0 %v2655
        %v2657 = vand.u32 %v904, 4294901760
        %2658 = vmatpush.msra.mxu0 %v2657
        %v2659 = vand.u32 %v903, 4294901760
        %2660 = vmatpush.msra.mxu0 %v2659
        %v2661 = vand.u32 %v902, 4294901760
        %2662 = vmatpush.msra.mxu0 %v2661
        %v2663 = vand.u32 %v901, 4294901760
        %2664 = vmatpush.msra.mxu0 %v2663
        %v2665 = vand.u32 %v900, 4294901760
        %2666 = vmatpush.msra.mxu0 %v2665
        %v2667 = vand.u32 %v899, 4294901760
        %2668 = vmatpush.msra.mxu0 %v2667
        %v2669 = vand.u32 %v898, 4294901760
        %2670 = vmatpush.msra.mxu0 %v2669
        %v2671 = vand.u32 %v897, 4294901760
        %2672 = vmatpush.msra.mxu0 %v2671
        %v2673 = vand.u32 %v896, 4294901760
        %2674 = vmatpush.msra.mxu0 %v2673
        %v2675 = vand.u32 %v895, 4294901760
        %2676 = vmatpush.msra.mxu0 %v2675
        %v2677 = vand.u32 %v894, 4294901760
        %2678 = vmatpush.msra.mxu0 %v2677
        %v2679 = vand.u32 %v2180, 4294901760
        %v2680 = vsub.f32 %v2180, %v2679
        %v2681 = vand.u32 %v2680, 4294901760
        %2682 = vmatmul.f32.gmra.mxu0 %v2681
        %v2683 = vpop.f32.mrf.mxu0
        %v2684 = vadd.f32 %v2570, %v2683
        %v2685 = vand.u32 %v2181, 4294901760
        %v2686 = vsub.f32 %v2181, %v2685
        %v2687 = vand.u32 %v2686, 4294901760
        %2688 = vmatmul.f32.gmra.mxu0 %v2687
        %v2689 = vpop.f32.mrf.mxu0
        %v2690 = vadd.f32 %v2575, %v2689
        %v2691 = vand.u32 %v2182, 4294901760
        %v2692 = vsub.f32 %v2182, %v2691
        %v2693 = vand.u32 %v2692, 4294901760
        %2694 = vmatmul.f32.gmra.mxu0 %v2693
        %v2695 = vpop.f32.mrf.mxu0
        %v2696 = vadd.f32 %v2580, %v2695
        %v2697 = vand.u32 %v2183, 4294901760
        %v2698 = vsub.f32 %v2183, %v2697
        %v2699 = vand.u32 %v2698, 4294901760
        %2700 = vmatmul.f32.gmra.mxu0 %v2699
        %v2701 = vpop.f32.mrf.mxu0
        %v2702 = vadd.f32 %v2585, %v2701
        %v2703 = vand.u32 %v2184, 4294901760
        %v2704 = vsub.f32 %v2184, %v2703
        %v2705 = vand.u32 %v2704, 4294901760
        %2706 = vmatmul.f32.gmra.mxu0 %v2705
        %v2707 = vpop.f32.mrf.mxu0
        %v2708 = vadd.f32 %v2590, %v2707
        %v2709 = vand.u32 %v2185, 4294901760
        %v2710 = vsub.f32 %v2185, %v2709
        %v2711 = vand.u32 %v2710, 4294901760
        %2712 = vmatmul.f32.gmra.mxu0 %v2711
        %v2713 = vpop.f32.mrf.mxu0
        %v2714 = vadd.f32 %v2595, %v2713
        %v2715 = vand.u32 %v2186, 4294901760
        %v2716 = vsub.f32 %v2186, %v2715
        %v2717 = vand.u32 %v2716, 4294901760
        %2718 = vmatmul.f32.gmra.mxu0 %v2717
        %v2719 = vpop.f32.mrf.mxu0
        %v2720 = vadd.f32 %v2600, %v2719
        %v2721 = vand.u32 %v2187, 4294901760
        %v2722 = vsub.f32 %v2187, %v2721
        %v2723 = vand.u32 %v2722, 4294901760
        %2724 = vmatmul.f32.gmra.mxu0 %v2723
        %v2725 = vpop.f32.mrf.mxu0
        %v2726 = vadd.f32 %v2605, %v2725
        %v2727 = vand.u32 %v2188, 4294901760
        %v2728 = vsub.f32 %v2188, %v2727
        %v2729 = vand.u32 %v2728, 4294901760
        %2730 = vmatmul.f32.gmra.mxu0 %v2729
        %v2731 = vpop.f32.mrf.mxu0
        %v2732 = vadd.f32 %v2610, %v2731
        %v2733 = vand.u32 %v2189, 4294901760
        %v2734 = vsub.f32 %v2189, %v2733
        %v2735 = vand.u32 %v2734, 4294901760
        %2736 = vmatmul.f32.gmra.mxu0 %v2735
        %v2737 = vpop.f32.mrf.mxu0
        %v2738 = vadd.f32 %v2615, %v2737
        %v2739 = vand.u32 %v2190, 4294901760
        %v2740 = vsub.f32 %v2190, %v2739
        %v2741 = vand.u32 %v2740, 4294901760
        %2742 = vmatmul.f32.gmra.mxu0 %v2741
        %v2743 = vpop.f32.mrf.mxu0
        %v2744 = vadd.f32 %v2620, %v2743
        %v2745 = vand.u32 %v2191, 4294901760
        %v2746 = vsub.f32 %v2191, %v2745
        %v2747 = vand.u32 %v2746, 4294901760
        %2748 = vmatmul.f32.gmra.mxu0 %v2747
        %v2749 = vpop.f32.mrf.mxu0
        %v2750 = vadd.f32 %v2625, %v2749
        %v2751 = vand.u32 %v2192, 4294901760
        %v2752 = vsub.f32 %v2192, %v2751
        %v2753 = vand.u32 %v2752, 4294901760
        %2754 = vmatmul.f32.gmra.mxu0 %v2753
        %v2755 = vpop.f32.mrf.mxu0
        %v2756 = vadd.f32 %v2630, %v2755
        %v2757 = vand.u32 %v2193, 4294901760
        %v2758 = vsub.f32 %v2193, %v2757
        %v2759 = vand.u32 %v2758, 4294901760
        %2760 = vmatmul.f32.gmra.mxu0 %v2759
        %v2761 = vpop.f32.mrf.mxu0
        %v2762 = vadd.f32 %v2635, %v2761
        %v2763 = vand.u32 %v2194, 4294901760
        %v2764 = vsub.f32 %v2194, %v2763
        %v2765 = vand.u32 %v2764, 4294901760
        %2766 = vmatmul.f32.gmra.mxu0 %v2765
        %v2767 = vpop.f32.mrf.mxu0
        %v2768 = vadd.f32 %v2640, %v2767
        %v2769 = vand.u32 %v2195, 4294901760
        %v2770 = vsub.f32 %v2195, %v2769
        %v2771 = vand.u32 %v2770, 4294901760
        %2772 = vmatmul.f32.gmra.mxu0 %v2771
        %v2773 = vpop.f32.mrf.mxu0
        %v2774 = vadd.f32 %v2645, %v2773
        %2775 = vdwg.mxu0
        %v2776 = vand.u32 %v909, 4294901760
        %v2777 = vsub.f32 %v909, %v2776
        %v2778 = vand.u32 %v2777, 4294901760
        %2779 = vmatpush.msra.mxu0 %v2778
        %v2780 = vand.u32 %v908, 4294901760
        %v2781 = vsub.f32 %v908, %v2780
        %v2782 = vand.u32 %v2781, 4294901760
        %2783 = vmatpush.msra.mxu0 %v2782
        %v2784 = vand.u32 %v907, 4294901760
        %v2785 = vsub.f32 %v907, %v2784
        %v2786 = vand.u32 %v2785, 4294901760
        %2787 = vmatpush.msra.mxu0 %v2786
        %v2788 = vand.u32 %v906, 4294901760
        %v2789 = vsub.f32 %v906, %v2788
        %v2790 = vand.u32 %v2789, 4294901760
        %2791 = vmatpush.msra.mxu0 %v2790
        %v2792 = vand.u32 %v905, 4294901760
        %v2793 = vsub.f32 %v905, %v2792
        %v2794 = vand.u32 %v2793, 4294901760
        %2795 = vmatpush.msra.mxu0 %v2794
        %v2796 = vand.u32 %v904, 4294901760
        %v2797 = vsub.f32 %v904, %v2796
        %v2798 = vand.u32 %v2797, 4294901760
        %2799 = vmatpush.msra.mxu0 %v2798
        %v2800 = vand.u32 %v903, 4294901760
        %v2801 = vsub.f32 %v903, %v2800
        %v2802 = vand.u32 %v2801, 4294901760
        %2803 = vmatpush.msra.mxu0 %v2802
        %v2804 = vand.u32 %v902, 4294901760
        %v2805 = vsub.f32 %v902, %v2804
        %v2806 = vand.u32 %v2805, 4294901760
        %2807 = vmatpush.msra.mxu0 %v2806
        %v2808 = vand.u32 %v901, 4294901760
        %v2809 = vsub.f32 %v901, %v2808
        %v2810 = vand.u32 %v2809, 4294901760
        %2811 = vmatpush.msra.mxu0 %v2810
        %v2812 = vand.u32 %v900, 4294901760
        %v2813 = vsub.f32 %v900, %v2812
        %v2814 = vand.u32 %v2813, 4294901760
        %2815 = vmatpush.msra.mxu0 %v2814
        %v2816 = vand.u32 %v899, 4294901760
        %v2817 = vsub.f32 %v899, %v2816
        %v2818 = vand.u32 %v2817, 4294901760
        %2819 = vmatpush.msra.mxu0 %v2818
        %v2820 = vand.u32 %v898, 4294901760
        %v2821 = vsub.f32 %v898, %v2820
        %v2822 = vand.u32 %v2821, 4294901760
        %2823 = vmatpush.msra.mxu0 %v2822
        %v2824 = vand.u32 %v897, 4294901760
        %v2825 = vsub.f32 %v897, %v2824
        %v2826 = vand.u32 %v2825, 4294901760
        %2827 = vmatpush.msra.mxu0 %v2826
        %v2828 = vand.u32 %v896, 4294901760
        %v2829 = vsub.f32 %v896, %v2828
        %v2830 = vand.u32 %v2829, 4294901760
        %2831 = vmatpush.msra.mxu0 %v2830
        %v2832 = vand.u32 %v895, 4294901760
        %v2833 = vsub.f32 %v895, %v2832
        %v2834 = vand.u32 %v2833, 4294901760
        %2835 = vmatpush.msra.mxu0 %v2834
        %v2836 = vand.u32 %v894, 4294901760
        %v2837 = vsub.f32 %v894, %v2836
        %v2838 = vand.u32 %v2837, 4294901760
        %2839 = vmatpush.msra.mxu0 %v2838
        %v2840 = vand.u32 %v2180, 4294901760
        %2841 = vmatmul.f32.gmra.mxu0 %v2840
        %v2842 = vpop.f32.mrf.mxu0
        %v2843 = vadd.f32 %v2684, %v2842
        %v2844 = vand.u32 %v2181, 4294901760
        %2845 = vmatmul.f32.gmra.mxu0 %v2844
        %v2846 = vpop.f32.mrf.mxu0
        %v2847 = vadd.f32 %v2690, %v2846
        %v2848 = vand.u32 %v2182, 4294901760
        %2849 = vmatmul.f32.gmra.mxu0 %v2848
        %v2850 = vpop.f32.mrf.mxu0
        %v2851 = vadd.f32 %v2696, %v2850
        %v2852 = vand.u32 %v2183, 4294901760
        %2853 = vmatmul.f32.gmra.mxu0 %v2852
        %v2854 = vpop.f32.mrf.mxu0
        %v2855 = vadd.f32 %v2702, %v2854
        %v2856 = vand.u32 %v2184, 4294901760
        %2857 = vmatmul.f32.gmra.mxu0 %v2856
        %v2858 = vpop.f32.mrf.mxu0
        %v2859 = vadd.f32 %v2708, %v2858
        %v2860 = vand.u32 %v2185, 4294901760
        %2861 = vmatmul.f32.gmra.mxu0 %v2860
        %v2862 = vpop.f32.mrf.mxu0
        %v2863 = vadd.f32 %v2714, %v2862
        %v2864 = vand.u32 %v2186, 4294901760
        %2865 = vmatmul.f32.gmra.mxu0 %v2864
        %v2866 = vpop.f32.mrf.mxu0
        %v2867 = vadd.f32 %v2720, %v2866
        %v2868 = vand.u32 %v2187, 4294901760
        %2869 = vmatmul.f32.gmra.mxu0 %v2868
        %v2870 = vpop.f32.mrf.mxu0
        %v2871 = vadd.f32 %v2726, %v2870
        %v2872 = vand.u32 %v2188, 4294901760
        %2873 = vmatmul.f32.gmra.mxu0 %v2872
        %v2874 = vpop.f32.mrf.mxu0
        %v2875 = vadd.f32 %v2732, %v2874
        %v2876 = vand.u32 %v2189, 4294901760
        %2877 = vmatmul.f32.gmra.mxu0 %v2876
        %v2878 = vpop.f32.mrf.mxu0
        %v2879 = vadd.f32 %v2738, %v2878
        %v2880 = vand.u32 %v2190, 4294901760
        %2881 = vmatmul.f32.gmra.mxu0 %v2880
        %v2882 = vpop.f32.mrf.mxu0
        %v2883 = vadd.f32 %v2744, %v2882
        %v2884 = vand.u32 %v2191, 4294901760
        %2885 = vmatmul.f32.gmra.mxu0 %v2884
        %v2886 = vpop.f32.mrf.mxu0
        %v2887 = vadd.f32 %v2750, %v2886
        %v2888 = vand.u32 %v2192, 4294901760
        %2889 = vmatmul.f32.gmra.mxu0 %v2888
        %v2890 = vpop.f32.mrf.mxu0
        %v2891 = vadd.f32 %v2756, %v2890
        %v2892 = vand.u32 %v2193, 4294901760
        %2893 = vmatmul.f32.gmra.mxu0 %v2892
        %v2894 = vpop.f32.mrf.mxu0
        %v2895 = vadd.f32 %v2762, %v2894
        %v2896 = vand.u32 %v2194, 4294901760
        %2897 = vmatmul.f32.gmra.mxu0 %v2896
        %v2898 = vpop.f32.mrf.mxu0
        %v2899 = vadd.f32 %v2768, %v2898
        %v2900 = vand.u32 %v2195, 4294901760
        %2901 = vmatmul.f32.gmra.mxu0 %v2900
        %v2902 = vpop.f32.mrf.mxu0
        %v2903 = vadd.f32 %v2774, %v2902
        %2904 = vdwg.mxu0
        %v2905 = vand.u32 %v909, 4294901760
        %2906 = vmatpush.msra.mxu0 %v2905
        %v2907 = vand.u32 %v908, 4294901760
        %2908 = vmatpush.msra.mxu0 %v2907
        %v2909 = vand.u32 %v907, 4294901760
        %2910 = vmatpush.msra.mxu0 %v2909
        %v2911 = vand.u32 %v906, 4294901760
        %2912 = vmatpush.msra.mxu0 %v2911
        %v2913 = vand.u32 %v905, 4294901760
        %2914 = vmatpush.msra.mxu0 %v2913
        %v2915 = vand.u32 %v904, 4294901760
        %2916 = vmatpush.msra.mxu0 %v2915
        %v2917 = vand.u32 %v903, 4294901760
        %2918 = vmatpush.msra.mxu0 %v2917
        %v2919 = vand.u32 %v902, 4294901760
        %2920 = vmatpush.msra.mxu0 %v2919
        %v2921 = vand.u32 %v901, 4294901760
        %2922 = vmatpush.msra.mxu0 %v2921
        %v2923 = vand.u32 %v900, 4294901760
        %2924 = vmatpush.msra.mxu0 %v2923
        %v2925 = vand.u32 %v899, 4294901760
        %2926 = vmatpush.msra.mxu0 %v2925
        %v2927 = vand.u32 %v898, 4294901760
        %2928 = vmatpush.msra.mxu0 %v2927
        %v2929 = vand.u32 %v897, 4294901760
        %2930 = vmatpush.msra.mxu0 %v2929
        %v2931 = vand.u32 %v896, 4294901760
        %2932 = vmatpush.msra.mxu0 %v2931
        %v2933 = vand.u32 %v895, 4294901760
        %2934 = vmatpush.msra.mxu0 %v2933
        %v2935 = vand.u32 %v894, 4294901760
        %2936 = vmatpush.msra.mxu0 %v2935
        %v2937 = vand.u32 %v2180, 4294901760
        %2938 = vmatmul.f32.gmra.mxu0 %v2937
        %v2939 = vpop.f32.mrf.mxu0
        %v2940 = vadd.f32 %v2843, %v2939
        %v2941 = vand.u32 %v2181, 4294901760
        %2942 = vmatmul.f32.gmra.mxu0 %v2941
        %v2943 = vpop.f32.mrf.mxu0
        %v2944 = vadd.f32 %v2847, %v2943
        %v2945 = vand.u32 %v2182, 4294901760
        %2946 = vmatmul.f32.gmra.mxu0 %v2945
        %v2947 = vpop.f32.mrf.mxu0
        %v2948 = vadd.f32 %v2851, %v2947
        %v2949 = vand.u32 %v2183, 4294901760
        %2950 = vmatmul.f32.gmra.mxu0 %v2949
        %v2951 = vpop.f32.mrf.mxu0
        %v2952 = vadd.f32 %v2855, %v2951
        %v2953 = vand.u32 %v2184, 4294901760
        %2954 = vmatmul.f32.gmra.mxu0 %v2953
        %v2955 = vpop.f32.mrf.mxu0
        %v2956 = vadd.f32 %v2859, %v2955
        %v2957 = vand.u32 %v2185, 4294901760
        %2958 = vmatmul.f32.gmra.mxu0 %v2957
        %v2959 = vpop.f32.mrf.mxu0
        %v2960 = vadd.f32 %v2863, %v2959
        %v2961 = vand.u32 %v2186, 4294901760
        %2962 = vmatmul.f32.gmra.mxu0 %v2961
        %v2963 = vpop.f32.mrf.mxu0
        %v2964 = vadd.f32 %v2867, %v2963
        %v2965 = vand.u32 %v2187, 4294901760
        %2966 = vmatmul.f32.gmra.mxu0 %v2965
        %v2967 = vpop.f32.mrf.mxu0
        %v2968 = vadd.f32 %v2871, %v2967
        %v2969 = vand.u32 %v2188, 4294901760
        %2970 = vmatmul.f32.gmra.mxu0 %v2969
        %v2971 = vpop.f32.mrf.mxu0
        %v2972 = vadd.f32 %v2875, %v2971
        %v2973 = vand.u32 %v2189, 4294901760
        %2974 = vmatmul.f32.gmra.mxu0 %v2973
        %v2975 = vpop.f32.mrf.mxu0
        %v2976 = vadd.f32 %v2879, %v2975
        %v2977 = vand.u32 %v2190, 4294901760
        %2978 = vmatmul.f32.gmra.mxu0 %v2977
        %v2979 = vpop.f32.mrf.mxu0
        %v2980 = vadd.f32 %v2883, %v2979
        %v2981 = vand.u32 %v2191, 4294901760
        %2982 = vmatmul.f32.gmra.mxu0 %v2981
        %v2983 = vpop.f32.mrf.mxu0
        %v2984 = vadd.f32 %v2887, %v2983
        %v2985 = vand.u32 %v2192, 4294901760
        %2986 = vmatmul.f32.gmra.mxu0 %v2985
        %v2987 = vpop.f32.mrf.mxu0
        %v2988 = vadd.f32 %v2891, %v2987
        %v2989 = vand.u32 %v2193, 4294901760
        %2990 = vmatmul.f32.gmra.mxu0 %v2989
        %v2991 = vpop.f32.mrf.mxu0
        %v2992 = vadd.f32 %v2895, %v2991
        %v2993 = vand.u32 %v2194, 4294901760
        %2994 = vmatmul.f32.gmra.mxu0 %v2993
        %v2995 = vpop.f32.mrf.mxu0
        %v2996 = vadd.f32 %v2899, %v2995
        %v2997 = vand.u32 %v2195, 4294901760
        %2998 = vmatmul.f32.gmra.mxu0 %v2997
        %v2999 = vpop.f32.mrf.mxu0
        %v3000 = vadd.f32 %v2903, %v2999
        %3001 = vdwg.mxu0
        %v3002 = vand.u32 %v521, 4294901760
        %3003 = vmatpush.msra.mxu0 %v3002
        %v3004 = vand.u32 %v520, 4294901760
        %3005 = vmatpush.msra.mxu0 %v3004
        %v3006 = vand.u32 %v519, 4294901760
        %3007 = vmatpush.msra.mxu0 %v3006
        %v3008 = vand.u32 %v518, 4294901760
        %3009 = vmatpush.msra.mxu0 %v3008
        %v3010 = vand.u32 %v517, 4294901760
        %3011 = vmatpush.msra.mxu0 %v3010
        %v3012 = vand.u32 %v516, 4294901760
        %3013 = vmatpush.msra.mxu0 %v3012
        %v3014 = vand.u32 %v515, 4294901760
        %3015 = vmatpush.msra.mxu0 %v3014
        %v3016 = vand.u32 %v514, 4294901760
        %3017 = vmatpush.msra.mxu0 %v3016
        %v3018 = vand.u32 %v513, 4294901760
        %3019 = vmatpush.msra.mxu0 %v3018
        %v3020 = vand.u32 %v512, 4294901760
        %3021 = vmatpush.msra.mxu0 %v3020
        %v3022 = vand.u32 %v511, 4294901760
        %3023 = vmatpush.msra.mxu0 %v3022
        %v3024 = vand.u32 %v510, 4294901760
        %3025 = vmatpush.msra.mxu0 %v3024
        %v3026 = vand.u32 %v509, 4294901760
        %3027 = vmatpush.msra.mxu0 %v3026
        %v3028 = vand.u32 %v508, 4294901760
        %3029 = vmatpush.msra.mxu0 %v3028
        %v3030 = vand.u32 %v507, 4294901760
        %3031 = vmatpush.msra.mxu0 %v3030
        %v3032 = vand.u32 %v506, 4294901760
        %3033 = vmatpush.msra.mxu0 %v3032
        %v3034 = vand.u32 %v2180, 4294901760
        %v3035 = vsub.f32 %v2180, %v3034
        %v3036 = vand.u32 %v3035, 4294901760
        %v3037 = vsub.f32 %v3035, %v3036
        %v3038 = vand.u32 %v3037, 4294901760
        %3039 = vmatmul.f32.gmra.mxu0 %v3038
        %v3040 = vpop.f32.mrf.mxu0
        %v3041 = vadd.f32 0.0, %v3040
        %v3042 = vand.u32 %v2181, 4294901760
        %v3043 = vsub.f32 %v2181, %v3042
        %v3044 = vand.u32 %v3043, 4294901760
        %v3045 = vsub.f32 %v3043, %v3044
        %v3046 = vand.u32 %v3045, 4294901760
        %3047 = vmatmul.f32.gmra.mxu0 %v3046
        %v3048 = vpop.f32.mrf.mxu0
        %v3049 = vadd.f32 0.0, %v3048
        %v3050 = vand.u32 %v2182, 4294901760
        %v3051 = vsub.f32 %v2182, %v3050
        %v3052 = vand.u32 %v3051, 4294901760
        %v3053 = vsub.f32 %v3051, %v3052
        %v3054 = vand.u32 %v3053, 4294901760
        %3055 = vmatmul.f32.gmra.mxu0 %v3054
        %v3056 = vpop.f32.mrf.mxu0
        %v3057 = vadd.f32 0.0, %v3056
        %v3058 = vand.u32 %v2183, 4294901760
        %v3059 = vsub.f32 %v2183, %v3058
        %v3060 = vand.u32 %v3059, 4294901760
        %v3061 = vsub.f32 %v3059, %v3060
        %v3062 = vand.u32 %v3061, 4294901760
        %3063 = vmatmul.f32.gmra.mxu0 %v3062
        %v3064 = vpop.f32.mrf.mxu0
        %v3065 = vadd.f32 0.0, %v3064
        %v3066 = vand.u32 %v2184, 4294901760
        %v3067 = vsub.f32 %v2184, %v3066
        %v3068 = vand.u32 %v3067, 4294901760
        %v3069 = vsub.f32 %v3067, %v3068
        %v3070 = vand.u32 %v3069, 4294901760
        %3071 = vmatmul.f32.gmra.mxu0 %v3070
        %v3072 = vpop.f32.mrf.mxu0
        %v3073 = vadd.f32 0.0, %v3072
        %v3074 = vand.u32 %v2185, 4294901760
        %v3075 = vsub.f32 %v2185, %v3074
        %v3076 = vand.u32 %v3075, 4294901760
        %v3077 = vsub.f32 %v3075, %v3076
        %v3078 = vand.u32 %v3077, 4294901760
        %3079 = vmatmul.f32.gmra.mxu0 %v3078
        %v3080 = vpop.f32.mrf.mxu0
        %v3081 = vadd.f32 0.0, %v3080
        %v3082 = vand.u32 %v2186, 4294901760
        %v3083 = vsub.f32 %v2186, %v3082
        %v3084 = vand.u32 %v3083, 4294901760
        %v3085 = vsub.f32 %v3083, %v3084
        %v3086 = vand.u32 %v3085, 4294901760
        %3087 = vmatmul.f32.gmra.mxu0 %v3086
        %v3088 = vpop.f32.mrf.mxu0
        %v3089 = vadd.f32 0.0, %v3088
        %v3090 = vand.u32 %v2187, 4294901760
        %v3091 = vsub.f32 %v2187, %v3090
        %v3092 = vand.u32 %v3091, 4294901760
        %v3093 = vsub.f32 %v3091, %v3092
        %v3094 = vand.u32 %v3093, 4294901760
        %3095 = vmatmul.f32.gmra.mxu0 %v3094
        %v3096 = vpop.f32.mrf.mxu0
        %v3097 = vadd.f32 0.0, %v3096
        %v3098 = vand.u32 %v2188, 4294901760
        %v3099 = vsub.f32 %v2188, %v3098
        %v3100 = vand.u32 %v3099, 4294901760
        %v3101 = vsub.f32 %v3099, %v3100
        %v3102 = vand.u32 %v3101, 4294901760
        %3103 = vmatmul.f32.gmra.mxu0 %v3102
        %v3104 = vpop.f32.mrf.mxu0
        %v3105 = vadd.f32 0.0, %v3104
        %v3106 = vand.u32 %v2189, 4294901760
        %v3107 = vsub.f32 %v2189, %v3106
        %v3108 = vand.u32 %v3107, 4294901760
        %v3109 = vsub.f32 %v3107, %v3108
        %v3110 = vand.u32 %v3109, 4294901760
        %3111 = vmatmul.f32.gmra.mxu0 %v3110
        %v3112 = vpop.f32.mrf.mxu0
        %v3113 = vadd.f32 0.0, %v3112
        %v3114 = vand.u32 %v2190, 4294901760
        %v3115 = vsub.f32 %v2190, %v3114
        %v3116 = vand.u32 %v3115, 4294901760
        %v3117 = vsub.f32 %v3115, %v3116
        %v3118 = vand.u32 %v3117, 4294901760
        %3119 = vmatmul.f32.gmra.mxu0 %v3118
        %v3120 = vpop.f32.mrf.mxu0
        %v3121 = vadd.f32 0.0, %v3120
        %v3122 = vand.u32 %v2191, 4294901760
        %v3123 = vsub.f32 %v2191, %v3122
        %v3124 = vand.u32 %v3123, 4294901760
        %v3125 = vsub.f32 %v3123, %v3124
        %v3126 = vand.u32 %v3125, 4294901760
        %3127 = vmatmul.f32.gmra.mxu0 %v3126
        %v3128 = vpop.f32.mrf.mxu0
        %v3129 = vadd.f32 0.0, %v3128
        %v3130 = vand.u32 %v2192, 4294901760
        %v3131 = vsub.f32 %v2192, %v3130
        %v3132 = vand.u32 %v3131, 4294901760
        %v3133 = vsub.f32 %v3131, %v3132
        %v3134 = vand.u32 %v3133, 4294901760
        %3135 = vmatmul.f32.gmra.mxu0 %v3134
        %v3136 = vpop.f32.mrf.mxu0
        %v3137 = vadd.f32 0.0, %v3136
        %v3138 = vand.u32 %v2193, 4294901760
        %v3139 = vsub.f32 %v2193, %v3138
        %v3140 = vand.u32 %v3139, 4294901760
        %v3141 = vsub.f32 %v3139, %v3140
        %v3142 = vand.u32 %v3141, 4294901760
        %3143 = vmatmul.f32.gmra.mxu0 %v3142
        %v3144 = vpop.f32.mrf.mxu0
        %v3145 = vadd.f32 0.0, %v3144
        %v3146 = vand.u32 %v2194, 4294901760
        %v3147 = vsub.f32 %v2194, %v3146
        %v3148 = vand.u32 %v3147, 4294901760
        %v3149 = vsub.f32 %v3147, %v3148
        %v3150 = vand.u32 %v3149, 4294901760
        %3151 = vmatmul.f32.gmra.mxu0 %v3150
        %v3152 = vpop.f32.mrf.mxu0
        %v3153 = vadd.f32 0.0, %v3152
        %v3154 = vand.u32 %v2195, 4294901760
        %v3155 = vsub.f32 %v2195, %v3154
        %v3156 = vand.u32 %v3155, 4294901760
        %v3157 = vsub.f32 %v3155, %v3156
        %v3158 = vand.u32 %v3157, 4294901760
        %3159 = vmatmul.f32.gmra.mxu0 %v3158
        %v3160 = vpop.f32.mrf.mxu0
        %v3161 = vadd.f32 0.0, %v3160
        %3162 = vdwg.mxu0
        %v3163 = vand.u32 %v521, 4294901760
        %v3164 = vsub.f32 %v521, %v3163
        %v3165 = vand.u32 %v3164, 4294901760
        %v3166 = vsub.f32 %v3164, %v3165
        %v3167 = vand.u32 %v3166, 4294901760
        %3168 = vmatpush.msra.mxu0 %v3167
        %v3169 = vand.u32 %v520, 4294901760
        %v3170 = vsub.f32 %v520, %v3169
        %v3171 = vand.u32 %v3170, 4294901760
        %v3172 = vsub.f32 %v3170, %v3171
        %v3173 = vand.u32 %v3172, 4294901760
        %3174 = vmatpush.msra.mxu0 %v3173
        %v3175 = vand.u32 %v519, 4294901760
        %v3176 = vsub.f32 %v519, %v3175
        %v3177 = vand.u32 %v3176, 4294901760
        %v3178 = vsub.f32 %v3176, %v3177
        %v3179 = vand.u32 %v3178, 4294901760
        %3180 = vmatpush.msra.mxu0 %v3179
        %v3181 = vand.u32 %v518, 4294901760
        %v3182 = vsub.f32 %v518, %v3181
        %v3183 = vand.u32 %v3182, 4294901760
        %v3184 = vsub.f32 %v3182, %v3183
        %v3185 = vand.u32 %v3184, 4294901760
        %3186 = vmatpush.msra.mxu0 %v3185
        %v3187 = vand.u32 %v517, 4294901760
        %v3188 = vsub.f32 %v517, %v3187
        %v3189 = vand.u32 %v3188, 4294901760
        %v3190 = vsub.f32 %v3188, %v3189
        %v3191 = vand.u32 %v3190, 4294901760
        %3192 = vmatpush.msra.mxu0 %v3191
        %v3193 = vand.u32 %v516, 4294901760
        %v3194 = vsub.f32 %v516, %v3193
        %v3195 = vand.u32 %v3194, 4294901760
        %v3196 = vsub.f32 %v3194, %v3195
        %v3197 = vand.u32 %v3196, 4294901760
        %3198 = vmatpush.msra.mxu0 %v3197
        %v3199 = vand.u32 %v515, 4294901760
        %v3200 = vsub.f32 %v515, %v3199
        %v3201 = vand.u32 %v3200, 4294901760
        %v3202 = vsub.f32 %v3200, %v3201
        %v3203 = vand.u32 %v3202, 4294901760
        %3204 = vmatpush.msra.mxu0 %v3203
        %v3205 = vand.u32 %v514, 4294901760
        %v3206 = vsub.f32 %v514, %v3205
        %v3207 = vand.u32 %v3206, 4294901760
        %v3208 = vsub.f32 %v3206, %v3207
        %v3209 = vand.u32 %v3208, 4294901760
        %3210 = vmatpush.msra.mxu0 %v3209
        %v3211 = vand.u32 %v513, 4294901760
        %v3212 = vsub.f32 %v513, %v3211
        %v3213 = vand.u32 %v3212, 4294901760
        %v3214 = vsub.f32 %v3212, %v3213
        %v3215 = vand.u32 %v3214, 4294901760
        %3216 = vmatpush.msra.mxu0 %v3215
        %v3217 = vand.u32 %v512, 4294901760
        %v3218 = vsub.f32 %v512, %v3217
        %v3219 = vand.u32 %v3218, 4294901760
        %v3220 = vsub.f32 %v3218, %v3219
        %v3221 = vand.u32 %v3220, 4294901760
        %3222 = vmatpush.msra.mxu0 %v3221
        %v3223 = vand.u32 %v511, 4294901760
        %v3224 = vsub.f32 %v511, %v3223
        %v3225 = vand.u32 %v3224, 4294901760
        %v3226 = vsub.f32 %v3224, %v3225
        %v3227 = vand.u32 %v3226, 4294901760
        %3228 = vmatpush.msra.mxu0 %v3227
        %v3229 = vand.u32 %v510, 4294901760
        %v3230 = vsub.f32 %v510, %v3229
        %v3231 = vand.u32 %v3230, 4294901760
        %v3232 = vsub.f32 %v3230, %v3231
        %v3233 = vand.u32 %v3232, 4294901760
        %3234 = vmatpush.msra.mxu0 %v3233
        %v3235 = vand.u32 %v509, 4294901760
        %v3236 = vsub.f32 %v509, %v3235
        %v3237 = vand.u32 %v3236, 4294901760
        %v3238 = vsub.f32 %v3236, %v3237
        %v3239 = vand.u32 %v3238, 4294901760
        %3240 = vmatpush.msra.mxu0 %v3239
        %v3241 = vand.u32 %v508, 4294901760
        %v3242 = vsub.f32 %v508, %v3241
        %v3243 = vand.u32 %v3242, 4294901760
        %v3244 = vsub.f32 %v3242, %v3243
        %v3245 = vand.u32 %v3244, 4294901760
        %3246 = vmatpush.msra.mxu0 %v3245
        %v3247 = vand.u32 %v507, 4294901760
        %v3248 = vsub.f32 %v507, %v3247
        %v3249 = vand.u32 %v3248, 4294901760
        %v3250 = vsub.f32 %v3248, %v3249
        %v3251 = vand.u32 %v3250, 4294901760
        %3252 = vmatpush.msra.mxu0 %v3251
        %v3253 = vand.u32 %v506, 4294901760
        %v3254 = vsub.f32 %v506, %v3253
        %v3255 = vand.u32 %v3254, 4294901760
        %v3256 = vsub.f32 %v3254, %v3255
        %v3257 = vand.u32 %v3256, 4294901760
        %3258 = vmatpush.msra.mxu0 %v3257
        %v3259 = vand.u32 %v2180, 4294901760
        %3260 = vmatmul.f32.gmra.mxu0 %v3259
        %v3261 = vpop.f32.mrf.mxu0
        %v3262 = vadd.f32 %v3041, %v3261
        %v3263 = vand.u32 %v2181, 4294901760
        %3264 = vmatmul.f32.gmra.mxu0 %v3263
        %v3265 = vpop.f32.mrf.mxu0
        %v3266 = vadd.f32 %v3049, %v3265
        %v3267 = vand.u32 %v2182, 4294901760
        %3268 = vmatmul.f32.gmra.mxu0 %v3267
        %v3269 = vpop.f32.mrf.mxu0
        %v3270 = vadd.f32 %v3057, %v3269
        %v3271 = vand.u32 %v2183, 4294901760
        %3272 = vmatmul.f32.gmra.mxu0 %v3271
        %v3273 = vpop.f32.mrf.mxu0
        %v3274 = vadd.f32 %v3065, %v3273
        %v3275 = vand.u32 %v2184, 4294901760
        %3276 = vmatmul.f32.gmra.mxu0 %v3275
        %v3277 = vpop.f32.mrf.mxu0
        %v3278 = vadd.f32 %v3073, %v3277
        %v3279 = vand.u32 %v2185, 4294901760
        %3280 = vmatmul.f32.gmra.mxu0 %v3279
        %v3281 = vpop.f32.mrf.mxu0
        %v3282 = vadd.f32 %v3081, %v3281
        %v3283 = vand.u32 %v2186, 4294901760
        %3284 = vmatmul.f32.gmra.mxu0 %v3283
        %v3285 = vpop.f32.mrf.mxu0
        %v3286 = vadd.f32 %v3089, %v3285
        %v3287 = vand.u32 %v2187, 4294901760
        %3288 = vmatmul.f32.gmra.mxu0 %v3287
        %v3289 = vpop.f32.mrf.mxu0
        %v3290 = vadd.f32 %v3097, %v3289
        %v3291 = vand.u32 %v2188, 4294901760
        %3292 = vmatmul.f32.gmra.mxu0 %v3291
        %v3293 = vpop.f32.mrf.mxu0
        %v3294 = vadd.f32 %v3105, %v3293
        %v3295 = vand.u32 %v2189, 4294901760
        %3296 = vmatmul.f32.gmra.mxu0 %v3295
        %v3297 = vpop.f32.mrf.mxu0
        %v3298 = vadd.f32 %v3113, %v3297
        %v3299 = vand.u32 %v2190, 4294901760
        %3300 = vmatmul.f32.gmra.mxu0 %v3299
        %v3301 = vpop.f32.mrf.mxu0
        %v3302 = vadd.f32 %v3121, %v3301
        %v3303 = vand.u32 %v2191, 4294901760
        %3304 = vmatmul.f32.gmra.mxu0 %v3303
        %v3305 = vpop.f32.mrf.mxu0
        %v3306 = vadd.f32 %v3129, %v3305
        %v3307 = vand.u32 %v2192, 4294901760
        %3308 = vmatmul.f32.gmra.mxu0 %v3307
        %v3309 = vpop.f32.mrf.mxu0
        %v3310 = vadd.f32 %v3137, %v3309
        %v3311 = vand.u32 %v2193, 4294901760
        %3312 = vmatmul.f32.gmra.mxu0 %v3311
        %v3313 = vpop.f32.mrf.mxu0
        %v3314 = vadd.f32 %v3145, %v3313
        %v3315 = vand.u32 %v2194, 4294901760
        %3316 = vmatmul.f32.gmra.mxu0 %v3315
        %v3317 = vpop.f32.mrf.mxu0
        %v3318 = vadd.f32 %v3153, %v3317
        %v3319 = vand.u32 %v2195, 4294901760
        %3320 = vmatmul.f32.gmra.mxu0 %v3319
        %v3321 = vpop.f32.mrf.mxu0
        %v3322 = vadd.f32 %v3161, %v3321
        %3323 = vdwg.mxu0
        %v3324 = vand.u32 %v521, 4294901760
        %v3325 = vsub.f32 %v521, %v3324
        %3326 = vmatpush.msra.mxu0 %v3325
        %v3327 = vand.u32 %v520, 4294901760
        %v3328 = vsub.f32 %v520, %v3327
        %3329 = vmatpush.msra.mxu0 %v3328
        %v3330 = vand.u32 %v519, 4294901760
        %v3331 = vsub.f32 %v519, %v3330
        %3332 = vmatpush.msra.mxu0 %v3331
        %v3333 = vand.u32 %v518, 4294901760
        %v3334 = vsub.f32 %v518, %v3333
        %3335 = vmatpush.msra.mxu0 %v3334
        %v3336 = vand.u32 %v517, 4294901760
        %v3337 = vsub.f32 %v517, %v3336
        %3338 = vmatpush.msra.mxu0 %v3337
        %v3339 = vand.u32 %v516, 4294901760
        %v3340 = vsub.f32 %v516, %v3339
        %3341 = vmatpush.msra.mxu0 %v3340
        %v3342 = vand.u32 %v515, 4294901760
        %v3343 = vsub.f32 %v515, %v3342
        %3344 = vmatpush.msra.mxu0 %v3343
        %v3345 = vand.u32 %v514, 4294901760
        %v3346 = vsub.f32 %v514, %v3345
        %3347 = vmatpush.msra.mxu0 %v3346
        %v3348 = vand.u32 %v513, 4294901760
        %v3349 = vsub.f32 %v513, %v3348
        %3350 = vmatpush.msra.mxu0 %v3349
        %v3351 = vand.u32 %v512, 4294901760
        %v3352 = vsub.f32 %v512, %v3351
        %3353 = vmatpush.msra.mxu0 %v3352
        %v3354 = vand.u32 %v511, 4294901760
        %v3355 = vsub.f32 %v511, %v3354
        %3356 = vmatpush.msra.mxu0 %v3355
        %v3357 = vand.u32 %v510, 4294901760
        %v3358 = vsub.f32 %v510, %v3357
        %3359 = vmatpush.msra.mxu0 %v3358
        %v3360 = vand.u32 %v509, 4294901760
        %v3361 = vsub.f32 %v509, %v3360
        %3362 = vmatpush.msra.mxu0 %v3361
        %v3363 = vand.u32 %v508, 4294901760
        %v3364 = vsub.f32 %v508, %v3363
        %3365 = vmatpush.msra.mxu0 %v3364
        %v3366 = vand.u32 %v507, 4294901760
        %v3367 = vsub.f32 %v507, %v3366
        %3368 = vmatpush.msra.mxu0 %v3367
        %v3369 = vand.u32 %v506, 4294901760
        %v3370 = vsub.f32 %v506, %v3369
        %3371 = vmatpush.msra.mxu0 %v3370
        %v3372 = vand.u32 %v2180, 4294901760
        %v3373 = vsub.f32 %v2180, %v3372
        %3374 = vmatmul.f32.gmra.mxu0 %v3373
        %v3375 = vpop.f32.mrf.mxu0
        %v3376 = vadd.f32 %v3262, %v3375
        %v3377 = vand.u32 %v2181, 4294901760
        %v3378 = vsub.f32 %v2181, %v3377
        %3379 = vmatmul.f32.gmra.mxu0 %v3378
        %v3380 = vpop.f32.mrf.mxu0
        %v3381 = vadd.f32 %v3266, %v3380
        %v3382 = vand.u32 %v2182, 4294901760
        %v3383 = vsub.f32 %v2182, %v3382
        %3384 = vmatmul.f32.gmra.mxu0 %v3383
        %v3385 = vpop.f32.mrf.mxu0
        %v3386 = vadd.f32 %v3270, %v3385
        %v3387 = vand.u32 %v2183, 4294901760
        %v3388 = vsub.f32 %v2183, %v3387
        %3389 = vmatmul.f32.gmra.mxu0 %v3388
        %v3390 = vpop.f32.mrf.mxu0
        %v3391 = vadd.f32 %v3274, %v3390
        %v3392 = vand.u32 %v2184, 4294901760
        %v3393 = vsub.f32 %v2184, %v3392
        %3394 = vmatmul.f32.gmra.mxu0 %v3393
        %v3395 = vpop.f32.mrf.mxu0
        %v3396 = vadd.f32 %v3278, %v3395
        %v3397 = vand.u32 %v2185, 4294901760
        %v3398 = vsub.f32 %v2185, %v3397
        %3399 = vmatmul.f32.gmra.mxu0 %v3398
        %v3400 = vpop.f32.mrf.mxu0
        %v3401 = vadd.f32 %v3282, %v3400
        %v3402 = vand.u32 %v2186, 4294901760
        %v3403 = vsub.f32 %v2186, %v3402
        %3404 = vmatmul.f32.gmra.mxu0 %v3403
        %v3405 = vpop.f32.mrf.mxu0
        %v3406 = vadd.f32 %v3286, %v3405
        %v3407 = vand.u32 %v2187, 4294901760
        %v3408 = vsub.f32 %v2187, %v3407
        %3409 = vmatmul.f32.gmra.mxu0 %v3408
        %v3410 = vpop.f32.mrf.mxu0
        %v3411 = vadd.f32 %v3290, %v3410
        %v3412 = vand.u32 %v2188, 4294901760
        %v3413 = vsub.f32 %v2188, %v3412
        %3414 = vmatmul.f32.gmra.mxu0 %v3413
        %v3415 = vpop.f32.mrf.mxu0
        %v3416 = vadd.f32 %v3294, %v3415
        %v3417 = vand.u32 %v2189, 4294901760
        %v3418 = vsub.f32 %v2189, %v3417
        %3419 = vmatmul.f32.gmra.mxu0 %v3418
        %v3420 = vpop.f32.mrf.mxu0
        %v3421 = vadd.f32 %v3298, %v3420
        %v3422 = vand.u32 %v2190, 4294901760
        %v3423 = vsub.f32 %v2190, %v3422
        %3424 = vmatmul.f32.gmra.mxu0 %v3423
        %v3425 = vpop.f32.mrf.mxu0
        %v3426 = vadd.f32 %v3302, %v3425
        %v3427 = vand.u32 %v2191, 4294901760
        %v3428 = vsub.f32 %v2191, %v3427
        %3429 = vmatmul.f32.gmra.mxu0 %v3428
        %v3430 = vpop.f32.mrf.mxu0
        %v3431 = vadd.f32 %v3306, %v3430
        %v3432 = vand.u32 %v2192, 4294901760
        %v3433 = vsub.f32 %v2192, %v3432
        %3434 = vmatmul.f32.gmra.mxu0 %v3433
        %v3435 = vpop.f32.mrf.mxu0
        %v3436 = vadd.f32 %v3310, %v3435
        %v3437 = vand.u32 %v2193, 4294901760
        %v3438 = vsub.f32 %v2193, %v3437
        %3439 = vmatmul.f32.gmra.mxu0 %v3438
        %v3440 = vpop.f32.mrf.mxu0
        %v3441 = vadd.f32 %v3314, %v3440
        %v3442 = vand.u32 %v2194, 4294901760
        %v3443 = vsub.f32 %v2194, %v3442
        %3444 = vmatmul.f32.gmra.mxu0 %v3443
        %v3445 = vpop.f32.mrf.mxu0
        %v3446 = vadd.f32 %v3318, %v3445
        %v3447 = vand.u32 %v2195, 4294901760
        %v3448 = vsub.f32 %v2195, %v3447
        %3449 = vmatmul.f32.gmra.mxu0 %v3448
        %v3450 = vpop.f32.mrf.mxu0
        %v3451 = vadd.f32 %v3322, %v3450
        %3452 = vdwg.mxu0
        %v3453 = vand.u32 %v521, 4294901760
        %3454 = vmatpush.msra.mxu0 %v3453
        %v3455 = vand.u32 %v520, 4294901760
        %3456 = vmatpush.msra.mxu0 %v3455
        %v3457 = vand.u32 %v519, 4294901760
        %3458 = vmatpush.msra.mxu0 %v3457
        %v3459 = vand.u32 %v518, 4294901760
        %3460 = vmatpush.msra.mxu0 %v3459
        %v3461 = vand.u32 %v517, 4294901760
        %3462 = vmatpush.msra.mxu0 %v3461
        %v3463 = vand.u32 %v516, 4294901760
        %3464 = vmatpush.msra.mxu0 %v3463
        %v3465 = vand.u32 %v515, 4294901760
        %3466 = vmatpush.msra.mxu0 %v3465
        %v3467 = vand.u32 %v514, 4294901760
        %3468 = vmatpush.msra.mxu0 %v3467
        %v3469 = vand.u32 %v513, 4294901760
        %3470 = vmatpush.msra.mxu0 %v3469
        %v3471 = vand.u32 %v512, 4294901760
        %3472 = vmatpush.msra.mxu0 %v3471
        %v3473 = vand.u32 %v511, 4294901760
        %3474 = vmatpush.msra.mxu0 %v3473
        %v3475 = vand.u32 %v510, 4294901760
        %3476 = vmatpush.msra.mxu0 %v3475
        %v3477 = vand.u32 %v509, 4294901760
        %3478 = vmatpush.msra.mxu0 %v3477
        %v3479 = vand.u32 %v508, 4294901760
        %3480 = vmatpush.msra.mxu0 %v3479
        %v3481 = vand.u32 %v507, 4294901760
        %3482 = vmatpush.msra.mxu0 %v3481
        %v3483 = vand.u32 %v506, 4294901760
        %3484 = vmatpush.msra.mxu0 %v3483
        %v3485 = vand.u32 %v2180, 4294901760
        %v3486 = vsub.f32 %v2180, %v3485
        %v3487 = vand.u32 %v3486, 4294901760
        %3488 = vmatmul.f32.gmra.mxu0 %v3487
        %v3489 = vpop.f32.mrf.mxu0
        %v3490 = vadd.f32 %v3376, %v3489
        %v3491 = vand.u32 %v2181, 4294901760
        %v3492 = vsub.f32 %v2181, %v3491
        %v3493 = vand.u32 %v3492, 4294901760
        %3494 = vmatmul.f32.gmra.mxu0 %v3493
        %v3495 = vpop.f32.mrf.mxu0
        %v3496 = vadd.f32 %v3381, %v3495
        %v3497 = vand.u32 %v2182, 4294901760
        %v3498 = vsub.f32 %v2182, %v3497
        %v3499 = vand.u32 %v3498, 4294901760
        %3500 = vmatmul.f32.gmra.mxu0 %v3499
        %v3501 = vpop.f32.mrf.mxu0
        %v3502 = vadd.f32 %v3386, %v3501
        %v3503 = vand.u32 %v2183, 4294901760
        %v3504 = vsub.f32 %v2183, %v3503
        %v3505 = vand.u32 %v3504, 4294901760
        %3506 = vmatmul.f32.gmra.mxu0 %v3505
        %v3507 = vpop.f32.mrf.mxu0
        %v3508 = vadd.f32 %v3391, %v3507
        %v3509 = vand.u32 %v2184, 4294901760
        %v3510 = vsub.f32 %v2184, %v3509
        %v3511 = vand.u32 %v3510, 4294901760
        %3512 = vmatmul.f32.gmra.mxu0 %v3511
        %v3513 = vpop.f32.mrf.mxu0
        %v3514 = vadd.f32 %v3396, %v3513
        %v3515 = vand.u32 %v2185, 4294901760
        %v3516 = vsub.f32 %v2185, %v3515
        %v3517 = vand.u32 %v3516, 4294901760
        %3518 = vmatmul.f32.gmra.mxu0 %v3517
        %v3519 = vpop.f32.mrf.mxu0
        %v3520 = vadd.f32 %v3401, %v3519
        %v3521 = vand.u32 %v2186, 4294901760
        %v3522 = vsub.f32 %v2186, %v3521
        %v3523 = vand.u32 %v3522, 4294901760
        %3524 = vmatmul.f32.gmra.mxu0 %v3523
        %v3525 = vpop.f32.mrf.mxu0
        %v3526 = vadd.f32 %v3406, %v3525
        %v3527 = vand.u32 %v2187, 4294901760
        %v3528 = vsub.f32 %v2187, %v3527
        %v3529 = vand.u32 %v3528, 4294901760
        %3530 = vmatmul.f32.gmra.mxu0 %v3529
        %v3531 = vpop.f32.mrf.mxu0
        %v3532 = vadd.f32 %v3411, %v3531
        %v3533 = vand.u32 %v2188, 4294901760
        %v3534 = vsub.f32 %v2188, %v3533
        %v3535 = vand.u32 %v3534, 4294901760
        %3536 = vmatmul.f32.gmra.mxu0 %v3535
        %v3537 = vpop.f32.mrf.mxu0
        %v3538 = vadd.f32 %v3416, %v3537
        %v3539 = vand.u32 %v2189, 4294901760
        %v3540 = vsub.f32 %v2189, %v3539
        %v3541 = vand.u32 %v3540, 4294901760
        %3542 = vmatmul.f32.gmra.mxu0 %v3541
        %v3543 = vpop.f32.mrf.mxu0
        %v3544 = vadd.f32 %v3421, %v3543
        %v3545 = vand.u32 %v2190, 4294901760
        %v3546 = vsub.f32 %v2190, %v3545
        %v3547 = vand.u32 %v3546, 4294901760
        %3548 = vmatmul.f32.gmra.mxu0 %v3547
        %v3549 = vpop.f32.mrf.mxu0
        %v3550 = vadd.f32 %v3426, %v3549
        %v3551 = vand.u32 %v2191, 4294901760
        %v3552 = vsub.f32 %v2191, %v3551
        %v3553 = vand.u32 %v3552, 4294901760
        %3554 = vmatmul.f32.gmra.mxu0 %v3553
        %v3555 = vpop.f32.mrf.mxu0
        %v3556 = vadd.f32 %v3431, %v3555
        %v3557 = vand.u32 %v2192, 4294901760
        %v3558 = vsub.f32 %v2192, %v3557
        %v3559 = vand.u32 %v3558, 4294901760
        %3560 = vmatmul.f32.gmra.mxu0 %v3559
        %v3561 = vpop.f32.mrf.mxu0
        %v3562 = vadd.f32 %v3436, %v3561
        %v3563 = vand.u32 %v2193, 4294901760
        %v3564 = vsub.f32 %v2193, %v3563
        %v3565 = vand.u32 %v3564, 4294901760
        %3566 = vmatmul.f32.gmra.mxu0 %v3565
        %v3567 = vpop.f32.mrf.mxu0
        %v3568 = vadd.f32 %v3441, %v3567
        %v3569 = vand.u32 %v2194, 4294901760
        %v3570 = vsub.f32 %v2194, %v3569
        %v3571 = vand.u32 %v3570, 4294901760
        %3572 = vmatmul.f32.gmra.mxu0 %v3571
        %v3573 = vpop.f32.mrf.mxu0
        %v3574 = vadd.f32 %v3446, %v3573
        %v3575 = vand.u32 %v2195, 4294901760
        %v3576 = vsub.f32 %v2195, %v3575
        %v3577 = vand.u32 %v3576, 4294901760
        %3578 = vmatmul.f32.gmra.mxu0 %v3577
        %v3579 = vpop.f32.mrf.mxu0
        %v3580 = vadd.f32 %v3451, %v3579
        %3581 = vdwg.mxu0
        %v3582 = vand.u32 %v521, 4294901760
        %v3583 = vsub.f32 %v521, %v3582
        %v3584 = vand.u32 %v3583, 4294901760
        %3585 = vmatpush.msra.mxu0 %v3584
        %v3586 = vand.u32 %v520, 4294901760
        %v3587 = vsub.f32 %v520, %v3586
        %v3588 = vand.u32 %v3587, 4294901760
        %3589 = vmatpush.msra.mxu0 %v3588
        %v3590 = vand.u32 %v519, 4294901760
        %v3591 = vsub.f32 %v519, %v3590
        %v3592 = vand.u32 %v3591, 4294901760
        %3593 = vmatpush.msra.mxu0 %v3592
        %v3594 = vand.u32 %v518, 4294901760
        %v3595 = vsub.f32 %v518, %v3594
        %v3596 = vand.u32 %v3595, 4294901760
        %3597 = vmatpush.msra.mxu0 %v3596
        %v3598 = vand.u32 %v517, 4294901760
        %v3599 = vsub.f32 %v517, %v3598
        %v3600 = vand.u32 %v3599, 4294901760
        %3601 = vmatpush.msra.mxu0 %v3600
        %v3602 = vand.u32 %v516, 4294901760
        %v3603 = vsub.f32 %v516, %v3602
        %v3604 = vand.u32 %v3603, 4294901760
        %3605 = vmatpush.msra.mxu0 %v3604
        %v3606 = vand.u32 %v515, 4294901760
        %v3607 = vsub.f32 %v515, %v3606
        %v3608 = vand.u32 %v3607, 4294901760
        %3609 = vmatpush.msra.mxu0 %v3608
        %v3610 = vand.u32 %v514, 4294901760
        %v3611 = vsub.f32 %v514, %v3610
        %v3612 = vand.u32 %v3611, 4294901760
        %3613 = vmatpush.msra.mxu0 %v3612
        %v3614 = vand.u32 %v513, 4294901760
        %v3615 = vsub.f32 %v513, %v3614
        %v3616 = vand.u32 %v3615, 4294901760
        %3617 = vmatpush.msra.mxu0 %v3616
        %v3618 = vand.u32 %v512, 4294901760
        %v3619 = vsub.f32 %v512, %v3618
        %v3620 = vand.u32 %v3619, 4294901760
        %3621 = vmatpush.msra.mxu0 %v3620
        %v3622 = vand.u32 %v511, 4294901760
        %v3623 = vsub.f32 %v511, %v3622
        %v3624 = vand.u32 %v3623, 4294901760
        %3625 = vmatpush.msra.mxu0 %v3624
        %v3626 = vand.u32 %v510, 4294901760
        %v3627 = vsub.f32 %v510, %v3626
        %v3628 = vand.u32 %v3627, 4294901760
        %3629 = vmatpush.msra.mxu0 %v3628
        %v3630 = vand.u32 %v509, 4294901760
        %v3631 = vsub.f32 %v509, %v3630
        %v3632 = vand.u32 %v3631, 4294901760
        %3633 = vmatpush.msra.mxu0 %v3632
        %v3634 = vand.u32 %v508, 4294901760
        %v3635 = vsub.f32 %v508, %v3634
        %v3636 = vand.u32 %v3635, 4294901760
        %3637 = vmatpush.msra.mxu0 %v3636
        %v3638 = vand.u32 %v507, 4294901760
        %v3639 = vsub.f32 %v507, %v3638
        %v3640 = vand.u32 %v3639, 4294901760
        %3641 = vmatpush.msra.mxu0 %v3640
        %v3642 = vand.u32 %v506, 4294901760
        %v3643 = vsub.f32 %v506, %v3642
        %v3644 = vand.u32 %v3643, 4294901760
        %3645 = vmatpush.msra.mxu0 %v3644
        %v3646 = vand.u32 %v2180, 4294901760
        %3647 = vmatmul.f32.gmra.mxu0 %v3646
        %v3648 = vpop.f32.mrf.mxu0
        %v3649 = vadd.f32 %v3490, %v3648
        %v3650 = vand.u32 %v2181, 4294901760
        %3651 = vmatmul.f32.gmra.mxu0 %v3650
        %v3652 = vpop.f32.mrf.mxu0
        %v3653 = vadd.f32 %v3496, %v3652
        %v3654 = vand.u32 %v2182, 4294901760
        %3655 = vmatmul.f32.gmra.mxu0 %v3654
        %v3656 = vpop.f32.mrf.mxu0
        %v3657 = vadd.f32 %v3502, %v3656
        %v3658 = vand.u32 %v2183, 4294901760
        %3659 = vmatmul.f32.gmra.mxu0 %v3658
        %v3660 = vpop.f32.mrf.mxu0
        %v3661 = vadd.f32 %v3508, %v3660
        %v3662 = vand.u32 %v2184, 4294901760
        %3663 = vmatmul.f32.gmra.mxu0 %v3662
        %v3664 = vpop.f32.mrf.mxu0
        %v3665 = vadd.f32 %v3514, %v3664
        %v3666 = vand.u32 %v2185, 4294901760
        %3667 = vmatmul.f32.gmra.mxu0 %v3666
        %v3668 = vpop.f32.mrf.mxu0
        %v3669 = vadd.f32 %v3520, %v3668
        %v3670 = vand.u32 %v2186, 4294901760
        %3671 = vmatmul.f32.gmra.mxu0 %v3670
        %v3672 = vpop.f32.mrf.mxu0
        %v3673 = vadd.f32 %v3526, %v3672
        %v3674 = vand.u32 %v2187, 4294901760
        %3675 = vmatmul.f32.gmra.mxu0 %v3674
        %v3676 = vpop.f32.mrf.mxu0
        %v3677 = vadd.f32 %v3532, %v3676
        %v3678 = vand.u32 %v2188, 4294901760
        %3679 = vmatmul.f32.gmra.mxu0 %v3678
        %v3680 = vpop.f32.mrf.mxu0
        %v3681 = vadd.f32 %v3538, %v3680
        %v3682 = vand.u32 %v2189, 4294901760
        %3683 = vmatmul.f32.gmra.mxu0 %v3682
        %v3684 = vpop.f32.mrf.mxu0
        %v3685 = vadd.f32 %v3544, %v3684
        %v3686 = vand.u32 %v2190, 4294901760
        %3687 = vmatmul.f32.gmra.mxu0 %v3686
        %v3688 = vpop.f32.mrf.mxu0
        %v3689 = vadd.f32 %v3550, %v3688
        %v3690 = vand.u32 %v2191, 4294901760
        %3691 = vmatmul.f32.gmra.mxu0 %v3690
        %v3692 = vpop.f32.mrf.mxu0
        %v3693 = vadd.f32 %v3556, %v3692
        %v3694 = vand.u32 %v2192, 4294901760
        %3695 = vmatmul.f32.gmra.mxu0 %v3694
        %v3696 = vpop.f32.mrf.mxu0
        %v3697 = vadd.f32 %v3562, %v3696
        %v3698 = vand.u32 %v2193, 4294901760
        %3699 = vmatmul.f32.gmra.mxu0 %v3698
        %v3700 = vpop.f32.mrf.mxu0
        %v3701 = vadd.f32 %v3568, %v3700
        %v3702 = vand.u32 %v2194, 4294901760
        %3703 = vmatmul.f32.gmra.mxu0 %v3702
        %v3704 = vpop.f32.mrf.mxu0
        %v3705 = vadd.f32 %v3574, %v3704
        %v3706 = vand.u32 %v2195, 4294901760
        %3707 = vmatmul.f32.gmra.mxu0 %v3706
        %v3708 = vpop.f32.mrf.mxu0
        %v3709 = vadd.f32 %v3580, %v3708
        %3710 = vdwg.mxu0
        %v3711 = vand.u32 %v521, 4294901760
        %3712 = vmatpush.msra.mxu0 %v3711
        %v3713 = vand.u32 %v520, 4294901760
        %3714 = vmatpush.msra.mxu0 %v3713
        %v3715 = vand.u32 %v519, 4294901760
        %3716 = vmatpush.msra.mxu0 %v3715
        %v3717 = vand.u32 %v518, 4294901760
        %3718 = vmatpush.msra.mxu0 %v3717
        %v3719 = vand.u32 %v517, 4294901760
        %3720 = vmatpush.msra.mxu0 %v3719
        %v3721 = vand.u32 %v516, 4294901760
        %3722 = vmatpush.msra.mxu0 %v3721
        %v3723 = vand.u32 %v515, 4294901760
        %3724 = vmatpush.msra.mxu0 %v3723
        %v3725 = vand.u32 %v514, 4294901760
        %3726 = vmatpush.msra.mxu0 %v3725
        %v3727 = vand.u32 %v513, 4294901760
        %3728 = vmatpush.msra.mxu0 %v3727
        %v3729 = vand.u32 %v512, 4294901760
        %3730 = vmatpush.msra.mxu0 %v3729
        %v3731 = vand.u32 %v511, 4294901760
        %3732 = vmatpush.msra.mxu0 %v3731
        %v3733 = vand.u32 %v510, 4294901760
        %3734 = vmatpush.msra.mxu0 %v3733
        %v3735 = vand.u32 %v509, 4294901760
        %3736 = vmatpush.msra.mxu0 %v3735
        %v3737 = vand.u32 %v508, 4294901760
        %3738 = vmatpush.msra.mxu0 %v3737
        %v3739 = vand.u32 %v507, 4294901760
        %3740 = vmatpush.msra.mxu0 %v3739
        %v3741 = vand.u32 %v506, 4294901760
        %3742 = vmatpush.msra.mxu0 %v3741
        %v3743 = vand.u32 %v2180, 4294901760
        %3744 = vmatmul.f32.gmra.mxu0 %v3743
        %v3745 = vpop.f32.mrf.mxu0
        %v3746 = vadd.f32 %v3649, %v3745
        %v3747 = vand.u32 %v2181, 4294901760
        %3748 = vmatmul.f32.gmra.mxu0 %v3747
        %v3749 = vpop.f32.mrf.mxu0
        %v3750 = vadd.f32 %v3653, %v3749
        %v3751 = vand.u32 %v2182, 4294901760
        %3752 = vmatmul.f32.gmra.mxu0 %v3751
        %v3753 = vpop.f32.mrf.mxu0
        %v3754 = vadd.f32 %v3657, %v3753
        %v3755 = vand.u32 %v2183, 4294901760
        %3756 = vmatmul.f32.gmra.mxu0 %v3755
        %v3757 = vpop.f32.mrf.mxu0
        %v3758 = vadd.f32 %v3661, %v3757
        %v3759 = vand.u32 %v2184, 4294901760
        %3760 = vmatmul.f32.gmra.mxu0 %v3759
        %v3761 = vpop.f32.mrf.mxu0
        %v3762 = vadd.f32 %v3665, %v3761
        %v3763 = vand.u32 %v2185, 4294901760
        %3764 = vmatmul.f32.gmra.mxu0 %v3763
        %v3765 = vpop.f32.mrf.mxu0
        %v3766 = vadd.f32 %v3669, %v3765
        %v3767 = vand.u32 %v2186, 4294901760
        %3768 = vmatmul.f32.gmra.mxu0 %v3767
        %v3769 = vpop.f32.mrf.mxu0
        %v3770 = vadd.f32 %v3673, %v3769
        %v3771 = vand.u32 %v2187, 4294901760
        %3772 = vmatmul.f32.gmra.mxu0 %v3771
        %v3773 = vpop.f32.mrf.mxu0
        %v3774 = vadd.f32 %v3677, %v3773
        %v3775 = vand.u32 %v2188, 4294901760
        %3776 = vmatmul.f32.gmra.mxu0 %v3775
        %v3777 = vpop.f32.mrf.mxu0
        %v3778 = vadd.f32 %v3681, %v3777
        %v3779 = vand.u32 %v2189, 4294901760
        %3780 = vmatmul.f32.gmra.mxu0 %v3779
        %v3781 = vpop.f32.mrf.mxu0
        %v3782 = vadd.f32 %v3685, %v3781
        %v3783 = vand.u32 %v2190, 4294901760
        %3784 = vmatmul.f32.gmra.mxu0 %v3783
        %v3785 = vpop.f32.mrf.mxu0
        %v3786 = vadd.f32 %v3689, %v3785
        %v3787 = vand.u32 %v2191, 4294901760
        %3788 = vmatmul.f32.gmra.mxu0 %v3787
        %v3789 = vpop.f32.mrf.mxu0
        %v3790 = vadd.f32 %v3693, %v3789
        %v3791 = vand.u32 %v2192, 4294901760
        %3792 = vmatmul.f32.gmra.mxu0 %v3791
        %v3793 = vpop.f32.mrf.mxu0
        %v3794 = vadd.f32 %v3697, %v3793
        %v3795 = vand.u32 %v2193, 4294901760
        %3796 = vmatmul.f32.gmra.mxu0 %v3795
        %v3797 = vpop.f32.mrf.mxu0
        %v3798 = vadd.f32 %v3701, %v3797
        %v3799 = vand.u32 %v2194, 4294901760
        %3800 = vmatmul.f32.gmra.mxu0 %v3799
        %v3801 = vpop.f32.mrf.mxu0
        %v3802 = vadd.f32 %v3705, %v3801
        %v3803 = vand.u32 %v2195, 4294901760
        %3804 = vmatmul.f32.gmra.mxu0 %v3803
        %v3805 = vpop.f32.mrf.mxu0
        %v3806 = vadd.f32 %v3709, %v3805
        %3807 = vdwg.mxu0
        %vm3808 = vcmask 261120
        %v3809 = vsel %vm3808, %v2940, 0.0
        %v3810 = vrot.slane %v3809, 4
        %v3811 = vadd.f32 %v3809, %v3810
        %v3812 = vrot.slane %v3811, 2
        %v3813 = vadd.f32 %v3811, %v3812
        %v3814 = vrot.slane %v3813, 1
        %v3815 = vadd.f32 %v3813, %v3814
        %v3816 = vsel %vm3808, %v2944, 0.0
        %v3817 = vrot.slane %v3816, 4
        %v3818 = vadd.f32 %v3816, %v3817
        %v3819 = vrot.slane %v3818, 2
        %v3820 = vadd.f32 %v3818, %v3819
        %v3821 = vrot.slane %v3820, 1
        %v3822 = vadd.f32 %v3820, %v3821
        %v3823 = vsel %vm3808, %v2948, 0.0
        %v3824 = vrot.slane %v3823, 4
        %v3825 = vadd.f32 %v3823, %v3824
        %v3826 = vrot.slane %v3825, 2
        %v3827 = vadd.f32 %v3825, %v3826
        %v3828 = vrot.slane %v3827, 1
        %v3829 = vadd.f32 %v3827, %v3828
        %v3830 = vsel %vm3808, %v2952, 0.0
        %v3831 = vrot.slane %v3830, 4
        %v3832 = vadd.f32 %v3830, %v3831
        %v3833 = vrot.slane %v3832, 2
        %v3834 = vadd.f32 %v3832, %v3833
        %v3835 = vrot.slane %v3834, 1
        %v3836 = vadd.f32 %v3834, %v3835
        %v3837 = vsel %vm3808, %v2956, 0.0
        %v3838 = vrot.slane %v3837, 4
        %v3839 = vadd.f32 %v3837, %v3838
        %v3840 = vrot.slane %v3839, 2
        %v3841 = vadd.f32 %v3839, %v3840
        %v3842 = vrot.slane %v3841, 1
        %v3843 = vadd.f32 %v3841, %v3842
        %v3844 = vsel %vm3808, %v2960, 0.0
        %v3845 = vrot.slane %v3844, 4
        %v3846 = vadd.f32 %v3844, %v3845
        %v3847 = vrot.slane %v3846, 2
        %v3848 = vadd.f32 %v3846, %v3847
        %v3849 = vrot.slane %v3848, 1
        %v3850 = vadd.f32 %v3848, %v3849
        %v3851 = vsel %vm3808, %v2964, 0.0
        %v3852 = vrot.slane %v3851, 4
        %v3853 = vadd.f32 %v3851, %v3852
        %v3854 = vrot.slane %v3853, 2
        %v3855 = vadd.f32 %v3853, %v3854
        %v3856 = vrot.slane %v3855, 1
        %v3857 = vadd.f32 %v3855, %v3856
        %v3858 = vsel %vm3808, %v2968, 0.0
        %v3859 = vrot.slane %v3858, 4
        %v3860 = vadd.f32 %v3858, %v3859
        %v3861 = vrot.slane %v3860, 2
        %v3862 = vadd.f32 %v3860, %v3861
        %v3863 = vrot.slane %v3862, 1
        %v3864 = vadd.f32 %v3862, %v3863
        %v3865 = vsel %vm3808, %v2972, 0.0
        %v3866 = vrot.slane %v3865, 4
        %v3867 = vadd.f32 %v3865, %v3866
        %v3868 = vrot.slane %v3867, 2
        %v3869 = vadd.f32 %v3867, %v3868
        %v3870 = vrot.slane %v3869, 1
        %v3871 = vadd.f32 %v3869, %v3870
        %v3872 = vsel %vm3808, %v2976, 0.0
        %v3873 = vrot.slane %v3872, 4
        %v3874 = vadd.f32 %v3872, %v3873
        %v3875 = vrot.slane %v3874, 2
        %v3876 = vadd.f32 %v3874, %v3875
        %v3877 = vrot.slane %v3876, 1
        %v3878 = vadd.f32 %v3876, %v3877
        %v3879 = vsel %vm3808, %v2980, 0.0
        %v3880 = vrot.slane %v3879, 4
        %v3881 = vadd.f32 %v3879, %v3880
        %v3882 = vrot.slane %v3881, 2
        %v3883 = vadd.f32 %v3881, %v3882
        %v3884 = vrot.slane %v3883, 1
        %v3885 = vadd.f32 %v3883, %v3884
        %v3886 = vsel %vm3808, %v2984, 0.0
        %v3887 = vrot.slane %v3886, 4
        %v3888 = vadd.f32 %v3886, %v3887
        %v3889 = vrot.slane %v3888, 2
        %v3890 = vadd.f32 %v3888, %v3889
        %v3891 = vrot.slane %v3890, 1
        %v3892 = vadd.f32 %v3890, %v3891
        %v3893 = vsel %vm3808, %v2988, 0.0
        %v3894 = vrot.slane %v3893, 4
        %v3895 = vadd.f32 %v3893, %v3894
        %v3896 = vrot.slane %v3895, 2
        %v3897 = vadd.f32 %v3895, %v3896
        %v3898 = vrot.slane %v3897, 1
        %v3899 = vadd.f32 %v3897, %v3898
        %v3900 = vsel %vm3808, %v2992, 0.0
        %v3901 = vrot.slane %v3900, 4
        %v3902 = vadd.f32 %v3900, %v3901
        %v3903 = vrot.slane %v3902, 2
        %v3904 = vadd.f32 %v3902, %v3903
        %v3905 = vrot.slane %v3904, 1
        %v3906 = vadd.f32 %v3904, %v3905
        %v3907 = vsel %vm3808, %v2996, 0.0
        %v3908 = vrot.slane %v3907, 4
        %v3909 = vadd.f32 %v3907, %v3908
        %v3910 = vrot.slane %v3909, 2
        %v3911 = vadd.f32 %v3909, %v3910
        %v3912 = vrot.slane %v3911, 1
        %v3913 = vadd.f32 %v3911, %v3912
        %v3914 = vsel %vm3808, %v3000, 0.0
        %v3915 = vrot.slane %v3914, 4
        %v3916 = vadd.f32 %v3914, %v3915
        %v3917 = vrot.slane %v3916, 2
        %v3918 = vadd.f32 %v3916, %v3917
        %v3919 = vrot.slane %v3918, 1
        %v3920 = vadd.f32 %v3918, %v3919
        %v3921 = vrcp.pop 8.0
        %v3922 = vmul.f32 8.0, %v3921
        %v3923 = vsub.f32 1.0, %v3922
        %v3924 = vmul.f32 %v3921, %v3923
        %v3925 = vadd.f32 %v3921, %v3924
        %vm3926 = vweird.f32 %v3921
        %v3927 = vsel %vm3926, %v3921, %v3925
        %v3928 = vmul.f32 %v3815, %v3927
        %v3929 = vmul.f32 %v3822, %v3927
        %v3930 = vmul.f32 %v3829, %v3927
        %v3931 = vmul.f32 %v3836, %v3927
        %v3932 = vmul.f32 %v3843, %v3927
        %v3933 = vmul.f32 %v3850, %v3927
        %v3934 = vmul.f32 %v3857, %v3927
        %v3935 = vmul.f32 %v3864, %v3927
        %v3936 = vmul.f32 %v3871, %v3927
        %v3937 = vmul.f32 %v3878, %v3927
        %v3938 = vmul.f32 %v3885, %v3927
        %v3939 = vmul.f32 %v3892, %v3927
        %v3940 = vmul.f32 %v3899, %v3927
        %v3941 = vmul.f32 %v3906, %v3927
        %v3942 = vmul.f32 %v3913, %v3927
        %v3943 = vmul.f32 %v3920, %v3927
        %v3944 = vsub.f32 %v2940, %v3928
        %v3945 = vsub.f32 %v2944, %v3929
        %v3946 = vsub.f32 %v2948, %v3930
        %v3947 = vsub.f32 %v2952, %v3931
        %v3948 = vsub.f32 %v2956, %v3932
        %v3949 = vsub.f32 %v2960, %v3933
        %v3950 = vsub.f32 %v2964, %v3934
        %v3951 = vsub.f32 %v2968, %v3935
        %v3952 = vsub.f32 %v2972, %v3936
        %v3953 = vsub.f32 %v2976, %v3937
        %v3954 = vsub.f32 %v2980, %v3938
        %v3955 = vsub.f32 %v2984, %v3939
        %v3956 = vsub.f32 %v2988, %v3940
        %v3957 = vsub.f32 %v2992, %v3941
        %v3958 = vsub.f32 %v2996, %v3942
        %v3959 = vsub.f32 %v3000, %v3943
        %vm3960 = vcmask 23552
        %v3961 = vsel %vm3960, %v3746, 0.0
        %v3962 = vrot.slane %v3961, 4
        %v3963 = vadd.f32 %v3961, %v3962
        %v3964 = vrot.slane %v3963, 2
        %v3965 = vadd.f32 %v3963, %v3964
        %v3966 = vrot.slane %v3965, 1
        %v3967 = vadd.f32 %v3965, %v3966
        %v3968 = vsel %vm3960, %v3750, 0.0
        %v3969 = vrot.slane %v3968, 4
        %v3970 = vadd.f32 %v3968, %v3969
        %v3971 = vrot.slane %v3970, 2
        %v3972 = vadd.f32 %v3970, %v3971
        %v3973 = vrot.slane %v3972, 1
        %v3974 = vadd.f32 %v3972, %v3973
        %v3975 = vsel %vm3960, %v3754, 0.0
        %v3976 = vrot.slane %v3975, 4
        %v3977 = vadd.f32 %v3975, %v3976
        %v3978 = vrot.slane %v3977, 2
        %v3979 = vadd.f32 %v3977, %v3978
        %v3980 = vrot.slane %v3979, 1
        %v3981 = vadd.f32 %v3979, %v3980
        %v3982 = vsel %vm3960, %v3758, 0.0
        %v3983 = vrot.slane %v3982, 4
        %v3984 = vadd.f32 %v3982, %v3983
        %v3985 = vrot.slane %v3984, 2
        %v3986 = vadd.f32 %v3984, %v3985
        %v3987 = vrot.slane %v3986, 1
        %v3988 = vadd.f32 %v3986, %v3987
        %v3989 = vsel %vm3960, %v3762, 0.0
        %v3990 = vrot.slane %v3989, 4
        %v3991 = vadd.f32 %v3989, %v3990
        %v3992 = vrot.slane %v3991, 2
        %v3993 = vadd.f32 %v3991, %v3992
        %v3994 = vrot.slane %v3993, 1
        %v3995 = vadd.f32 %v3993, %v3994
        %v3996 = vsel %vm3960, %v3766, 0.0
        %v3997 = vrot.slane %v3996, 4
        %v3998 = vadd.f32 %v3996, %v3997
        %v3999 = vrot.slane %v3998, 2
        %v4000 = vadd.f32 %v3998, %v3999
        %v4001 = vrot.slane %v4000, 1
        %v4002 = vadd.f32 %v4000, %v4001
        %v4003 = vsel %vm3960, %v3770, 0.0
        %v4004 = vrot.slane %v4003, 4
        %v4005 = vadd.f32 %v4003, %v4004
        %v4006 = vrot.slane %v4005, 2
        %v4007 = vadd.f32 %v4005, %v4006
        %v4008 = vrot.slane %v4007, 1
        %v4009 = vadd.f32 %v4007, %v4008
        %v4010 = vsel %vm3960, %v3774, 0.0
        %v4011 = vrot.slane %v4010, 4
        %v4012 = vadd.f32 %v4010, %v4011
        %v4013 = vrot.slane %v4012, 2
        %v4014 = vadd.f32 %v4012, %v4013
        %v4015 = vrot.slane %v4014, 1
        %v4016 = vadd.f32 %v4014, %v4015
        %v4017 = vsel %vm3960, %v3778, 0.0
        %v4018 = vrot.slane %v4017, 4
        %v4019 = vadd.f32 %v4017, %v4018
        %v4020 = vrot.slane %v4019, 2
        %v4021 = vadd.f32 %v4019, %v4020
        %v4022 = vrot.slane %v4021, 1
        %v4023 = vadd.f32 %v4021, %v4022
        %v4024 = vsel %vm3960, %v3782, 0.0
        %v4025 = vrot.slane %v4024, 4
        %v4026 = vadd.f32 %v4024, %v4025
        %v4027 = vrot.slane %v4026, 2
        %v4028 = vadd.f32 %v4026, %v4027
        %v4029 = vrot.slane %v4028, 1
        %v4030 = vadd.f32 %v4028, %v4029
        %v4031 = vsel %vm3960, %v3786, 0.0
        %v4032 = vrot.slane %v4031, 4
        %v4033 = vadd.f32 %v4031, %v4032
        %v4034 = vrot.slane %v4033, 2
        %v4035 = vadd.f32 %v4033, %v4034
        %v4036 = vrot.slane %v4035, 1
        %v4037 = vadd.f32 %v4035, %v4036
        %v4038 = vsel %vm3960, %v3790, 0.0
        %v4039 = vrot.slane %v4038, 4
        %v4040 = vadd.f32 %v4038, %v4039
        %v4041 = vrot.slane %v4040, 2
        %v4042 = vadd.f32 %v4040, %v4041
        %v4043 = vrot.slane %v4042, 1
        %v4044 = vadd.f32 %v4042, %v4043
        %v4045 = vsel %vm3960, %v3794, 0.0
        %v4046 = vrot.slane %v4045, 4
        %v4047 = vadd.f32 %v4045, %v4046
        %v4048 = vrot.slane %v4047, 2
        %v4049 = vadd.f32 %v4047, %v4048
        %v4050 = vrot.slane %v4049, 1
        %v4051 = vadd.f32 %v4049, %v4050
        %v4052 = vsel %vm3960, %v3798, 0.0
        %v4053 = vrot.slane %v4052, 4
        %v4054 = vadd.f32 %v4052, %v4053
        %v4055 = vrot.slane %v4054, 2
        %v4056 = vadd.f32 %v4054, %v4055
        %v4057 = vrot.slane %v4056, 1
        %v4058 = vadd.f32 %v4056, %v4057
        %v4059 = vsel %vm3960, %v3802, 0.0
        %v4060 = vrot.slane %v4059, 4
        %v4061 = vadd.f32 %v4059, %v4060
        %v4062 = vrot.slane %v4061, 2
        %v4063 = vadd.f32 %v4061, %v4062
        %v4064 = vrot.slane %v4063, 1
        %v4065 = vadd.f32 %v4063, %v4064
        %v4066 = vsel %vm3960, %v3806, 0.0
        %v4067 = vrot.slane %v4066, 4
        %v4068 = vadd.f32 %v4066, %v4067
        %v4069 = vrot.slane %v4068, 2
        %v4070 = vadd.f32 %v4068, %v4069
        %v4071 = vrot.slane %v4070, 1
        %v4072 = vadd.f32 %v4070, %v4071
        %v4073 = vmul.f32 %v3967, %v3927
        %v4074 = vmul.f32 %v3974, %v3927
        %v4075 = vmul.f32 %v3981, %v3927
        %v4076 = vmul.f32 %v3988, %v3927
        %v4077 = vmul.f32 %v3995, %v3927
        %v4078 = vmul.f32 %v4002, %v3927
        %v4079 = vmul.f32 %v4009, %v3927
        %v4080 = vmul.f32 %v4016, %v3927
        %v4081 = vmul.f32 %v4023, %v3927
        %v4082 = vmul.f32 %v4030, %v3927
        %v4083 = vmul.f32 %v4037, %v3927
        %v4084 = vmul.f32 %v4044, %v3927
        %v4085 = vmul.f32 %v4051, %v3927
        %v4086 = vmul.f32 %v4058, %v3927
        %v4087 = vmul.f32 %v4065, %v3927
        %v4088 = vmul.f32 %v4072, %v3927
        %v4089 = vsub.f32 %v3746, %v4073
        %v4090 = vsub.f32 %v3750, %v4074
        %v4091 = vsub.f32 %v3754, %v4075
        %v4092 = vsub.f32 %v3758, %v4076
        %v4093 = vsub.f32 %v3762, %v4077
        %v4094 = vsub.f32 %v3766, %v4078
        %v4095 = vsub.f32 %v3770, %v4079
        %v4096 = vsub.f32 %v3774, %v4080
        %v4097 = vsub.f32 %v3778, %v4081
        %v4098 = vsub.f32 %v3782, %v4082
        %v4099 = vsub.f32 %v3786, %v4083
        %v4100 = vsub.f32 %v3790, %v4084
        %v4101 = vsub.f32 %v3794, %v4085
        %v4102 = vsub.f32 %v3798, %v4086
        %v4103 = vsub.f32 %v3802, %v4087
        %v4104 = vsub.f32 %v3806, %v4088
        %v4105 = vsel %vm3808, %v3944, 0.0
        %v4106 = vsel %vm3808, %v3945, 0.0
        %v4107 = vadd.f32 %v4105, %v4106
        %v4108 = vsel %vm3808, %v3946, 0.0
        %v4109 = vadd.f32 %v4107, %v4108
        %v4110 = vsel %vm3808, %v3947, 0.0
        %v4111 = vadd.f32 %v4109, %v4110
        %v4112 = vsel %vm3808, %v3948, 0.0
        %v4113 = vadd.f32 %v4111, %v4112
        %v4114 = vsel %vm3808, %v3949, 0.0
        %v4115 = vadd.f32 %v4113, %v4114
        %v4116 = vsel %vm3808, %v3950, 0.0
        %v4117 = vadd.f32 %v4115, %v4116
        %v4118 = vsel %vm3808, %v3951, 0.0
        %v4119 = vadd.f32 %v4117, %v4118
        %v4120 = vsel %vm3808, %v3952, 0.0
        %v4121 = vadd.f32 %v4119, %v4120
        %v4122 = vsel %vm3808, %v3953, 0.0
        %v4123 = vadd.f32 %v4121, %v4122
        %v4124 = vsel %vm3808, %v3954, 0.0
        %v4125 = vadd.f32 %v4123, %v4124
        %v4126 = vsel %vm3808, %v3955, 0.0
        %v4127 = vadd.f32 %v4125, %v4126
        %v4128 = vsel %vm3808, %v3956, 0.0
        %v4129 = vadd.f32 %v4127, %v4128
        %v4130 = vsel %vm3808, %v3957, 0.0
        %v4131 = vadd.f32 %v4129, %v4130
        %v4132 = vsel %vm3808, %v3958, 0.0
        %v4133 = vadd.f32 %v4131, %v4132
        %v4134 = vsel %vm3808, %v3959, 0.0
        %v4135 = vadd.f32 %v4133, %v4134
        %4136 = vadd.xlane.f32.xlu0 %v4135
        %v4137 = vpop.xlane.xlu0 %4136
        %v4138 = vrot.slane %v4137, 4
        %v4139 = vadd.f32 %v4137, %v4138
        %v4140 = vrot.slane %v4139, 2
        %v4141 = vadd.f32 %v4139, %v4140
        %v4142 = vrot.slane %v4141, 1
        %v4143 = vadd.f32 %v4141, %v4142
        %s4144 = vtos %v4143
        %v4145 = vsel %vm3960, %v4089, 0.0
        %v4146 = vsel %vm3960, %v4090, 0.0
        %v4147 = vadd.f32 %v4145, %v4146
        %v4148 = vsel %vm3960, %v4091, 0.0
        %v4149 = vadd.f32 %v4147, %v4148
        %v4150 = vsel %vm3960, %v4092, 0.0
        %v4151 = vadd.f32 %v4149, %v4150
        %v4152 = vsel %vm3960, %v4093, 0.0
        %v4153 = vadd.f32 %v4151, %v4152
        %v4154 = vsel %vm3960, %v4094, 0.0
        %v4155 = vadd.f32 %v4153, %v4154
        %v4156 = vsel %vm3960, %v4095, 0.0
        %v4157 = vadd.f32 %v4155, %v4156
        %v4158 = vsel %vm3960, %v4096, 0.0
        %v4159 = vadd.f32 %v4157, %v4158
        %v4160 = vsel %vm3960, %v4097, 0.0
        %v4161 = vadd.f32 %v4159, %v4160
        %v4162 = vsel %vm3960, %v4098, 0.0
        %v4163 = vadd.f32 %v4161, %v4162
        %v4164 = vsel %vm3960, %v4099, 0.0
        %v4165 = vadd.f32 %v4163, %v4164
        %v4166 = vsel %vm3960, %v4100, 0.0
        %v4167 = vadd.f32 %v4165, %v4166
        %v4168 = vsel %vm3960, %v4101, 0.0
        %v4169 = vadd.f32 %v4167, %v4168
        %v4170 = vsel %vm3960, %v4102, 0.0
        %v4171 = vadd.f32 %v4169, %v4170
        %v4172 = vsel %vm3960, %v4103, 0.0
        %v4173 = vadd.f32 %v4171, %v4172
        %v4174 = vsel %vm3960, %v4104, 0.0
        %v4175 = vadd.f32 %v4173, %v4174
        %4176 = vadd.xlane.f32.xlu0 %v4175
        %v4177 = vpop.xlane.xlu0 %4176
        %v4178 = vrot.slane %v4177, 4
        %v4179 = vadd.f32 %v4177, %v4178
        %v4180 = vrot.slane %v4179, 2
        %v4181 = vadd.f32 %v4179, %v4180
        %v4182 = vrot.slane %v4181, 1
        %v4183 = vadd.f32 %v4181, %v4182
        %s4184 = vtos %v4183
        %s4185 = sadd.f32 %s4144, %s4184
        %v4186 = vrcp.pop 4480.0
        %v4187 = vmul.f32 4480.0, %v4186
        %v4188 = vsub.f32 1.0, %v4187
        %v4189 = vmul.f32 %v4186, %v4188
        %v4190 = vadd.f32 %v4186, %v4189
        %vm4191 = vweird.f32 %v4186
        %v4192 = vsel %vm4191, %v4186, %v4190
        %s4193 = vtos %v4192
        %s4194 = smul.f32 %s4185, %s4193
        %v4195 = vmul.f32 %v3944, %v3944
        %v4196 = vmul.f32 %v3945, %v3945
        %v4197 = vmul.f32 %v3946, %v3946
        %v4198 = vmul.f32 %v3947, %v3947
        %v4199 = vmul.f32 %v3948, %v3948
        %v4200 = vmul.f32 %v3949, %v3949
        %v4201 = vmul.f32 %v3950, %v3950
        %v4202 = vmul.f32 %v3951, %v3951
        %v4203 = vmul.f32 %v3952, %v3952
        %v4204 = vmul.f32 %v3953, %v3953
        %v4205 = vmul.f32 %v3954, %v3954
        %v4206 = vmul.f32 %v3955, %v3955
        %v4207 = vmul.f32 %v3956, %v3956
        %v4208 = vmul.f32 %v3957, %v3957
        %v4209 = vmul.f32 %v3958, %v3958
        %v4210 = vmul.f32 %v3959, %v3959
        %v4211 = vsel %vm3808, %v4195, 0.0
        %v4212 = vsel %vm3808, %v4196, 0.0
        %v4213 = vadd.f32 %v4211, %v4212
        %v4214 = vsel %vm3808, %v4197, 0.0
        %v4215 = vadd.f32 %v4213, %v4214
        %v4216 = vsel %vm3808, %v4198, 0.0
        %v4217 = vadd.f32 %v4215, %v4216
        %v4218 = vsel %vm3808, %v4199, 0.0
        %v4219 = vadd.f32 %v4217, %v4218
        %v4220 = vsel %vm3808, %v4200, 0.0
        %v4221 = vadd.f32 %v4219, %v4220
        %v4222 = vsel %vm3808, %v4201, 0.0
        %v4223 = vadd.f32 %v4221, %v4222
        %v4224 = vsel %vm3808, %v4202, 0.0
        %v4225 = vadd.f32 %v4223, %v4224
        %v4226 = vsel %vm3808, %v4203, 0.0
        %v4227 = vadd.f32 %v4225, %v4226
        %v4228 = vsel %vm3808, %v4204, 0.0
        %v4229 = vadd.f32 %v4227, %v4228
        %v4230 = vsel %vm3808, %v4205, 0.0
        %v4231 = vadd.f32 %v4229, %v4230
        %v4232 = vsel %vm3808, %v4206, 0.0
        %v4233 = vadd.f32 %v4231, %v4232
        %v4234 = vsel %vm3808, %v4207, 0.0
        %v4235 = vadd.f32 %v4233, %v4234
        %v4236 = vsel %vm3808, %v4208, 0.0
        %v4237 = vadd.f32 %v4235, %v4236
        %v4238 = vsel %vm3808, %v4209, 0.0
        %v4239 = vadd.f32 %v4237, %v4238
        %v4240 = vsel %vm3808, %v4210, 0.0
        %v4241 = vadd.f32 %v4239, %v4240
        %4242 = vadd.xlane.f32.xlu0 %v4241
        %v4243 = vpop.xlane.xlu0 %4242
        %v4244 = vrot.slane %v4243, 4
        %v4245 = vadd.f32 %v4243, %v4244
        %v4246 = vrot.slane %v4245, 2
        %v4247 = vadd.f32 %v4245, %v4246
        %v4248 = vrot.slane %v4247, 1
        %v4249 = vadd.f32 %v4247, %v4248
        %s4250 = vtos %v4249
        %v4251 = vmul.f32 %v4089, %v4089
        %v4252 = vmul.f32 %v4090, %v4090
        %v4253 = vmul.f32 %v4091, %v4091
        %v4254 = vmul.f32 %v4092, %v4092
        %v4255 = vmul.f32 %v4093, %v4093
        %v4256 = vmul.f32 %v4094, %v4094
        %v4257 = vmul.f32 %v4095, %v4095
        %v4258 = vmul.f32 %v4096, %v4096
        %v4259 = vmul.f32 %v4097, %v4097
        %v4260 = vmul.f32 %v4098, %v4098
        %v4261 = vmul.f32 %v4099, %v4099
        %v4262 = vmul.f32 %v4100, %v4100
        %v4263 = vmul.f32 %v4101, %v4101
        %v4264 = vmul.f32 %v4102, %v4102
        %v4265 = vmul.f32 %v4103, %v4103
        %v4266 = vmul.f32 %v4104, %v4104
        %v4267 = vsel %vm3960, %v4251, 0.0
        %v4268 = vsel %vm3960, %v4252, 0.0
        %v4269 = vadd.f32 %v4267, %v4268
        %v4270 = vsel %vm3960, %v4253, 0.0
        %v4271 = vadd.f32 %v4269, %v4270
        %v4272 = vsel %vm3960, %v4254, 0.0
        %v4273 = vadd.f32 %v4271, %v4272
        %v4274 = vsel %vm3960, %v4255, 0.0
        %v4275 = vadd.f32 %v4273, %v4274
        %v4276 = vsel %vm3960, %v4256, 0.0
        %v4277 = vadd.f32 %v4275, %v4276
        %v4278 = vsel %vm3960, %v4257, 0.0
        %v4279 = vadd.f32 %v4277, %v4278
        %v4280 = vsel %vm3960, %v4258, 0.0
        %v4281 = vadd.f32 %v4279, %v4280
        %v4282 = vsel %vm3960, %v4259, 0.0
        %v4283 = vadd.f32 %v4281, %v4282
        %v4284 = vsel %vm3960, %v4260, 0.0
        %v4285 = vadd.f32 %v4283, %v4284
        %v4286 = vsel %vm3960, %v4261, 0.0
        %v4287 = vadd.f32 %v4285, %v4286
        %v4288 = vsel %vm3960, %v4262, 0.0
        %v4289 = vadd.f32 %v4287, %v4288
        %v4290 = vsel %vm3960, %v4263, 0.0
        %v4291 = vadd.f32 %v4289, %v4290
        %v4292 = vsel %vm3960, %v4264, 0.0
        %v4293 = vadd.f32 %v4291, %v4292
        %v4294 = vsel %vm3960, %v4265, 0.0
        %v4295 = vadd.f32 %v4293, %v4294
        %v4296 = vsel %vm3960, %v4266, 0.0
        %v4297 = vadd.f32 %v4295, %v4296
        %4298 = vadd.xlane.f32.xlu0 %v4297
        %v4299 = vpop.xlane.xlu0 %4298
        %v4300 = vrot.slane %v4299, 4
        %v4301 = vadd.f32 %v4299, %v4300
        %v4302 = vrot.slane %v4301, 2
        %v4303 = vadd.f32 %v4301, %v4302
        %v4304 = vrot.slane %v4303, 1
        %v4305 = vadd.f32 %v4303, %v4304
        %s4306 = vtos %v4305
        %s4307 = sadd.f32 %s4250, %s4306
        %s4308 = smul.f32 %s4194, 4480.0
        %s4309 = smul.f32 %s4308, %s4194
        %s4310 = ssub.f32 %s4307, %s4309
        %v4311 = vrcp.pop 4479.0
        %v4312 = vmul.f32 4479.0, %v4311
        %v4313 = vsub.f32 1.0, %v4312
        %v4314 = vmul.f32 %v4311, %v4313
        %v4315 = vadd.f32 %v4311, %v4314
        %vm4316 = vweird.f32 %v4311
        %v4317 = vsel %vm4316, %v4311, %v4315
        %s4318 = vtos %v4317
        %s4319 = smul.f32 %s4310, %s4318
        %v4320 = vstv %s4319
        %v4321 = vrsqrt.pop %v4320
        %v4322 = vmul.f32 %v4321, %v4320
        %v4323 = vmul.f32 %v4322, %v4321
        %v4324 = vmul.f32 0.5, %v4323
        %v4325 = vsub.f32 1.5, %v4324
        %v4326 = vmul.f32 %v4321, %v4325
        %v4327 = vmul.f32 %v4320, %v4326
        %vm4328 = vcmp.eq.f32.partialorder %v4320, inf
        %v4329 = vsel %vm4328, %v4320, %v4327
        %vm4330 = vcmp.eq.f32.partialorder %v4320, 0.0
        %v4331 = vand.u32 %v4320, 2147483648
        %v4332 = vsel %vm4330, %v4331, %v4329
        %s4333 = vtos %v4332
        %s4334 = sadd.f32 %s4333, 1e-05
        %v4335 = vstv %s4334
        %v4336 = vrcp.pop %v4335
        %v4337 = vmul.f32 %v4335, %v4336
        %v4338 = vsub.f32 1.0, %v4337
        %v4339 = vmul.f32 %v4336, %v4338
        %v4340 = vadd.f32 %v4336, %v4339
        %vm4341 = vweird.f32 %v4335
        %vm4342 = vweird.f32 %v4336
        %vm4343 = vmor %vm4341, %vm4342
        %v4344 = vsel %vm4343, %v4336, %v4340
        %v4345 = vand.u32 2147483647, %v4335
        %vm4346 = vcmp.eq.f32.partialorder %v4345, 8.507059e+37
        %v4347 = vand.u32 %v4335, 2147483648
        %v4348 = vor.u32 1.1754944e-38, %v4347
        %v4349 = vsel %vm4346, %v4348, %v4344
        %s4350 = vtos %v4349
        %v4351 = vld [vmem:[%s3] sm:$0x1]
        %v4352 = vstv %s4350
        %v4353 = vmul.f32 %v4351, %v4352
        %v4355 = vperm.slane %v4353, 0
        %v4357 = vmul.f32 %v3944, %v4355
        %v4358 = vmul.f32 %v3945, %v4355
        %v4359 = vmul.f32 %v3946, %v4355
        %v4360 = vmul.f32 %v3947, %v4355
        %v4361 = vmul.f32 %v3948, %v4355
        %v4362 = vmul.f32 %v3949, %v4355
        %v4363 = vmul.f32 %v3950, %v4355
        %v4364 = vmul.f32 %v3951, %v4355
        %v4365 = vmul.f32 %v3952, %v4355
        %v4366 = vmul.f32 %v3953, %v4355
        %v4367 = vmul.f32 %v3954, %v4355
        %v4368 = vmul.f32 %v3955, %v4355
        %v4369 = vmul.f32 %v3956, %v4355
        %v4370 = vmul.f32 %v3957, %v4355
        %v4371 = vmul.f32 %v3958, %v4355
        %v4372 = vmul.f32 %v3959, %v4355
        %v4373 = vld [vmem:[%s5] sm:$0x1]
        %v4375 = vperm.slane %v4373, 0
        %v4377 = vadd.f32 %v4357, %v4375
        %v4378 = vadd.f32 %v4358, %v4375
        %v4379 = vadd.f32 %v4359, %v4375
        %v4380 = vadd.f32 %v4360, %v4375
        %v4381 = vadd.f32 %v4361, %v4375
        %v4382 = vadd.f32 %v4362, %v4375
        %v4383 = vadd.f32 %v4363, %v4375
        %v4384 = vadd.f32 %v4364, %v4375
        %v4385 = vadd.f32 %v4365, %v4375
        %v4386 = vadd.f32 %v4366, %v4375
        %v4387 = vadd.f32 %v4367, %v4375
        %v4388 = vadd.f32 %v4368, %v4375
        %v4389 = vadd.f32 %v4369, %v4375
        %v4390 = vadd.f32 %v4370, %v4375
        %v4391 = vadd.f32 %v4371, %v4375
        %v4392 = vadd.f32 %v4372, %v4375
        %4393 = vst.msk [vmem:[%s391] sm:$0xff] %vm3808, %v4377
        %4394 = vst.msk [vmem:[%s391 + $0x8] sm:$0xff] %vm3808, %v4378
        %4395 = vst.msk [vmem:[%s391 + $0x10] sm:$0xff] %vm3808, %v4379
        %4396 = vst.msk [vmem:[%s391 + $0x18] sm:$0xff] %vm3808, %v4380
        %4397 = vst.msk [vmem:[%s391 + $0x20] sm:$0xff] %vm3808, %v4381
        %4398 = vst.msk [vmem:[%s391 + $0x28] sm:$0xff] %vm3808, %v4382
        %4399 = vst.msk [vmem:[%s391 + $0x30] sm:$0xff] %vm3808, %v4383
        %4400 = vst.msk [vmem:[%s391 + $0x38] sm:$0xff] %vm3808, %v4384
        %4401 = vst.msk [vmem:[%s391 + $0x40] sm:$0xff] %vm3808, %v4385
        %4402 = vst.msk [vmem:[%s391 + $0x48] sm:$0xff] %vm3808, %v4386
        %4403 = vst.msk [vmem:[%s391 + $0x50] sm:$0xff] %vm3808, %v4387
        %4404 = vst.msk [vmem:[%s391 + $0x58] sm:$0xff] %vm3808, %v4388
        %4405 = vst.msk [vmem:[%s391 + $0x60] sm:$0xff] %vm3808, %v4389
        %4406 = vst.msk [vmem:[%s391 + $0x68] sm:$0xff] %vm3808, %v4390
        %4407 = vst.msk [vmem:[%s391 + $0x70] sm:$0xff] %vm3808, %v4391
        %4408 = vst.msk [vmem:[%s391 + $0x78] sm:$0xff] %vm3808, %v4392
        %v4409 = vld [vmem:[%s4] sm:$0x1]
        %v4410 = vmul.f32 %v4409, %v4352
        %v4412 = vperm.slane %v4410, 0
        %v4414 = vmul.f32 %v4089, %v4412
        %v4415 = vmul.f32 %v4090, %v4412
        %v4416 = vmul.f32 %v4091, %v4412
        %v4417 = vmul.f32 %v4092, %v4412
        %v4418 = vmul.f32 %v4093, %v4412
        %v4419 = vmul.f32 %v4094, %v4412
        %v4420 = vmul.f32 %v4095, %v4412
        %v4421 = vmul.f32 %v4096, %v4412
        %v4422 = vmul.f32 %v4097, %v4412
        %v4423 = vmul.f32 %v4098, %v4412
        %v4424 = vmul.f32 %v4099, %v4412
        %v4425 = vmul.f32 %v4100, %v4412
        %v4426 = vmul.f32 %v4101, %v4412
        %v4427 = vmul.f32 %v4102, %v4412
        %v4428 = vmul.f32 %v4103, %v4412
        %v4429 = vmul.f32 %v4104, %v4412
        %v4430 = vld [vmem:[%s6] sm:$0x1]
        %v4432 = vperm.slane %v4430, 0
        %v4434 = vadd.f32 %v4414, %v4432
        %v4435 = vadd.f32 %v4415, %v4432
        %v4436 = vadd.f32 %v4416, %v4432
        %v4437 = vadd.f32 %v4417, %v4432
        %v4438 = vadd.f32 %v4418, %v4432
        %v4439 = vadd.f32 %v4419, %v4432
        %v4440 = vadd.f32 %v4420, %v4432
        %v4441 = vadd.f32 %v4421, %v4432
        %v4442 = vadd.f32 %v4422, %v4432
        %v4443 = vadd.f32 %v4423, %v4432
        %v4444 = vadd.f32 %v4424, %v4432
        %v4445 = vadd.f32 %v4425, %v4432
        %v4446 = vadd.f32 %v4426, %v4432
        %v4447 = vadd.f32 %v4427, %v4432
        %v4448 = vadd.f32 %v4428, %v4432
        %v4449 = vadd.f32 %v4429, %v4432
        %4450 = vst.msk [vmem:[%s429] sm:$0xff] %vm3960, %v4434
        %4451 = vst.msk [vmem:[%s429 + $0x8] sm:$0xff] %vm3960, %v4435
        %4452 = vst.msk [vmem:[%s429 + $0x10] sm:$0xff] %vm3960, %v4436
        %4453 = vst.msk [vmem:[%s429 + $0x18] sm:$0xff] %vm3960, %v4437
        %4454 = vst.msk [vmem:[%s429 + $0x20] sm:$0xff] %vm3960, %v4438
        %4455 = vst.msk [vmem:[%s429 + $0x28] sm:$0xff] %vm3960, %v4439
        %4456 = vst.msk [vmem:[%s429 + $0x30] sm:$0xff] %vm3960, %v4440
        %4457 = vst.msk [vmem:[%s429 + $0x38] sm:$0xff] %vm3960, %v4441
        %4458 = vst.msk [vmem:[%s429 + $0x40] sm:$0xff] %vm3960, %v4442
        %4459 = vst.msk [vmem:[%s429 + $0x48] sm:$0xff] %vm3960, %v4443
        %4460 = vst.msk [vmem:[%s429 + $0x50] sm:$0xff] %vm3960, %v4444
        %4461 = vst.msk [vmem:[%s429 + $0x58] sm:$0xff] %vm3960, %v4445
        %4462 = vst.msk [vmem:[%s429 + $0x60] sm:$0xff] %vm3960, %v4446
        %4463 = vst.msk [vmem:[%s429 + $0x68] sm:$0xff] %vm3960, %v4447
        %4464 = vst.msk [vmem:[%s429 + $0x70] sm:$0xff] %vm3960, %v4448
        %4465 = vst.msk [vmem:[%s429 + $0x78] sm:$0xff] %vm3960, %v4449
        %4466 = vst.msk [vmem:[%s424] sm:$0xff] %vm3960, %v888
        %4467 = vst.msk [vmem:[%s424 + $0x8] sm:$0xff] %vm3960, %v892
        %4468 = vst.msk [vmem:[%s405] sm:$0xff] %vm3808, %v1276
        %4469 = vst.msk [vmem:[%s405 + $0x8] sm:$0xff] %vm3808, %v1280
        %p4470 = scmp.lt.s32.totalorder %s28, 1
        %s4471 = scalar_select %p4470, %s28, 1
        %s4472 = smul.addr %s4471, 2
        %s4473 = smul.addr %s4472, 8
        %s4474 = scalar_lea.vmem %s7, %s4473
        %s4475 = sand.u32 %s224, 1
        %s4476 = scalar_lea.sflag [#allocation4], %s4475
        %s4477 = sand.u32 %s224, 1
        %s4478 = smul.addr %s4477, 128
        %s4479 = scalar_lea.vmem [#allocation3], %s4478
        %p4480 = scmp.lt.s32.totalorder %s28, 1
        %s4481 = scalar_select %p4480, %s28, 1
        %s4482 = smul.addr %s4481, 16
        %s4483 = smul.addr %s4482, 8
        %s4484 = scalar_lea.vmem %s9, %s4483
        %s4485 = sand.u32 %s276, 1
        %s4486 = scalar_lea.sflag [#allocation6], %s4485
        %s4487 = sand.u32 %s276, 1
        %s4488 = smul.addr %s4487, 16
        %s4489 = scalar_lea.vmem [#allocation5], %s4488
        // Predicated region
        $region56: #{tpu_custom_call.1} parent=47 // pred_check
          %p4490 = pneg %p208
        $region57: #{tpu_custom_call.1} parent=47 // pred_check_branch
          %4492 = sbr.rel (%p4490) target = $region59
        $region58: #{tpu_custom_call.1} parent=47 // pred_region
          _
        $region59: #{tpu_custom_call.1} parent=47 // pred_fallthru
          _
        // Predicated region
        $region60: #{tpu_custom_call.1} parent=47 // pred_check
          %p4493 = pneg %p234
        $region61: #{tpu_custom_call.1} parent=47 // pred_check_branch
          %4495 = sbr.rel (%p4493) target = $region63
        $region62: #{tpu_custom_call.1} parent=47 // pred_region
          %4497 = vsyncadd %s4476, 0
          %s4498 = smul.addr %s28, 16
          %s4499 = smul.addr %s4498, 8
          %s4500 = scalar_lea.hbm %s8, %s4499
          %s4501 = sshll.u32 %s4479, 4
          %s4502 = int_to_ptr.vmem [resolvable:$true] %s4501
          %s4503 = sshll.u32 %s4500, 4
          %s4504 = int_to_ptr.hbm [resolvable:$true] %s4503
          %4509 = dma.vmem_to_hbm [thread:$0]  %s4502, 2048, %s4504, %s4476, 128, 128, 8
        $region63: #{tpu_custom_call.1} parent=47 // pred_fallthru
          _
        // Predicated region
        $region64: #{tpu_custom_call.1} parent=47 // pred_check
          %p4510 = pneg %p260
        $region65: #{tpu_custom_call.1} parent=47 // pred_check_branch
          %4512 = sbr.rel (%p4510) target = $region67
        $region66: #{tpu_custom_call.1} parent=47 // pred_region
          _
        $region67: #{tpu_custom_call.1} parent=47 // pred_fallthru
          _
        // Predicated region
        $region68: #{tpu_custom_call.1} parent=47 // pred_check
          %p4513 = pneg %p286
        $region69: #{tpu_custom_call.1} parent=47 // pred_check_branch
          %4515 = sbr.rel (%p4513) target = $region71
        $region70: #{tpu_custom_call.1} parent=47 // pred_region
          %4517 = vsyncadd %s4486, 0
          %s4518 = smul.addr %s28, 2
          %s4519 = smul.addr %s4518, 8
          %s4520 = scalar_lea.hbm %s10, %s4519
          %s4521 = sshll.u32 %s4489, 4
          %s4522 = int_to_ptr.vmem [resolvable:$true] %s4521
          %s4523 = sshll.u32 %s4520, 4
          %s4524 = int_to_ptr.hbm [resolvable:$true] %s4523
          %4529 = dma.vmem_to_hbm [thread:$0]  %s4522, 256, %s4524, %s4486, 128, 128, 8
        $region71: #{tpu_custom_call.1} parent=47 // pred_fallthru
          _
      $region48: #{tpu_custom_call.1} parent=5 // pred_fallthru
        _
      %p4530 = scmp.le.s32.totalorder 2, %s23
      // Predicated region
      $region72: #{tpu_custom_call.1} parent=5 // pred_check
        %p4531 = pneg %p4530
      $region73: #{tpu_custom_call.1} parent=5 // pred_check_branch
        %4533 = sbr.rel (%p4531) target = $region75
      $region74: #{tpu_custom_call.1} parent=5 // pred_region
        %s4534 = ssub.s32 %s23, 2
        // Predicated region
        $region76: #{tpu_custom_call.1} parent=74 // pred_check
          %p4535 = pneg %p214
        $region77: #{tpu_custom_call.1} parent=74 // pred_check_branch
          %4537 = sbr.rel (%p4535) target = $region79
        $region78: #{tpu_custom_call.1} parent=74 // pred_region
          %p4538 = scmp.lt.s32.totalorder %s29, 1
          %s4539 = scalar_select %p4538, %s29, 1
          %s4540 = smul.addr %s4539, 2
          %s4541 = smul.addr %s4540, 8
          %s4542 = scalar_lea.vmem %s7, %s4541
        $region79: #{tpu_custom_call.1} parent=74 // pred_fallthru
          _
        // Predicated region
        $region80: #{tpu_custom_call.1} parent=74 // pred_check
          %p4543 = pneg %p240
        $region81: #{tpu_custom_call.1} parent=74 // pred_check_branch
          %4545 = sbr.rel (%p4543) target = $region83
        $region82: #{tpu_custom_call.1} parent=74 // pred_region
          %s4546 = sand.u32 %s225, 1
          %s4547 = scalar_lea.sflag [#allocation4], %s4546
          %s4548 = sand.u32 %s225, 1
          %s4549 = smul.addr %s4548, 128
          %s4550 = scalar_lea.vmem [#allocation3], %s4549
          %4552 = dma.done %s4547, 2048
        $region83: #{tpu_custom_call.1} parent=74 // pred_fallthru
          _
        // Predicated region
        $region84: #{tpu_custom_call.1} parent=74 // pred_check
          %p4553 = pneg %p266
        $region85: #{tpu_custom_call.1} parent=74 // pred_check_branch
          %4555 = sbr.rel (%p4553) target = $region87
        $region86: #{tpu_custom_call.1} parent=74 // pred_region
          %p4556 = scmp.lt.s32.totalorder %s29, 1
          %s4557 = scalar_select %p4556, %s29, 1
          %s4558 = smul.addr %s4557, 16
          %s4559 = smul.addr %s4558, 8
          %s4560 = scalar_lea.vmem %s9, %s4559
        $region87: #{tpu_custom_call.1} parent=74 // pred_fallthru
          _
        // Predicated region
        $region88: #{tpu_custom_call.1} parent=74 // pred_check
          %p4561 = pneg %p292
        $region89: #{tpu_custom_call.1} parent=74 // pred_check_branch
          %4563 = sbr.rel (%p4561) target = $region91
        $region90: #{tpu_custom_call.1} parent=74 // pred_region
          %s4564 = sand.u32 %s277, 1
          %s4565 = scalar_lea.sflag [#allocation6], %s4564
          %s4566 = sand.u32 %s277, 1
          %s4567 = smul.addr %s4566, 16
          %s4568 = scalar_lea.vmem [#allocation5], %s4567
          %4570 = dma.done %s4565, 256
        $region91: #{tpu_custom_call.1} parent=74 // pred_fallthru
          _
      $region75: #{tpu_custom_call.1} parent=5 // pred_fallthru
        _
    $region6: #{tpu_custom_call.1} parent=1 // loop_footer
      %s27 = sadd.s32 1, %s23
    $region7: #{tpu_custom_call.1} parent=1 // loop_footer_branch
      %22 = sbr.rel target = $region3
    $region8: #{tpu_custom_call.1} parent=1 // loop_exit
      _
    %4571 = vsyncpa [#allocation4], 1
    %s4572 = scalar_lea.sflag [#allocation4], 1
    %4573 = vsyncpa %s4572, 1
    %4574 = vsyncpa [#allocation6], 1
    %s4575 = scalar_lea.sflag [#allocation6], 1
    %4576 = vsyncpa %s4575, 1

</llo_original>
